<compile_context>
chip_gen: v5e
topology: v5e:2x2
jax: 0.10.0
libtpu: 0.0.40
codegen_flags: <defaults>
</compile_context>

<pallas_src>
import functools

import jax
import jax.numpy as jnp
from jax import lax
from jax.experimental import pallas as pl
from jax.experimental.pallas import tpu as pltpu

EPS = 1e-5       # PyTorch GroupNorm default eps
N_GROUPS = 32    # ResidualBlock default n_groups


def _sigmoid(v):
    return 1.0 / (1.0 + jnp.exp(-v))


def _bf16_elementwise_ok():
    """bf16 VPU/XLU exists on v6e and newer; keep f32 elementwise on v5e and older."""
    try:
        kind = jax.devices()[0].device_kind.lower()
    except Exception:
        return False
    return any(s in kind for s in ("v6", "v7", "tpu7"))


def _down_block_kernel(W, L, b_tile, C_in, C_out, has_skip,
                       x_ref, te_ref, masks_ref,
                       g1_ref, b1_ref, S1_ref, w1_ref,
                       g2_ref, b2_ref, S2_ref, w2_ref, b2s_ref,
                       out_ref,
                       h_ref, op_ref):
    """One grid step: x_ref (C_in, b_tile*L) -> out_ref (C_out, b_tile*L)."""
    Lb = b_tile * L
    n0 = pl.program_id(0) * b_tile          # first batch element of this slab

    def group_norm_swish(seg, S, g, b):
        # seg: (C, L) f32 for ONE batch element (unpadded lane segment).
        s1 = jnp.sum(seg, axis=1, keepdims=True)                      # (C, 1)
        s2 = jnp.sum(seg * seg, axis=1, keepdims=True)                # (C, 1)
        # S encodes group averaging (incl. 1/(cpg*H*W)) as a tiny matmul.
        mean = jnp.dot(S, s1, preferred_element_type=jnp.float32)     # (C, 1)
        ex2 = jnp.dot(S, s2, preferred_element_type=jnp.float32)      # (C, 1)
        var = jnp.maximum(ex2 - mean * mean, 0.0)                     # guard cancellation
        inv = lax.rsqrt(var + EPS)
        y = (seg - mean) * inv * g + b
        return y * _sigmoid(y)                                        # Swish

    def build_taps(src, C):
        # src: (C, Lb) in tap dtype.  Write 9 rolled+masked copies (3x3 zero-padding
        # semantics) into op_ref rows [0, 9*C), one tap at a time (bounded live set).
        # Rolling the combined batch*spatial lane axis is safe: the per-position
        # validity mask zeroes every lane whose shifted read would leave its own
        # batch element's segment.
        for k in range(9):
            ky, kx = divmod(k, 3)
            off = (ky - 1) * W + (kx - 1)
            tap = src if off == 0 else pltpu.roll(src, shift=(-off) % Lb, axis=1)
            if not (ky == 1 and kx == 1):
                tap = tap * masks_ref[k]                              # (1, Lb) broadcast
            op_ref[pl.ds(k * C, C), :] = tap.astype(op_ref.dtype)

    # ---- norm1 + Swish, per batch element, into h scratch ----
    for b in range(b_tile):
        seg = x_ref[:, pl.ds(b * L, L)]                               # (C_in, L) f32
        h_ref[pl.ds(0, C_in), pl.ds(b * L, L)] = group_norm_swish(
            seg, S1_ref[...], g1_ref[...], b1_ref[...]).astype(h_ref.dtype)

    # ---- conv1 (3x3, pad 1) as one (C_out, 9*C_in) @ (9*C_in, Lb) matmul ----
    build_taps(h_ref[pl.ds(0, C_in), :], C_in)
    h1 = jnp.dot(w1_ref[...], op_ref[pl.ds(0, 9 * C_in), :],
                 preferred_element_type=jnp.float32)                  # (C_out, Lb) f32

    # ---- + time embedding (conv1 bias pre-folded), norm2 + Swish per element ----
    # TODO(synk): nn.Dropout(0.1) is treated as identity (inference/eval mode).
    for b in range(b_tile):
        te_col = te_ref[n0 + b]                                       # (C_out, 1) f32
        seg = h1[:, b * L:(b + 1) * L] + te_col
        h_ref[pl.ds(0, C_out), pl.ds(b * L, L)] = group_norm_swish(
            seg, S2_ref[...], g2_ref[...], b2_ref[...]).astype(h_ref.dtype)

    # ---- conv2 (3x3, pad 1) [+ fused 1x1 skip] as one matmul ----
    build_taps(h_ref[pl.ds(0, C_out), :], C_out)
    k2 = 9 * C_out
    if has_skip:
        op_ref[pl.ds(k2, C_in), :] = x_ref[...].astype(op_ref.dtype)
        k2 += C_in
    out = jnp.dot(w2_ref[...], op_ref[pl.ds(0, k2), :],
                  preferred_element_type=jnp.float32) + b2s_ref[...]
    if not has_skip:
        out = out + x_ref[...]          # identity skip: exact f32 residual add
    out_ref[...] = out


def down_block_forward(x, t, params, *, n_groups=N_GROUPS,
                       mxu_dtype=jnp.bfloat16, b_tile=None):
    N, C_in, H, W = x.shape
    C_out = params["conv1_w"].shape[0]
    L = H * W
    f32 = jnp.float32
    has_skip = "skip_w" in params
    mxu_dtype = jnp.dtype(mxu_dtype)

    # Roll/mask taps in bf16 only where the VPU/XLU are bf16-native (v6e/v7x).
    tap_dtype = mxu_dtype if (_bf16_elementwise_ok() and mxu_dtype.itemsize < 4) else f32

    # ---- batch tiling: largest divisor of N keeping >=2 grid steps & modest lanes ----
    if b_tile is None:
        b_tile = 1
        for d in range(1, N + 1):
            if N % d == 0 and (N // d) >= 2 and d * L <= 4096:
                b_tile = d
    assert N % b_tile == 0, (N, b_tile)
    grid_n = N // b_tile
    Lb = b_tile * L

    # ---- lane-dense, batch-packed activations: (C_in, N*L) ----
    x_cl = x.astype(f32).transpose(1, 0, 2, 3).reshape(C_in, N * L)

    # ---- hoisted time embedding: Linear(Swish(t)); conv1 bias folded in ----
    t32 = t.astype(f32)
    te = (t32 * _sigmoid(t32)) @ params["te_w"].astype(f32).T + params["te_b"].astype(f32)
    te_b1 = (te + params["conv1_b"].astype(f32)[None, :])[:, :, None]   # (N, C_out, 1)

    # ---- per-tap validity masks (zero padding), tiled across the b_tile segments ----
    yy, xx = jnp.meshgrid(jnp.arange(H), jnp.arange(W), indexing="ij")
    mask_rows = []
    for ky in range(3):
        for kx in range(3):
            dy, dx = ky - 1, kx - 1
            valid = ((yy + dy >= 0) & (yy + dy < H) &
                     (xx + dx >= 0) & (xx + dx < W))
            mask_rows.append(jnp.tile(valid.reshape(1, L), (1, b_tile)))
    masks = jnp.stack(mask_rows, axis=0).astype(tap_dtype)              # (9, 1, Lb)

    # ---- GroupNorm group-averaging matrices (mean over cpg*H*W as a matmul) ----
    def group_avg_matrix(C):
        cpg = C // n_groups
        gid = jnp.arange(C) // cpg
        return (gid[:, None] == gid[None, :]).astype(f32) / float(cpg * L)

    S1 = group_avg_matrix(C_in)
    S2 = group_avg_matrix(C_out)

    # ---- fused conv weights: conv1 -> (C_out, 9*C_in); conv2 [+1x1 skip] ----
    w1f = (params["conv1_w"].astype(f32).transpose(0, 2, 3, 1)
           .reshape(C_out, 9 * C_in).astype(mxu_dtype))
    w2_taps = (params["conv2_w"].astype(f32).transpose(0, 2, 3, 1)
               .reshape(C_out, 9 * C_out))
    if has_skip:
        skip_w = params["skip_w"].astype(f32).reshape(C_out, C_in)
        w2f = jnp.concatenate([w2_taps, skip_w], axis=1).astype(mxu_dtype)
        skip_b = params["skip_b"].astype(f32)
    else:
        w2f = w2_taps.astype(mxu_dtype)
        skip_b = jnp.zeros((C_out,), f32)
    K1 = 9 * C_in
    K2 = w2f.shape[1]
    K_max = max(K1, K2)

    col = lambda v: v.astype(f32).reshape(-1, 1)
    b2s = col(params["conv2_b"]) + col(skip_b)                          # (C_out, 1)

    args = (x_cl, te_b1, masks,
            col(params["gn1_g"]), col(params["gn1_b"]), S1, w1f,
            col(params["gn2_g"]), col(params["gn2_b"]), S2, w2f, b2s)

    def full_spec(a):
        nd = a.ndim
        return pl.BlockSpec(a.shape, lambda n, _nd=nd: (0,) * _nd)      # fetched once

    in_specs = ([pl.BlockSpec((C_in, Lb), lambda n: (0, n))]            # batch slab
                + [full_spec(a) for a in args[1:]])                     # grid-invariant

    kernel = functools.partial(_down_block_kernel, W, L, b_tile, C_in, C_out, has_skip)

    out = pl.pallas_call(
        kernel,
        grid=(grid_n,),
        in_specs=in_specs,
        out_specs=pl.BlockSpec((C_out, Lb), lambda n: (0, n)),
        out_shape=jax.ShapeDtypeStruct((C_out, N * L), f32),
        scratch_shapes=[
            pltpu.VMEM((max(C_in, C_out), Lb), tap_dtype),   # GN+Swish activations
            pltpu.VMEM((K_max, Lb), mxu_dtype),              # staged big-K MXU operand
        ],
        compiler_params=pltpu.CompilerParams(
            dimension_semantics=("parallel",)),              # batch slabs independent
    )(*args)

    # Free-ish reshape/transpose back to NCHW.
    return out.reshape(C_out, N, H, W).transpose(1, 0, 2, 3)


def down_block_ref(x, t, params, n_groups=N_GROUPS):
    """Pure-JAX reference mirroring the PyTorch forward (eval mode)."""
    swish = lambda v: v * _sigmoid(v)

    def gn(h, g, b):
        N_, C, H, W = h.shape
        hg = h.reshape(N_, n_groups, -1)
        mean = hg.mean(axis=2, keepdims=True)
        var = hg.var(axis=2, keepdims=True)
        hn = ((hg - mean) / jnp.sqrt(var + EPS)).reshape(N_, C, H, W)
        return hn * g[None, :, None, None] + b[None, :, None, None]

    def conv(h, w, b, pad):
        y = lax.conv_general_dilated(h, w, (1, 1), pad,
                                     dimension_numbers=("NCHW", "OIHW", "NCHW"),
                                     precision=lax.Precision.HIGHEST)
        return y + b[None, :, None, None]

    h = conv(swish(gn(x, params["gn1_g"], params["gn1_b"])),
             params["conv1_w"], params["conv1_b"], ((1, 1), (1, 1)))
    te = swish(t) @ params["te_w"].T + params["te_b"]
    h = h + te[:, :, None, None]
    h = conv(swish(gn(h, params["gn2_g"], params["gn2_b"])),
             params["conv2_w"], params["conv2_b"], ((1, 1), (1, 1)))
    if "skip_w" in params:
        skip = conv(x, params["skip_w"], params["skip_b"], ((0, 0), (0, 0)))
    else:
        skip = x
    return h + skip


def make_params(key, C_in, C_out, T, with_skip):
    ks = jax.random.split(key, 12)
    p = {
        "gn1_g": 1.0 + 0.1 * jax.random.normal(ks[0], (C_in,)),
        "gn1_b": 0.1 * jax.random.normal(ks[1], (C_in,)),
        "conv1_w": 0.1 * jax.random.normal(ks[2], (C_out, C_in, 3, 3)),
        "conv1_b": 0.1 * jax.random.normal(ks[3], (C_out,)),
        "te_w": 0.1 * jax.random.normal(ks[4], (C_out, T)),
        "te_b": 0.1 * jax.random.normal(ks[5], (C_out,)),
        "gn2_g": 1.0 + 0.1 * jax.random.normal(ks[6], (C_out,)),
        "gn2_b": 0.1 * jax.random.normal(ks[7], (C_out,)),
        "conv2_w": 0.1 * jax.random.normal(ks[8], (C_out, C_out, 3, 3)),
        "conv2_b": 0.1 * jax.random.normal(ks[9], (C_out,)),
    }
    if with_skip:
        p["skip_w"] = 0.1 * jax.random.normal(ks[10], (C_out, C_in, 1, 1))
        p["skip_b"] = 0.1 * jax.random.normal(ks[11], (C_out,))
    return jax.tree_util.tree_map(lambda a: a.astype(jnp.float32), p)


if __name__ == "__main__":
    key = jax.random.PRNGKey(0)
    N, C_in, C_out, T, H, W = 2, 32, 64, 32, 16, 16   # n_groups=32 => channels % 32 == 0
    kp, kx, kt, kp2 = jax.random.split(key, 4)

    params = make_params(kp, C_in, C_out, T, with_skip=True)
    x = jax.random.normal(kx, (N, C_in, H, W), jnp.float32)
    t = jax.random.normal(kt, (N, T), jnp.float32)

    ref = jax.block_until_ready(down_block_ref(x, t, params))

    # Exact path: f32 MXU operands.
    out_f32 = jax.block_until_ready(
        down_block_forward(x, t, params, mxu_dtype=jnp.float32))
    assert out_f32.shape == (N, C_out, H, W), out_f32.shape
    err_f32 = float(jnp.max(jnp.abs(out_f32 - ref)))
    assert err_f32 < 2e-2, f"f32 max abs err {err_f32}"

    # Default fast path: bf16 MXU operands, f32 accumulation / f32 GroupNorm math.
    out_bf16 = jax.block_until_ready(down_block_forward(x, t, params))
    assert out_bf16.shape == (N, C_out, H, W), out_bf16.shape
    err_bf16 = float(jnp.max(jnp.abs(out_bf16 - ref)))
    assert err_bf16 < 8e-2, f"bf16 max abs err {err_bf16}"

    # Identity-skip variant (in_channels == out_channels): residual added in exact f32.
    params_id = make_params(kp2, C_out, C_out, T, with_skip=False)
    x2 = jax.random.normal(jax.random.fold_in(kx, 1), (N, C_out, H, W), jnp.float32)
    ref_id = jax.block_until_ready(down_block_ref(x2, t, params_id))
    out_id = jax.block_until_ready(down_block_forward(x2, t, params_id))
    err_id = float(jnp.max(jnp.abs(out_id - ref_id)))
    assert err_id < 8e-2, f"identity-skip max abs err {err_id}"

    print("KERNEL_OK")
</pallas_src>

<mosaic_0001>
module attributes {stable_mosaic.version = 11 : i64} {
  func.func @_down_block_kernel(%arg0: i32, %arg1: memref<32x256xf32, #tpu.memory_space<vmem>>, %arg2: memref<2x64x1xf32, #tpu.memory_space<vmem>>, %arg3: memref<9x1x256xf32, #tpu.memory_space<vmem>>, %arg4: memref<32x1xf32, #tpu.memory_space<vmem>>, %arg5: memref<32x1xf32, #tpu.memory_space<vmem>>, %arg6: memref<32x32xf32, #tpu.memory_space<vmem>>, %arg7: memref<64x288xf32, #tpu.memory_space<vmem>>, %arg8: memref<64x1xf32, #tpu.memory_space<vmem>>, %arg9: memref<64x1xf32, #tpu.memory_space<vmem>>, %arg10: memref<64x64xf32, #tpu.memory_space<vmem>>, %arg11: memref<64x608xf32, #tpu.memory_space<vmem>>, %arg12: memref<64x1xf32, #tpu.memory_space<vmem>>, %arg13: memref<64x256xf32, #tpu.memory_space<vmem>>, %arg14: memref<64x256xf32, #tpu.memory_space<vmem>>, %arg15: memref<608x256xf32, #tpu.memory_space<vmem>>) attributes {dimension_semantics = [#tpu.dimension_semantics<parallel>], iteration_bounds = array<i64: 2>, scalar_prefetch = 0 : i64, scratch_operands = 2 : i64, tpu.core_type = #tpu.core_type<tc>, window_params = [{transform_indices = @transform_0, window_bounds = array<i64: 32, 256>}, {pipeline_mode = #tpu.pipeline_mode<synchronous>, transform_indices = @transform_1, window_bounds = array<i64: 2, 64, 1>}, {pipeline_mode = #tpu.pipeline_mode<synchronous>, transform_indices = @transform_2, window_bounds = array<i64: 9, 1, 256>}, {pipeline_mode = #tpu.pipeline_mode<synchronous>, transform_indices = @transform_3, window_bounds = array<i64: 32, 1>}, {pipeline_mode = #tpu.pipeline_mode<synchronous>, transform_indices = @transform_4, window_bounds = array<i64: 32, 1>}, {pipeline_mode = #tpu.pipeline_mode<synchronous>, transform_indices = @transform_5, window_bounds = array<i64: 32, 32>}, {pipeline_mode = #tpu.pipeline_mode<synchronous>, transform_indices = @transform_6, window_bounds = array<i64: 64, 288>}, {pipeline_mode = #tpu.pipeline_mode<synchronous>, transform_indices = @transform_7, window_bounds = array<i64: 64, 1>}, {pipeline_mode = #tpu.pipeline_mode<synchronous>, transform_indices = @transform_8, window_bounds = array<i64: 64, 1>}, {pipeline_mode = #tpu.pipeline_mode<synchronous>, transform_indices = @transform_9, window_bounds = array<i64: 64, 64>}, {pipeline_mode = #tpu.pipeline_mode<synchronous>, transform_indices = @transform_10, window_bounds = array<i64: 64, 608>}, {pipeline_mode = #tpu.pipeline_mode<synchronous>, transform_indices = @transform_11, window_bounds = array<i64: 64, 1>}, {transform_indices = @transform_12, window_bounds = array<i64: 64, 256>}]} {
    %c1_i32 = arith.constant 1 : i32
    %0 = arith.muli %arg0, %c1_i32 : i32
    %c0 = arith.constant 0 : index
    %c0_0 = arith.constant 0 : index
    %1 = vector.load %arg1[%c0, %c0_0] : memref<32x256xf32, #tpu.memory_space<vmem>>, vector<32x256xf32>
    %c0_1 = arith.constant 0 : index
    %c0_2 = arith.constant 0 : index
    %2 = vector.load %arg6[%c0_1, %c0_2] : memref<32x32xf32, #tpu.memory_space<vmem>>, vector<32x32xf32>
    %c0_3 = arith.constant 0 : index
    %c0_4 = arith.constant 0 : index
    %3 = vector.load %arg4[%c0_3, %c0_4] : memref<32x1xf32, #tpu.memory_space<vmem>>, vector<32x1xf32>
    %c0_5 = arith.constant 0 : index
    %c0_6 = arith.constant 0 : index
    %4 = vector.load %arg5[%c0_5, %c0_6] : memref<32x1xf32, #tpu.memory_space<vmem>>, vector<32x1xf32>
    %cst = arith.constant dense<0.000000e+00> : vector<32xf32>
    %5 = vector.multi_reduction <add>, %1, %cst [1] : vector<32x256xf32> to vector<32xf32>
    %6 = vector.shape_cast %5 : vector<32xf32> to vector<32x1xf32>
    %7 = arith.mulf %1, %1 : vector<32x256xf32>
    %cst_7 = arith.constant dense<0.000000e+00> : vector<32xf32>
    %8 = vector.multi_reduction <add>, %7, %cst_7 [1] : vector<32x256xf32> to vector<32xf32>
    %9 = vector.shape_cast %8 : vector<32xf32> to vector<32x1xf32>
    %cst_8 = arith.constant dense<0.000000e+00> : vector<32x1xf32>
    %10 = tpu.matmul %2, %6, %cst_8 {dimension_numbers = #tpu.dot_dimension_numbers<[1], [0], [0], [1], [0, 0, 1, 1], [], []>} : vector<32x32xf32>, vector<32x1xf32>, vector<32x1xf32> -> vector<32x1xf32>
    %cst_9 = arith.constant dense<0.000000e+00> : vector<32x1xf32>
    %11 = tpu.matmul %2, %9, %cst_9 {dimension_numbers = #tpu.dot_dimension_numbers<[1], [0], [0], [1], [0, 0, 1, 1], [], []>} : vector<32x32xf32>, vector<32x1xf32>, vector<32x1xf32> -> vector<32x1xf32>
    %12 = arith.mulf %10, %10 : vector<32x1xf32>
    %13 = arith.subf %11, %12 : vector<32x1xf32>
    %cst_10 = arith.constant 0.000000e+00 : f32
    %14 = vector.broadcast %cst_10 : f32 to vector<32x1xf32>
    %15 = arith.maximumf %13, %14 : vector<32x1xf32>
    %cst_11 = arith.constant 9.99999974E-6 : f32
    %16 = vector.broadcast %cst_11 : f32 to vector<32x1xf32>
    %17 = arith.addf %15, %16 : vector<32x1xf32>
    %18 = math.rsqrt %17 : vector<32x1xf32>
    %19 = vector.broadcast %10 : vector<32x1xf32> to vector<32x256xf32>
    %20 = arith.subf %1, %19 : vector<32x256xf32>
    %21 = vector.broadcast %18 : vector<32x1xf32> to vector<32x256xf32>
    %22 = arith.mulf %20, %21 : vector<32x256xf32>
    %23 = vector.broadcast %3 : vector<32x1xf32> to vector<32x256xf32>
    %24 = arith.mulf %22, %23 : vector<32x256xf32>
    %25 = vector.broadcast %4 : vector<32x1xf32> to vector<32x256xf32>
    %26 = arith.addf %24, %25 : vector<32x256xf32>
    %cst_12 = arith.constant 0.000000e+00 : f32
    %27 = vector.broadcast %cst_12 : f32 to vector<32x256xf32>
    %28 = arith.subf %27, %26 : vector<32x256xf32>
    %29 = math.exp %28 : vector<32x256xf32>
    %cst_13 = arith.constant 1.000000e+00 : f32
    %30 = vector.broadcast %cst_13 : f32 to vector<32x256xf32>
    %31 = arith.addf %30, %29 : vector<32x256xf32>
    %cst_14 = arith.constant 1.000000e+00 : f32
    %32 = vector.broadcast %cst_14 : f32 to vector<32x256xf32>
    %33 = arith.divf %32, %31 : vector<32x256xf32>
    %34 = arith.mulf %26, %33 : vector<32x256xf32>
    %c0_15 = arith.constant 0 : index
    %c0_16 = arith.constant 0 : index
    %35 = vector.load %arg14[%c0_15, %c0_16] : memref<64x256xf32, #tpu.memory_space<vmem>>, vector<32x256xf32>
    tpu.vector_store %arg14[%c0_15, %c0_16], %34 {strides = array<i32>} : memref<64x256xf32, #tpu.memory_space<vmem>>, vector<32x256xf32>,
    %c0_17 = arith.constant 0 : index
    %c0_18 = arith.constant 0 : index
    %36 = vector.load %arg14[%c0_17, %c0_18] : memref<64x256xf32, #tpu.memory_space<vmem>>, vector<32x256xf32>
    %c17_i32 = arith.constant 17 : i32
    %37 = tpu.dynamic_rotate %36 by %c17_i32 dim 1 : vector<32x256xf32>, i32 -> vector<32x256xf32>
    %c0_19 = arith.constant 0 : index
    %c0_20 = arith.constant 0 : index
    %c0_21 = arith.constant 0 : index
    %38 = vector.load %arg3[%c0_19, %c0_20, %c0_21] : memref<9x1x256xf32, #tpu.memory_space<vmem>>, vector<1x1x256xf32>
    %39 = vector.shape_cast %38 : vector<1x1x256xf32> to vector<1x256xf32>
    %40 = vector.broadcast %39 : vector<1x256xf32> to vector<32x256xf32>
    %41 = arith.mulf %37, %40 : vector<32x256xf32>
    %c0_22 = arith.constant 0 : index
    %c0_23 = arith.constant 0 : index
    %42 = vector.load %arg15[%c0_22, %c0_23] : memref<608x256xf32, #tpu.memory_space<vmem>>, vector<32x256xf32>
    tpu.vector_store %arg15[%c0_22, %c0_23], %41 {strides = array<i32>} : memref<608x256xf32, #tpu.memory_space<vmem>>, vector<32x256xf32>,
    %c16_i32 = arith.constant 16 : i32
    %43 = tpu.dynamic_rotate %36 by %c16_i32 dim 1 : vector<32x256xf32>, i32 -> vector<32x256xf32>
    %c1 = arith.constant 1 : index
    %c0_24 = arith.constant 0 : index
    %c0_25 = arith.constant 0 : index
    %44 = vector.load %arg3[%c1, %c0_24, %c0_25] : memref<9x1x256xf32, #tpu.memory_space<vmem>>, vector<1x1x256xf32>
    %45 = vector.shape_cast %44 : vector<1x1x256xf32> to vector<1x256xf32>
    %46 = vector.broadcast %45 : vector<1x256xf32> to vector<32x256xf32>
    %47 = arith.mulf %43, %46 : vector<32x256xf32>
    %c32 = arith.constant 32 : index
    %c0_26 = arith.constant 0 : index
    %48 = vector.load %arg15[%c32, %c0_26] : memref<608x256xf32, #tpu.memory_space<vmem>>, vector<32x256xf32>
    tpu.vector_store %arg15[%c32, %c0_26], %47 {strides = array<i32>} : memref<608x256xf32, #tpu.memory_space<vmem>>, vector<32x256xf32>,
    %c15_i32 = arith.constant 15 : i32
    %49 = tpu.dynamic_rotate %36 by %c15_i32 dim 1 : vector<32x256xf32>, i32 -> vector<32x256xf32>
    %c2 = arith.constant 2 : index
    %c0_27 = arith.constant 0 : index
    %c0_28 = arith.constant 0 : index
    %50 = vector.load %arg3[%c2, %c0_27, %c0_28] : memref<9x1x256xf32, #tpu.memory_space<vmem>>, vector<1x1x256xf32>
    %51 = vector.shape_cast %50 : vector<1x1x256xf32> to vector<1x256xf32>
    %52 = vector.broadcast %51 : vector<1x256xf32> to vector<32x256xf32>
    %53 = arith.mulf %49, %52 : vector<32x256xf32>
    %c64 = arith.constant 64 : index
    %c0_29 = arith.constant 0 : index
    %54 = vector.load %arg15[%c64, %c0_29] : memref<608x256xf32, #tpu.memory_space<vmem>>, vector<32x256xf32>
    tpu.vector_store %arg15[%c64, %c0_29], %53 {strides = array<i32>} : memref<608x256xf32, #tpu.memory_space<vmem>>, vector<32x256xf32>,
    %c1_i32_30 = arith.constant 1 : i32
    %55 = tpu.dynamic_rotate %36 by %c1_i32_30 dim 1 : vector<32x256xf32>, i32 -> vector<32x256xf32>
    %c3 = arith.constant 3 : index
    %c0_31 = arith.constant 0 : index
    %c0_32 = arith.constant 0 : index
    %56 = vector.load %arg3[%c3, %c0_31, %c0_32] : memref<9x1x256xf32, #tpu.memory_space<vmem>>, vector<1x1x256xf32>
    %57 = vector.shape_cast %56 : vector<1x1x256xf32> to vector<1x256xf32>
    %58 = vector.broadcast %57 : vector<1x256xf32> to vector<32x256xf32>
    %59 = arith.mulf %55, %58 : vector<32x256xf32>
    %c96 = arith.constant 96 : index
    %c0_33 = arith.constant 0 : index
    %60 = vector.load %arg15[%c96, %c0_33] : memref<608x256xf32, #tpu.memory_space<vmem>>, vector<32x256xf32>
    tpu.vector_store %arg15[%c96, %c0_33], %59 {strides = array<i32>} : memref<608x256xf32, #tpu.memory_space<vmem>>, vector<32x256xf32>,
    %c128 = arith.constant 128 : index
    %c0_34 = arith.constant 0 : index
    %61 = vector.load %arg15[%c128, %c0_34] : memref<608x256xf32, #tpu.memory_space<vmem>>, vector<32x256xf32>
    tpu.vector_store %arg15[%c128, %c0_34], %36 {strides = array<i32>} : memref<608x256xf32, #tpu.memory_space<vmem>>, vector<32x256xf32>,
    %c255_i32 = arith.constant 255 : i32
    %62 = tpu.dynamic_rotate %36 by %c255_i32 dim 1 : vector<32x256xf32>, i32 -> vector<32x256xf32>
    %c5 = arith.constant 5 : index
    %c0_35 = arith.constant 0 : index
    %c0_36 = arith.constant 0 : index
    %63 = vector.load %arg3[%c5, %c0_35, %c0_36] : memref<9x1x256xf32, #tpu.memory_space<vmem>>, vector<1x1x256xf32>
    %64 = vector.shape_cast %63 : vector<1x1x256xf32> to vector<1x256xf32>
    %65 = vector.broadcast %64 : vector<1x256xf32> to vector<32x256xf32>
    %66 = arith.mulf %62, %65 : vector<32x256xf32>
    %c160 = arith.constant 160 : index
    %c0_37 = arith.constant 0 : index
    %67 = vector.load %arg15[%c160, %c0_37] : memref<608x256xf32, #tpu.memory_space<vmem>>, vector<32x256xf32>
    tpu.vector_store %arg15[%c160, %c0_37], %66 {strides = array<i32>} : memref<608x256xf32, #tpu.memory_space<vmem>>, vector<32x256xf32>,
    %c241_i32 = arith.constant 241 : i32
    %68 = tpu.dynamic_rotate %36 by %c241_i32 dim 1 : vector<32x256xf32>, i32 -> vector<32x256xf32>
    %c6 = arith.constant 6 : index
    %c0_38 = arith.constant 0 : index
    %c0_39 = arith.constant 0 : index
    %69 = vector.load %arg3[%c6, %c0_38, %c0_39] : memref<9x1x256xf32, #tpu.memory_space<vmem>>, vector<1x1x256xf32>
    %70 = vector.shape_cast %69 : vector<1x1x256xf32> to vector<1x256xf32>
    %71 = vector.broadcast %70 : vector<1x256xf32> to vector<32x256xf32>
    %72 = arith.mulf %68, %71 : vector<32x256xf32>
    %c192 = arith.constant 192 : index
    %c0_40 = arith.constant 0 : index
    %73 = vector.load %arg15[%c192, %c0_40] : memref<608x256xf32, #tpu.memory_space<vmem>>, vector<32x256xf32>
    tpu.vector_store %arg15[%c192, %c0_40], %72 {strides = array<i32>} : memref<608x256xf32, #tpu.memory_space<vmem>>, vector<32x256xf32>,
    %c240_i32 = arith.constant 240 : i32
    %74 = tpu.dynamic_rotate %36 by %c240_i32 dim 1 : vector<32x256xf32>, i32 -> vector<32x256xf32>
    %c7 = arith.constant 7 : index
    %c0_41 = arith.constant 0 : index
    %c0_42 = arith.constant 0 : index
    %75 = vector.load %arg3[%c7, %c0_41, %c0_42] : memref<9x1x256xf32, #tpu.memory_space<vmem>>, vector<1x1x256xf32>
    %76 = vector.shape_cast %75 : vector<1x1x256xf32> to vector<1x256xf32>
    %77 = vector.broadcast %76 : vector<1x256xf32> to vector<32x256xf32>
    %78 = arith.mulf %74, %77 : vector<32x256xf32>
    %c224 = arith.constant 224 : index
    %c0_43 = arith.constant 0 : index
    %79 = vector.load %arg15[%c224, %c0_43] : memref<608x256xf32, #tpu.memory_space<vmem>>, vector<32x256xf32>
    tpu.vector_store %arg15[%c224, %c0_43], %78 {strides = array<i32>} : memref<608x256xf32, #tpu.memory_space<vmem>>, vector<32x256xf32>,
    %c239_i32 = arith.constant 239 : i32
    %80 = tpu.dynamic_rotate %36 by %c239_i32 dim 1 : vector<32x256xf32>, i32 -> vector<32x256xf32>
    %c8 = arith.constant 8 : index
    %c0_44 = arith.constant 0 : index
    %c0_45 = arith.constant 0 : index
    %81 = vector.load %arg3[%c8, %c0_44, %c0_45] : memref<9x1x256xf32, #tpu.memory_space<vmem>>, vector<1x1x256xf32>
    %82 = vector.shape_cast %81 : vector<1x1x256xf32> to vector<1x256xf32>
    %83 = vector.broadcast %82 : vector<1x256xf32> to vector<32x256xf32>
    %84 = arith.mulf %80, %83 : vector<32x256xf32>
    %c256 = arith.constant 256 : index
    %c0_46 = arith.constant 0 : index
    %85 = vector.load %arg15[%c256, %c0_46] : memref<608x256xf32, #tpu.memory_space<vmem>>, vector<32x256xf32>
    tpu.vector_store %arg15[%c256, %c0_46], %84 {strides = array<i32>} : memref<608x256xf32, #tpu.memory_space<vmem>>, vector<32x256xf32>,
    %c0_47 = arith.constant 0 : index
    %c0_48 = arith.constant 0 : index
    %86 = vector.load %arg7[%c0_47, %c0_48] : memref<64x288xf32, #tpu.memory_space<vmem>>, vector<64x288xf32>
    %c0_49 = arith.constant 0 : index
    %c0_50 = arith.constant 0 : index
    %87 = vector.load %arg15[%c0_49, %c0_50] : memref<608x256xf32, #tpu.memory_space<vmem>>, vector<288x256xf32>
    %cst_51 = arith.constant dense<0.000000e+00> : vector<64x256xf32>
    %88 = tpu.matmul %86, %87, %cst_51 {dimension_numbers = #tpu.dot_dimension_numbers<[1], [0], [0], [1], [0, 0, 1, 1], [], []>} : vector<64x288xf32>, vector<288x256xf32>, vector<64x256xf32> -> vector<64x256xf32>
    %c0_i32 = arith.constant 0 : i32
    %89 = arith.addi %0, %c0_i32 : i32
    %90 = arith.index_cast %89 : i32 to index
    %c0_52 = arith.constant 0 : index
    %c0_53 = arith.constant 0 : index
    %91 = vector.load %arg2[%90, %c0_52, %c0_53] : memref<2x64x1xf32, #tpu.memory_space<vmem>>, vector<1x64x1xf32>
    %92 = vector.shape_cast %91 : vector<1x64x1xf32> to vector<64x1xf32>
    %93 = vector.broadcast %92 : vector<64x1xf32> to vector<64x256xf32>
    %94 = arith.addf %88, %93 : vector<64x256xf32>
    %c0_54 = arith.constant 0 : index
    %c0_55 = arith.constant 0 : index
    %95 = vector.load %arg10[%c0_54, %c0_55] : memref<64x64xf32, #tpu.memory_space<vmem>>, vector<64x64xf32>
    %c0_56 = arith.constant 0 : index
    %c0_57 = arith.constant 0 : index
    %96 = vector.load %arg8[%c0_56, %c0_57] : memref<64x1xf32, #tpu.memory_space<vmem>>, vector<64x1xf32>
    %c0_58 = arith.constant 0 : index
    %c0_59 = arith.constant 0 : index
    %97 = vector.load %arg9[%c0_58, %c0_59] : memref<64x1xf32, #tpu.memory_space<vmem>>, vector<64x1xf32>
    %cst_60 = arith.constant dense<0.000000e+00> : vector<64xf32>
    %98 = vector.multi_reduction <add>, %94, %cst_60 [1] : vector<64x256xf32> to vector<64xf32>
    %99 = vector.shape_cast %98 : vector<64xf32> to vector<64x1xf32>
    %100 = arith.mulf %94, %94 : vector<64x256xf32>
    %cst_61 = arith.constant dense<0.000000e+00> : vector<64xf32>
    %101 = vector.multi_reduction <add>, %100, %cst_61 [1] : vector<64x256xf32> to vector<64xf32>
    %102 = vector.shape_cast %101 : vector<64xf32> to vector<64x1xf32>
    %cst_62 = arith.constant dense<0.000000e+00> : vector<64x1xf32>
    %103 = tpu.matmul %95, %99, %cst_62 {dimension_numbers = #tpu.dot_dimension_numbers<[1], [0], [0], [1], [0, 0, 1, 1], [], []>} : vector<64x64xf32>, vector<64x1xf32>, vector<64x1xf32> -> vector<64x1xf32>
    %cst_63 = arith.constant dense<0.000000e+00> : vector<64x1xf32>
    %104 = tpu.matmul %95, %102, %cst_63 {dimension_numbers = #tpu.dot_dimension_numbers<[1], [0], [0], [1], [0, 0, 1, 1], [], []>} : vector<64x64xf32>, vector<64x1xf32>, vector<64x1xf32> -> vector<64x1xf32>
    %105 = arith.mulf %103, %103 : vector<64x1xf32>
    %106 = arith.subf %104, %105 : vector<64x1xf32>
    %cst_64 = arith.constant 0.000000e+00 : f32
    %107 = vector.broadcast %cst_64 : f32 to vector<64x1xf32>
    %108 = arith.maximumf %106, %107 : vector<64x1xf32>
    %cst_65 = arith.constant 9.99999974E-6 : f32
    %109 = vector.broadcast %cst_65 : f32 to vector<64x1xf32>
    %110 = arith.addf %108, %109 : vector<64x1xf32>
    %111 = math.rsqrt %110 : vector<64x1xf32>
    %112 = vector.broadcast %103 : vector<64x1xf32> to vector<64x256xf32>
    %113 = arith.subf %94, %112 : vector<64x256xf32>
    %114 = vector.broadcast %111 : vector<64x1xf32> to vector<64x256xf32>
    %115 = arith.mulf %113, %114 : vector<64x256xf32>
    %116 = vector.broadcast %96 : vector<64x1xf32> to vector<64x256xf32>
    %117 = arith.mulf %115, %116 : vector<64x256xf32>
    %118 = vector.broadcast %97 : vector<64x1xf32> to vector<64x256xf32>
    %119 = arith.addf %117, %118 : vector<64x256xf32>
    %cst_66 = arith.constant 0.000000e+00 : f32
    %120 = vector.broadcast %cst_66 : f32 to vector<64x256xf32>
    %121 = arith.subf %120, %119 : vector<64x256xf32>
    %122 = math.exp %121 : vector<64x256xf32>
    %cst_67 = arith.constant 1.000000e+00 : f32
    %123 = vector.broadcast %cst_67 : f32 to vector<64x256xf32>
    %124 = arith.addf %123, %122 : vector<64x256xf32>
    %cst_68 = arith.constant 1.000000e+00 : f32
    %125 = vector.broadcast %cst_68 : f32 to vector<64x256xf32>
    %126 = arith.divf %125, %124 : vector<64x256xf32>
    %127 = arith.mulf %119, %126 : vector<64x256xf32>
    %c0_69 = arith.constant 0 : index
    %c0_70 = arith.constant 0 : index
    %128 = vector.load %arg14[%c0_69, %c0_70] : memref<64x256xf32, #tpu.memory_space<vmem>>, vector<64x256xf32>
    tpu.vector_store %arg14[%c0_69, %c0_70], %127 {strides = array<i32>} : memref<64x256xf32, #tpu.memory_space<vmem>>, vector<64x256xf32>,
    %c0_71 = arith.constant 0 : index
    %c0_72 = arith.constant 0 : index
    %129 = vector.load %arg14[%c0_71, %c0_72] : memref<64x256xf32, #tpu.memory_space<vmem>>, vector<64x256xf32>
    %c17_i32_73 = arith.constant 17 : i32
    %130 = tpu.dynamic_rotate %129 by %c17_i32_73 dim 1 : vector<64x256xf32>, i32 -> vector<64x256xf32>
    %c0_74 = arith.constant 0 : index
    %c0_75 = arith.constant 0 : index
    %c0_76 = arith.constant 0 : index
    %131 = vector.load %arg3[%c0_74, %c0_75, %c0_76] : memref<9x1x256xf32, #tpu.memory_space<vmem>>, vector<1x1x256xf32>
    %132 = vector.shape_cast %131 : vector<1x1x256xf32> to vector<1x256xf32>
    %133 = vector.broadcast %132 : vector<1x256xf32> to vector<64x256xf32>
    %134 = arith.mulf %130, %133 : vector<64x256xf32>
    %c0_77 = arith.constant 0 : index
    %c0_78 = arith.constant 0 : index
    %135 = vector.load %arg15[%c0_77, %c0_78] : memref<608x256xf32, #tpu.memory_space<vmem>>, vector<64x256xf32>
    tpu.vector_store %arg15[%c0_77, %c0_78], %134 {strides = array<i32>} : memref<608x256xf32, #tpu.memory_space<vmem>>, vector<64x256xf32>,
    %c16_i32_79 = arith.constant 16 : i32
    %136 = tpu.dynamic_rotate %129 by %c16_i32_79 dim 1 : vector<64x256xf32>, i32 -> vector<64x256xf32>
    %c1_80 = arith.constant 1 : index
    %c0_81 = arith.constant 0 : index
    %c0_82 = arith.constant 0 : index
    %137 = vector.load %arg3[%c1_80, %c0_81, %c0_82] : memref<9x1x256xf32, #tpu.memory_space<vmem>>, vector<1x1x256xf32>
    %138 = vector.shape_cast %137 : vector<1x1x256xf32> to vector<1x256xf32>
    %139 = vector.broadcast %138 : vector<1x256xf32> to vector<64x256xf32>
    %140 = arith.mulf %136, %139 : vector<64x256xf32>
    %c64_83 = arith.constant 64 : index
    %c0_84 = arith.constant 0 : index
    %141 = vector.load %arg15[%c64_83, %c0_84] : memref<608x256xf32, #tpu.memory_space<vmem>>, vector<64x256xf32>
    tpu.vector_store %arg15[%c64_83, %c0_84], %140 {strides = array<i32>} : memref<608x256xf32, #tpu.memory_space<vmem>>, vector<64x256xf32>,
    %c15_i32_85 = arith.constant 15 : i32
    %142 = tpu.dynamic_rotate %129 by %c15_i32_85 dim 1 : vector<64x256xf32>, i32 -> vector<64x256xf32>
    %c2_86 = arith.constant 2 : index
    %c0_87 = arith.constant 0 : index
    %c0_88 = arith.constant 0 : index
    %143 = vector.load %arg3[%c2_86, %c0_87, %c0_88] : memref<9x1x256xf32, #tpu.memory_space<vmem>>, vector<1x1x256xf32>
    %144 = vector.shape_cast %143 : vector<1x1x256xf32> to vector<1x256xf32>
    %145 = vector.broadcast %144 : vector<1x256xf32> to vector<64x256xf32>
    %146 = arith.mulf %142, %145 : vector<64x256xf32>
    %c128_89 = arith.constant 128 : index
    %c0_90 = arith.constant 0 : index
    %147 = vector.load %arg15[%c128_89, %c0_90] : memref<608x256xf32, #tpu.memory_space<vmem>>, vector<64x256xf32>
    tpu.vector_store %arg15[%c128_89, %c0_90], %146 {strides = array<i32>} : memref<608x256xf32, #tpu.memory_space<vmem>>, vector<64x256xf32>,
    %c1_i32_91 = arith.constant 1 : i32
    %148 = tpu.dynamic_rotate %129 by %c1_i32_91 dim 1 : vector<64x256xf32>, i32 -> vector<64x256xf32>
    %c3_92 = arith.constant 3 : index
    %c0_93 = arith.constant 0 : index
    %c0_94 = arith.constant 0 : index
    %149 = vector.load %arg3[%c3_92, %c0_93, %c0_94] : memref<9x1x256xf32, #tpu.memory_space<vmem>>, vector<1x1x256xf32>
    %150 = vector.shape_cast %149 : vector<1x1x256xf32> to vector<1x256xf32>
    %151 = vector.broadcast %150 : vector<1x256xf32> to vector<64x256xf32>
    %152 = arith.mulf %148, %151 : vector<64x256xf32>
    %c192_95 = arith.constant 192 : index
    %c0_96 = arith.constant 0 : index
    %153 = vector.load %arg15[%c192_95, %c0_96] : memref<608x256xf32, #tpu.memory_space<vmem>>, vector<64x256xf32>
    tpu.vector_store %arg15[%c192_95, %c0_96], %152 {strides = array<i32>} : memref<608x256xf32, #tpu.memory_space<vmem>>, vector<64x256xf32>,
    %c256_97 = arith.constant 256 : index
    %c0_98 = arith.constant 0 : index
    %154 = vector.load %arg15[%c256_97, %c0_98] : memref<608x256xf32, #tpu.memory_space<vmem>>, vector<64x256xf32>
    tpu.vector_store %arg15[%c256_97, %c0_98], %129 {strides = array<i32>} : memref<608x256xf32, #tpu.memory_space<vmem>>, vector<64x256xf32>,
    %c255_i32_99 = arith.constant 255 : i32
    %155 = tpu.dynamic_rotate %129 by %c255_i32_99 dim 1 : vector<64x256xf32>, i32 -> vector<64x256xf32>
    %c5_100 = arith.constant 5 : index
    %c0_101 = arith.constant 0 : index
    %c0_102 = arith.constant 0 : index
    %156 = vector.load %arg3[%c5_100, %c0_101, %c0_102] : memref<9x1x256xf32, #tpu.memory_space<vmem>>, vector<1x1x256xf32>
    %157 = vector.shape_cast %156 : vector<1x1x256xf32> to vector<1x256xf32>
    %158 = vector.broadcast %157 : vector<1x256xf32> to vector<64x256xf32>
    %159 = arith.mulf %155, %158 : vector<64x256xf32>
    %c320 = arith.constant 320 : index
    %c0_103 = arith.constant 0 : index
    %160 = vector.load %arg15[%c320, %c0_103] : memref<608x256xf32, #tpu.memory_space<vmem>>, vector<64x256xf32>
    tpu.vector_store %arg15[%c320, %c0_103], %159 {strides = array<i32>} : memref<608x256xf32, #tpu.memory_space<vmem>>, vector<64x256xf32>,
    %c241_i32_104 = arith.constant 241 : i32
    %161 = tpu.dynamic_rotate %129 by %c241_i32_104 dim 1 : vector<64x256xf32>, i32 -> vector<64x256xf32>
    %c6_105 = arith.constant 6 : index
    %c0_106 = arith.constant 0 : index
    %c0_107 = arith.constant 0 : index
    %162 = vector.load %arg3[%c6_105, %c0_106, %c0_107] : memref<9x1x256xf32, #tpu.memory_space<vmem>>, vector<1x1x256xf32>
    %163 = vector.shape_cast %162 : vector<1x1x256xf32> to vector<1x256xf32>
    %164 = vector.broadcast %163 : vector<1x256xf32> to vector<64x256xf32>
    %165 = arith.mulf %161, %164 : vector<64x256xf32>
    %c384 = arith.constant 384 : index
    %c0_108 = arith.constant 0 : index
    %166 = vector.load %arg15[%c384, %c0_108] : memref<608x256xf32, #tpu.memory_space<vmem>>, vector<64x256xf32>
    tpu.vector_store %arg15[%c384, %c0_108], %165 {strides = array<i32>} : memref<608x256xf32, #tpu.memory_space<vmem>>, vector<64x256xf32>,
    %c240_i32_109 = arith.constant 240 : i32
    %167 = tpu.dynamic_rotate %129 by %c240_i32_109 dim 1 : vector<64x256xf32>, i32 -> vector<64x256xf32>
    %c7_110 = arith.constant 7 : index
    %c0_111 = arith.constant 0 : index
    %c0_112 = arith.constant 0 : index
    %168 = vector.load %arg3[%c7_110, %c0_111, %c0_112] : memref<9x1x256xf32, #tpu.memory_space<vmem>>, vector<1x1x256xf32>
    %169 = vector.shape_cast %168 : vector<1x1x256xf32> to vector<1x256xf32>
    %170 = vector.broadcast %169 : vector<1x256xf32> to vector<64x256xf32>
    %171 = arith.mulf %167, %170 : vector<64x256xf32>
    %c448 = arith.constant 448 : index
    %c0_113 = arith.constant 0 : index
    %172 = vector.load %arg15[%c448, %c0_113] : memref<608x256xf32, #tpu.memory_space<vmem>>, vector<64x256xf32>
    tpu.vector_store %arg15[%c448, %c0_113], %171 {strides = array<i32>} : memref<608x256xf32, #tpu.memory_space<vmem>>, vector<64x256xf32>,
    %c239_i32_114 = arith.constant 239 : i32
    %173 = tpu.dynamic_rotate %129 by %c239_i32_114 dim 1 : vector<64x256xf32>, i32 -> vector<64x256xf32>
    %c8_115 = arith.constant 8 : index
    %c0_116 = arith.constant 0 : index
    %c0_117 = arith.constant 0 : index
    %174 = vector.load %arg3[%c8_115, %c0_116, %c0_117] : memref<9x1x256xf32, #tpu.memory_space<vmem>>, vector<1x1x256xf32>
    %175 = vector.shape_cast %174 : vector<1x1x256xf32> to vector<1x256xf32>
    %176 = vector.broadcast %175 : vector<1x256xf32> to vector<64x256xf32>
    %177 = arith.mulf %173, %176 : vector<64x256xf32>
    %c512 = arith.constant 512 : index
    %c0_118 = arith.constant 0 : index
    %178 = vector.load %arg15[%c512, %c0_118] : memref<608x256xf32, #tpu.memory_space<vmem>>, vector<64x256xf32>
    tpu.vector_store %arg15[%c512, %c0_118], %177 {strides = array<i32>} : memref<608x256xf32, #tpu.memory_space<vmem>>, vector<64x256xf32>,
    %c0_119 = arith.constant 0 : index
    %c0_120 = arith.constant 0 : index
    %179 = vector.load %arg1[%c0_119, %c0_120] : memref<32x256xf32, #tpu.memory_space<vmem>>, vector<32x256xf32>
    %c576 = arith.constant 576 : index
    %c0_121 = arith.constant 0 : index
    %180 = vector.load %arg15[%c576, %c0_121] : memref<608x256xf32, #tpu.memory_space<vmem>>, vector<32x256xf32>
    tpu.vector_store %arg15[%c576, %c0_121], %179 {strides = array<i32>} : memref<608x256xf32, #tpu.memory_space<vmem>>, vector<32x256xf32>,
    %c0_122 = arith.constant 0 : index
    %c0_123 = arith.constant 0 : index
    %181 = vector.load %arg11[%c0_122, %c0_123] : memref<64x608xf32, #tpu.memory_space<vmem>>, vector<64x608xf32>
    %c0_124 = arith.constant 0 : index
    %c0_125 = arith.constant 0 : index
    %182 = vector.load %arg15[%c0_124, %c0_125] : memref<608x256xf32, #tpu.memory_space<vmem>>, vector<608x256xf32>
    %cst_126 = arith.constant dense<0.000000e+00> : vector<64x256xf32>
    %183 = tpu.matmul %181, %182, %cst_126 {dimension_numbers = #tpu.dot_dimension_numbers<[1], [0], [0], [1], [0, 0, 1, 1], [], []>} : vector<64x608xf32>, vector<608x256xf32>, vector<64x256xf32> -> vector<64x256xf32>
    %c0_127 = arith.constant 0 : index
    %c0_128 = arith.constant 0 : index
    %184 = vector.load %arg12[%c0_127, %c0_128] : memref<64x1xf32, #tpu.memory_space<vmem>>, vector<64x1xf32>
    %185 = vector.broadcast %184 : vector<64x1xf32> to vector<64x256xf32>
    %186 = arith.addf %183, %185 : vector<64x256xf32>
    %c0_129 = arith.constant 0 : index
    %c0_130 = arith.constant 0 : index
    %187 = vector.load %arg13[%c0_129, %c0_130] : memref<64x256xf32, #tpu.memory_space<vmem>>, vector<64x256xf32>
    tpu.vector_store %arg13[%c0_129, %c0_130], %186 {strides = array<i32>} : memref<64x256xf32, #tpu.memory_space<vmem>>, vector<64x256xf32>,
    return
  }
  func.func @transform_0(%arg0: i32) -> (i32, i32) {
    %c0_i32 = arith.constant 0 : i32
    %c0_i32_0 = arith.constant 0 : i32
    return %c0_i32, %arg0 : i32, i32
  }
  func.func @transform_1(%arg0: i32) -> (i32, i32, i32) {
    %c0_i32 = arith.constant 0 : i32
    %c0_i32_0 = arith.constant 0 : i32
    %c0_i32_1 = arith.constant 0 : i32
    %c0_i32_2 = arith.constant 0 : i32
    return %c0_i32, %c0_i32_0, %c0_i32_1 : i32, i32, i32
  }
  func.func @transform_2(%arg0: i32) -> (i32, i32, i32) {
    %c0_i32 = arith.constant 0 : i32
    %c0_i32_0 = arith.constant 0 : i32
    %c0_i32_1 = arith.constant 0 : i32
    %c0_i32_2 = arith.constant 0 : i32
    return %c0_i32, %c0_i32_0, %c0_i32_1 : i32, i32, i32
  }
  func.func @transform_3(%arg0: i32) -> (i32, i32) {
    %c0_i32 = arith.constant 0 : i32
    %c0_i32_0 = arith.constant 0 : i32
    %c0_i32_1 = arith.constant 0 : i32
    return %c0_i32, %c0_i32_0 : i32, i32
  }
  func.func @transform_4(%arg0: i32) -> (i32, i32) {
    %c0_i32 = arith.constant 0 : i32
    %c0_i32_0 = arith.constant 0 : i32
    %c0_i32_1 = arith.constant 0 : i32
    return %c0_i32, %c0_i32_0 : i32, i32
  }
  func.func @transform_5(%arg0: i32) -> (i32, i32) {
    %c0_i32 = arith.constant 0 : i32
    %c0_i32_0 = arith.constant 0 : i32
    %c0_i32_1 = arith.constant 0 : i32
    return %c0_i32, %c0_i32_0 : i32, i32
  }
  func.func @transform_6(%arg0: i32) -> (i32, i32) {
    %c0_i32 = arith.constant 0 : i32
    %c0_i32_0 = arith.constant 0 : i32
    %c0_i32_1 = arith.constant 0 : i32
    return %c0_i32, %c0_i32_0 : i32, i32
  }
  func.func @transform_7(%arg0: i32) -> (i32, i32) {
    %c0_i32 = arith.constant 0 : i32
    %c0_i32_0 = arith.constant 0 : i32
    %c0_i32_1 = arith.constant 0 : i32
    return %c0_i32, %c0_i32_0 : i32, i32
  }
  func.func @transform_8(%arg0: i32) -> (i32, i32) {
    %c0_i32 = arith.constant 0 : i32
    %c0_i32_0 = arith.constant 0 : i32
    %c0_i32_1 = arith.constant 0 : i32
    return %c0_i32, %c0_i32_0 : i32, i32
  }
  func.func @transform_9(%arg0: i32) -> (i32, i32) {
    %c0_i32 = arith.constant 0 : i32
    %c0_i32_0 = arith.constant 0 : i32
    %c0_i32_1 = arith.constant 0 : i32
    return %c0_i32, %c0_i32_0 : i32, i32
  }
  func.func @transform_10(%arg0: i32) -> (i32, i32) {
    %c0_i32 = arith.constant 0 : i32
    %c0_i32_0 = arith.constant 0 : i32
    %c0_i32_1 = arith.constant 0 : i32
    return %c0_i32, %c0_i32_0 : i32, i32
  }
  func.func @transform_11(%arg0: i32) -> (i32, i32) {
    %c0_i32 = arith.constant 0 : i32
    %c0_i32_0 = arith.constant 0 : i32
    %c0_i32_1 = arith.constant 0 : i32
    return %c0_i32, %c0_i32_0 : i32, i32
  }
  func.func @transform_12(%arg0: i32) -> (i32, i32) {
    %c0_i32 = arith.constant 0 : i32
    %c0_i32_0 = arith.constant 0 : i32
    return %c0_i32, %arg0 : i32, i32
  }
}

</mosaic_0001>

<llo_original>
// kernel: tpu_custom_call.1
$region0: #{tpu_custom_call.1}
  #allocation0 [shape = 'u32[]', space=smem, size = 0x4, offset = 0x4, fixed_abs, tag = 'smem constant byte address 0x4 - core index']
  #allocation1 [shape = 'u32[72,128]{1,0:T(1,128)}', space=vmem, size = 0x9000, scoped, tag = 'internal scratch']
  #allocation2 [shape = 'f32[64,256]{1,0:T(8,128)}', space=vmem, size = 0x10000, scoped, tag = 'scratch operand']
  #allocation3 [shape = 'f32[608,256]{1,0:T(8,128)}', space=vmem, size = 0x98000, scoped, tag = 'scratch operand']
  %s0 = inlined_call_operand.vmem [shape: f32[32,512], index: 0, kind: input, shape index: {}]
  %s1 = inlined_call_operand.vmem [shape: f32[2,64,1], index: 1, kind: input, shape index: {}]
  %s2 = inlined_call_operand.hbm [shape: f32[9,1,256], index: 2, kind: input, shape index: {}]
  %s3 = inlined_call_operand.vmem [shape: f32[32,1], index: 3, kind: input, shape index: {}]
  %s4 = inlined_call_operand.vmem [shape: f32[32,1], index: 4, kind: input, shape index: {}]
  %s5 = inlined_call_operand.hbm [shape: f32[32,32], index: 5, kind: input, shape index: {}]
  %s6 = inlined_call_operand.vmem [shape: f32[64,288], index: 6, kind: input, shape index: {}]
  %s7 = inlined_call_operand.vmem [shape: f32[64,1], index: 7, kind: input, shape index: {}]
  %s8 = inlined_call_operand.vmem [shape: f32[64,1], index: 8, kind: input, shape index: {}]
  %s9 = inlined_call_operand.vmem [shape: f32[64,64], index: 9, kind: input, shape index: {}]
  %s10 = inlined_call_operand.hbm [shape: f32[64,608], index: 10, kind: input, shape index: {}]
  %s11 = inlined_call_operand.vmem [shape: f32[64,1], index: 11, kind: input, shape index: {}]
  %s12 = inlined_call_operand.hbm [shape: f32[64,512], index: 12, kind: output, shape index: {}]
  %s13 = sld [smem:[#allocation0]]
  $region116: #{tpu_custom_call.1} parent=0
    _
  %s15 = ssub.s32 1, %s13
  %s16 = scalar_select 0, %s15, %s13
  $region1: #{tpu_custom_call.1} parent=0
    #allocation4 [shape = 'u8[65536]{0}', space=vmem, size = 0x10000, scoped, tag = 'input window, operand 0']
    #allocation5 [shape = 'u8[9216]{0}', space=vmem, size = 0x2400, scoped, tag = 'input window, operand 2, single buffered']
    #allocation6 [shape = 's32[2]{0}', space=sflag, size = 0x8, scoped, tag = 'scoped memory for tpu_custom_call.1']
    #allocation7 [shape = 's32[2]{0}', space=sflag, size = 0x8, scoped, tag = 'scoped memory for tpu_custom_call.1']
    #allocation8 [shape = 'u8[16384]{0}', space=vmem, size = 0x4000, scoped, tag = 'input window, operand 5, single buffered']
    #allocation9 [shape = 's32[1]{0}', space=sflag, size = 0x4, scoped, tag = 'scoped memory for tpu_custom_call.1']
    #allocation10 [shape = 'u8[163840]{0}', space=vmem, size = 0x28000, scoped, tag = 'input window, operand 10, single buffered']
    #allocation11 [shape = 'u8[131072]{0}', space=vmem, size = 0x20000, scoped, tag = 'output window, operand 0']
    %17 = vsyncpa [#allocation6], 0
    %18 = vsyncpa [#allocation9], 0
    %19 = vsyncpa [#allocation7], 0
    %s20 = scalar_lea.sflag [#allocation7], 1
    %21 = vsyncpa %s20, 0
    loop: start=0, step=1, limit=4
    $region2: #{tpu_custom_call.1} parent=1 // loop_pre_header
      _
    $region3: #{tpu_custom_call.1} parent=1 // loop_header
      %s23 = sphi 0, %s27
      %p24 = scmp.ge.s32.totalorder %s23, 4
      %s33 = sphi 0, %s35
      %s36 = sphi 0, %s33
      %s37 = sphi 0, %s36
      %s53 = sphi 0, %s37
      %s57 = sphi 0, %s57
      %s59 = sphi 0, %s57
      %s60 = sphi 0, %s59
      %s74 = sphi 0, %s60
      %s78 = sphi 0, %s78
      %s80 = sphi 0, %s78
      %s81 = sphi 0, %s80
      %s95 = sphi 0, %s81
      %s99 = sphi 0, %s99
      %s101 = sphi 0, %s99
      %s102 = sphi 0, %s101
      %s116 = sphi 0, %s102
      %s120 = sphi 0, %s120
      %s122 = sphi 0, %s120
      %s123 = sphi 0, %s122
      %s137 = sphi 0, %s123
      %s141 = sphi 0, %s141
      %s143 = sphi 0, %s141
      %s144 = sphi 0, %s143
      %s158 = sphi 0, %s144
      %s162 = sphi 0, %s162
      %s164 = sphi 0, %s162
      %s165 = sphi 0, %s164
      %s179 = sphi 0, %s165
      %s183 = sphi 0, %s183
      %s185 = sphi 0, %s183
      %s186 = sphi 0, %s185
      %s200 = sphi 0, %s186
      %s204 = sphi 0, %s204
      %s206 = sphi 0, %s204
      %s207 = sphi 0, %s206
      %s221 = sphi 0, %s207
      %s225 = sphi 0, %s225
      %s227 = sphi 0, %s225
      %s228 = sphi 0, %s227
      %s242 = sphi 0, %s228
      %s246 = sphi 0, %s246
      %s248 = sphi 0, %s246
      %s249 = sphi 0, %s248
      %s263 = sphi 0, %s249
      %s267 = sphi 0, %s267
      %s269 = sphi 0, %s267
      %s270 = sphi 0, %s269
      %s284 = sphi 0, %s270
      %s290 = sphi 0, %s292
      %s293 = sphi 0, %s290
      %s294 = sphi 0, %s293
      %s310 = sphi 0, %s294
    $region4: #{tpu_custom_call.1} parent=1 // loop_header_branch
      %26 = sbr.rel (%p24) target = $region8
    $region5: #{tpu_custom_call.1} parent=1 // loop_body
      %s28 = ssub.s32 %s23, 1
      %s29 = ssub.s32 %s23, 2
      %s30 = sadd.s32 %s23, 1
      %s31 = ssub.s32 %s23, %s30
      %p32 = scmp.eq.s32.totalorder %s31, 0
      %s34 = sadd.s32 %s33, 1
      %s35 = scalar_select %p32, %s33, %s34
      %p38 = pneg %p32
      %p39 = scmp.eq.s32.totalorder %s23, 1
      %p40 = por %p38, %p39
      %p41 = scmp.ne.s32.totalorder %s33, %s36
      %p42 = scmp.eq.s32.totalorder %s23, 0
      %p43 = por %p41, %p42
      %p44 = scmp.ne.s32.totalorder %s33, %s36
      %p45 = scmp.eq.s32.totalorder %s28, 1
      %p46 = por %p44, %p45
      %p47 = scmp.ne.s32.totalorder %s36, %s37
      %p48 = scmp.eq.s32.totalorder %s28, 0
      %p49 = por %p47, %p48
      %p50 = scmp.ne.s32.totalorder %s36, %s37
      %p51 = scmp.eq.s32.totalorder %s29, 1
      %p52 = por %p50, %p51
      %p54 = scmp.ne.s32.totalorder %s37, %s53
      %p55 = scmp.eq.s32.totalorder %s29, 0
      %p56 = por %p54, %p55
      %s58 = sadd.s32 %s57, 1
      %p61 = scmp.eq.s32.totalorder %s23, 1
      %p62 = scmp.ne.s32.totalorder %s57, %s59
      %p63 = scmp.eq.s32.totalorder %s23, 0
      %p64 = por %p62, %p63
      %p65 = scmp.ne.s32.totalorder %s57, %s59
      %p66 = scmp.eq.s32.totalorder %s28, 1
      %p67 = por %p65, %p66
      %p68 = scmp.ne.s32.totalorder %s59, %s60
      %p69 = scmp.eq.s32.totalorder %s28, 0
      %p70 = por %p68, %p69
      %p71 = scmp.ne.s32.totalorder %s59, %s60
      %p72 = scmp.eq.s32.totalorder %s29, 1
      %p73 = por %p71, %p72
      %p75 = scmp.ne.s32.totalorder %s60, %s74
      %p76 = scmp.eq.s32.totalorder %s29, 0
      %p77 = por %p75, %p76
      %s79 = sadd.s32 %s78, 1
      %p82 = scmp.eq.s32.totalorder %s23, 1
      %p83 = scmp.ne.s32.totalorder %s78, %s80
      %p84 = scmp.eq.s32.totalorder %s23, 0
      %p85 = por %p83, %p84
      %p86 = scmp.ne.s32.totalorder %s78, %s80
      %p87 = scmp.eq.s32.totalorder %s28, 1
      %p88 = por %p86, %p87
      %p89 = scmp.ne.s32.totalorder %s80, %s81
      %p90 = scmp.eq.s32.totalorder %s28, 0
      %p91 = por %p89, %p90
      %p92 = scmp.ne.s32.totalorder %s80, %s81
      %p93 = scmp.eq.s32.totalorder %s29, 1
      %p94 = por %p92, %p93
      %p96 = scmp.ne.s32.totalorder %s81, %s95
      %p97 = scmp.eq.s32.totalorder %s29, 0
      %p98 = por %p96, %p97
      %s100 = sadd.s32 %s99, 1
      %p103 = scmp.eq.s32.totalorder %s23, 1
      %p104 = scmp.ne.s32.totalorder %s99, %s101
      %p105 = scmp.eq.s32.totalorder %s23, 0
      %p106 = por %p104, %p105
      %p107 = scmp.ne.s32.totalorder %s99, %s101
      %p108 = scmp.eq.s32.totalorder %s28, 1
      %p109 = por %p107, %p108
      %p110 = scmp.ne.s32.totalorder %s101, %s102
      %p111 = scmp.eq.s32.totalorder %s28, 0
      %p112 = por %p110, %p111
      %p113 = scmp.ne.s32.totalorder %s101, %s102
      %p114 = scmp.eq.s32.totalorder %s29, 1
      %p115 = por %p113, %p114
      %p117 = scmp.ne.s32.totalorder %s102, %s116
      %p118 = scmp.eq.s32.totalorder %s29, 0
      %p119 = por %p117, %p118
      %s121 = sadd.s32 %s120, 1
      %p124 = scmp.eq.s32.totalorder %s23, 1
      %p125 = scmp.ne.s32.totalorder %s120, %s122
      %p126 = scmp.eq.s32.totalorder %s23, 0
      %p127 = por %p125, %p126
      %p128 = scmp.ne.s32.totalorder %s120, %s122
      %p129 = scmp.eq.s32.totalorder %s28, 1
      %p130 = por %p128, %p129
      %p131 = scmp.ne.s32.totalorder %s122, %s123
      %p132 = scmp.eq.s32.totalorder %s28, 0
      %p133 = por %p131, %p132
      %p134 = scmp.ne.s32.totalorder %s122, %s123
      %p135 = scmp.eq.s32.totalorder %s29, 1
      %p136 = por %p134, %p135
      %p138 = scmp.ne.s32.totalorder %s123, %s137
      %p139 = scmp.eq.s32.totalorder %s29, 0
      %p140 = por %p138, %p139
      %s142 = sadd.s32 %s141, 1
      %p145 = scmp.eq.s32.totalorder %s23, 1
      %p146 = scmp.ne.s32.totalorder %s141, %s143
      %p147 = scmp.eq.s32.totalorder %s23, 0
      %p148 = por %p146, %p147
      %p149 = scmp.ne.s32.totalorder %s141, %s143
      %p150 = scmp.eq.s32.totalorder %s28, 1
      %p151 = por %p149, %p150
      %p152 = scmp.ne.s32.totalorder %s143, %s144
      %p153 = scmp.eq.s32.totalorder %s28, 0
      %p154 = por %p152, %p153
      %p155 = scmp.ne.s32.totalorder %s143, %s144
      %p156 = scmp.eq.s32.totalorder %s29, 1
      %p157 = por %p155, %p156
      %p159 = scmp.ne.s32.totalorder %s144, %s158
      %p160 = scmp.eq.s32.totalorder %s29, 0
      %p161 = por %p159, %p160
      %s163 = sadd.s32 %s162, 1
      %p166 = scmp.eq.s32.totalorder %s23, 1
      %p167 = scmp.ne.s32.totalorder %s162, %s164
      %p168 = scmp.eq.s32.totalorder %s23, 0
      %p169 = por %p167, %p168
      %p170 = scmp.ne.s32.totalorder %s162, %s164
      %p171 = scmp.eq.s32.totalorder %s28, 1
      %p172 = por %p170, %p171
      %p173 = scmp.ne.s32.totalorder %s164, %s165
      %p174 = scmp.eq.s32.totalorder %s28, 0
      %p175 = por %p173, %p174
      %p176 = scmp.ne.s32.totalorder %s164, %s165
      %p177 = scmp.eq.s32.totalorder %s29, 1
      %p178 = por %p176, %p177
      %p180 = scmp.ne.s32.totalorder %s165, %s179
      %p181 = scmp.eq.s32.totalorder %s29, 0
      %p182 = por %p180, %p181
      %s184 = sadd.s32 %s183, 1
      %p187 = scmp.eq.s32.totalorder %s23, 1
      %p188 = scmp.ne.s32.totalorder %s183, %s185
      %p189 = scmp.eq.s32.totalorder %s23, 0
      %p190 = por %p188, %p189
      %p191 = scmp.ne.s32.totalorder %s183, %s185
      %p192 = scmp.eq.s32.totalorder %s28, 1
      %p193 = por %p191, %p192
      %p194 = scmp.ne.s32.totalorder %s185, %s186
      %p195 = scmp.eq.s32.totalorder %s28, 0
      %p196 = por %p194, %p195
      %p197 = scmp.ne.s32.totalorder %s185, %s186
      %p198 = scmp.eq.s32.totalorder %s29, 1
      %p199 = por %p197, %p198
      %p201 = scmp.ne.s32.totalorder %s186, %s200
      %p202 = scmp.eq.s32.totalorder %s29, 0
      %p203 = por %p201, %p202
      %s205 = sadd.s32 %s204, 1
      %p208 = scmp.eq.s32.totalorder %s23, 1
      %p209 = scmp.ne.s32.totalorder %s204, %s206
      %p210 = scmp.eq.s32.totalorder %s23, 0
      %p211 = por %p209, %p210
      %p212 = scmp.ne.s32.totalorder %s204, %s206
      %p213 = scmp.eq.s32.totalorder %s28, 1
      %p214 = por %p212, %p213
      %p215 = scmp.ne.s32.totalorder %s206, %s207
      %p216 = scmp.eq.s32.totalorder %s28, 0
      %p217 = por %p215, %p216
      %p218 = scmp.ne.s32.totalorder %s206, %s207
      %p219 = scmp.eq.s32.totalorder %s29, 1
      %p220 = por %p218, %p219
      %p222 = scmp.ne.s32.totalorder %s207, %s221
      %p223 = scmp.eq.s32.totalorder %s29, 0
      %p224 = por %p222, %p223
      %s226 = sadd.s32 %s225, 1
      %p229 = scmp.eq.s32.totalorder %s23, 1
      %p230 = scmp.ne.s32.totalorder %s225, %s227
      %p231 = scmp.eq.s32.totalorder %s23, 0
      %p232 = por %p230, %p231
      %p233 = scmp.ne.s32.totalorder %s225, %s227
      %p234 = scmp.eq.s32.totalorder %s28, 1
      %p235 = por %p233, %p234
      %p236 = scmp.ne.s32.totalorder %s227, %s228
      %p237 = scmp.eq.s32.totalorder %s28, 0
      %p238 = por %p236, %p237
      %p239 = scmp.ne.s32.totalorder %s227, %s228
      %p240 = scmp.eq.s32.totalorder %s29, 1
      %p241 = por %p239, %p240
      %p243 = scmp.ne.s32.totalorder %s228, %s242
      %p244 = scmp.eq.s32.totalorder %s29, 0
      %p245 = por %p243, %p244
      %s247 = sadd.s32 %s246, 1
      %p250 = scmp.eq.s32.totalorder %s23, 1
      %p251 = scmp.ne.s32.totalorder %s246, %s248
      %p252 = scmp.eq.s32.totalorder %s23, 0
      %p253 = por %p251, %p252
      %p254 = scmp.ne.s32.totalorder %s246, %s248
      %p255 = scmp.eq.s32.totalorder %s28, 1
      %p256 = por %p254, %p255
      %p257 = scmp.ne.s32.totalorder %s248, %s249
      %p258 = scmp.eq.s32.totalorder %s28, 0
      %p259 = por %p257, %p258
      %p260 = scmp.ne.s32.totalorder %s248, %s249
      %p261 = scmp.eq.s32.totalorder %s29, 1
      %p262 = por %p260, %p261
      %p264 = scmp.ne.s32.totalorder %s249, %s263
      %p265 = scmp.eq.s32.totalorder %s29, 0
      %p266 = por %p264, %p265
      %s268 = sadd.s32 %s267, 1
      %p271 = scmp.eq.s32.totalorder %s23, 1
      %p272 = scmp.ne.s32.totalorder %s267, %s269
      %p273 = scmp.eq.s32.totalorder %s23, 0
      %p274 = por %p272, %p273
      %p275 = scmp.ne.s32.totalorder %s267, %s269
      %p276 = scmp.eq.s32.totalorder %s28, 1
      %p277 = por %p275, %p276
      %p278 = scmp.ne.s32.totalorder %s269, %s270
      %p279 = scmp.eq.s32.totalorder %s28, 0
      %p280 = por %p278, %p279
      %p281 = scmp.ne.s32.totalorder %s269, %s270
      %p282 = scmp.eq.s32.totalorder %s29, 1
      %p283 = por %p281, %p282
      %p285 = scmp.ne.s32.totalorder %s270, %s284
      %p286 = scmp.eq.s32.totalorder %s29, 0
      %p287 = por %p285, %p286
      %s288 = ssub.s32 %s23, %s30
      %p289 = scmp.eq.s32.totalorder %s288, 0
      %s291 = sadd.s32 %s290, 1
      %s292 = scalar_select %p289, %s290, %s291
      %p295 = pneg %p289
      %p296 = scmp.eq.s32.totalorder %s23, 1
      %p297 = por %p295, %p296
      %p298 = scmp.ne.s32.totalorder %s290, %s293
      %p299 = scmp.eq.s32.totalorder %s23, 0
      %p300 = por %p298, %p299
      %p301 = scmp.ne.s32.totalorder %s290, %s293
      %p302 = scmp.eq.s32.totalorder %s28, 1
      %p303 = por %p301, %p302
      %p304 = scmp.ne.s32.totalorder %s293, %s294
      %p305 = scmp.eq.s32.totalorder %s28, 0
      %p306 = por %p304, %p305
      %p307 = scmp.ne.s32.totalorder %s293, %s294
      %p308 = scmp.eq.s32.totalorder %s29, 1
      %p309 = por %p307, %p308
      %p311 = scmp.ne.s32.totalorder %s294, %s310
      %p312 = scmp.eq.s32.totalorder %s29, 0
      %p313 = por %p311, %p312
      %p314 = scmp.le.s32.totalorder 1, %s23
      %p315 = scmp.lt.s32.totalorder %s23, 3
      %p316 = pnand %p314, %p315
      %p317 = pneg %p316
      // Predicated region
      $region9: #{tpu_custom_call.1} parent=5 // pred_check
        _
      $region10: #{tpu_custom_call.1} parent=5 // pred_check_branch
        %319 = sbr.rel (%p316) target = $region12
      $region11: #{tpu_custom_call.1} parent=5 // pred_region
        %s320 = ssub.s32 %s23, 1
        // Predicated region
        $region13: #{tpu_custom_call.1} parent=11 // pred_check
          %p321 = pneg %p70
        $region14: #{tpu_custom_call.1} parent=11 // pred_check_branch
          %323 = sbr.rel (%p321) target = $region16
        $region15: #{tpu_custom_call.1} parent=11 // pred_region
          _
        $region16: #{tpu_custom_call.1} parent=11 // pred_fallthru
          _
        // Predicated region
        $region17: #{tpu_custom_call.1} parent=11 // pred_check
          %p324 = pneg %p91
        $region18: #{tpu_custom_call.1} parent=11 // pred_check_branch
          %326 = sbr.rel (%p324) target = $region20
        $region19: #{tpu_custom_call.1} parent=11 // pred_region
          %328 = vsyncadd [#allocation6], 0
          %s329 = sshll.u32 %s2, 4
          %s330 = int_to_ptr.hbm [resolvable:$true] %s329
          %s331 = sshll.u32 [#allocation5], 4
          %s332 = int_to_ptr.vmem [resolvable:$true] %s331
          %337 = dma.hbm_to_vmem [thread:$0]  %s330, 288, %s332, [#allocation6], 32, 32, 2
        $region20: #{tpu_custom_call.1} parent=11 // pred_fallthru
          _
        // Predicated region
        $region21: #{tpu_custom_call.1} parent=11 // pred_check
          %p338 = pneg %p112
        $region22: #{tpu_custom_call.1} parent=11 // pred_check_branch
          %340 = sbr.rel (%p338) target = $region24
        $region23: #{tpu_custom_call.1} parent=11 // pred_region
          _
        $region24: #{tpu_custom_call.1} parent=11 // pred_fallthru
          _
        // Predicated region
        $region25: #{tpu_custom_call.1} parent=11 // pred_check
          %p341 = pneg %p133
        $region26: #{tpu_custom_call.1} parent=11 // pred_check_branch
          %343 = sbr.rel (%p341) target = $region28
        $region27: #{tpu_custom_call.1} parent=11 // pred_region
          _
        $region28: #{tpu_custom_call.1} parent=11 // pred_fallthru
          _
        // Predicated region
        $region29: #{tpu_custom_call.1} parent=11 // pred_check
          %p344 = pneg %p154
        $region30: #{tpu_custom_call.1} parent=11 // pred_check_branch
          %346 = sbr.rel (%p344) target = $region32
        $region31: #{tpu_custom_call.1} parent=11 // pred_region
          %348 = vsyncadd [#allocation9], 0
          %s349 = sshll.u32 %s5, 4
          %s350 = int_to_ptr.hbm [resolvable:$true] %s349
          %s351 = sshll.u32 [#allocation8], 4
          %s352 = int_to_ptr.vmem [resolvable:$true] %s351
          %357 = dma.hbm_to_vmem [thread:$0]  %s350, 512, %s352, [#allocation9], 128, 128, 8
        $region32: #{tpu_custom_call.1} parent=11 // pred_fallthru
          _
        // Predicated region
        $region33: #{tpu_custom_call.1} parent=11 // pred_check
          %p358 = pneg %p175
        $region34: #{tpu_custom_call.1} parent=11 // pred_check_branch
          %360 = sbr.rel (%p358) target = $region36
        $region35: #{tpu_custom_call.1} parent=11 // pred_region
          _
        $region36: #{tpu_custom_call.1} parent=11 // pred_fallthru
          _
        // Predicated region
        $region37: #{tpu_custom_call.1} parent=11 // pred_check
          %p361 = pneg %p196
        $region38: #{tpu_custom_call.1} parent=11 // pred_check_branch
          %363 = sbr.rel (%p361) target = $region40
        $region39: #{tpu_custom_call.1} parent=11 // pred_region
          _
        $region40: #{tpu_custom_call.1} parent=11 // pred_fallthru
          _
        // Predicated region
        $region41: #{tpu_custom_call.1} parent=11 // pred_check
          %p364 = pneg %p217
        $region42: #{tpu_custom_call.1} parent=11 // pred_check_branch
          %366 = sbr.rel (%p364) target = $region44
        $region43: #{tpu_custom_call.1} parent=11 // pred_region
          _
        $region44: #{tpu_custom_call.1} parent=11 // pred_fallthru
          _
        // Predicated region
        $region45: #{tpu_custom_call.1} parent=11 // pred_check
          %p367 = pneg %p238
        $region46: #{tpu_custom_call.1} parent=11 // pred_check_branch
          %369 = sbr.rel (%p367) target = $region48
        $region47: #{tpu_custom_call.1} parent=11 // pred_region
          _
        $region48: #{tpu_custom_call.1} parent=11 // pred_fallthru
          _
        // Predicated region
        $region49: #{tpu_custom_call.1} parent=11 // pred_check
          %p370 = pneg %p259
        $region50: #{tpu_custom_call.1} parent=11 // pred_check_branch
          %372 = sbr.rel (%p370) target = $region52
        $region51: #{tpu_custom_call.1} parent=11 // pred_region
          %374 = vsyncadd [#allocation9], 0
          %s375 = sshll.u32 %s10, 4
          %s376 = int_to_ptr.hbm [resolvable:$true] %s375
          %s377 = sshll.u32 [#allocation10], 4
          %s378 = int_to_ptr.vmem [resolvable:$true] %s377
          %383 = dma.hbm_to_vmem [thread:$0]  %s376, 5120, %s378, [#allocation9], 640, 640, 40
        $region52: #{tpu_custom_call.1} parent=11 // pred_fallthru
          _
        // Predicated region
        $region53: #{tpu_custom_call.1} parent=11 // pred_check
          %p384 = pneg %p280
        $region54: #{tpu_custom_call.1} parent=11 // pred_check_branch
          %386 = sbr.rel (%p384) target = $region56
        $region55: #{tpu_custom_call.1} parent=11 // pred_region
          _
        $region56: #{tpu_custom_call.1} parent=11 // pred_fallthru
          _
      $region12: #{tpu_custom_call.1} parent=5 // pred_fallthru
        _
      %p387 = scmp.lt.s32.totalorder %s23, 2
      // Predicated region
      $region57: #{tpu_custom_call.1} parent=5 // pred_check
        %p388 = pneg %p387
      $region58: #{tpu_custom_call.1} parent=5 // pred_check_branch
        %390 = sbr.rel (%p388) target = $region60
      $region59: #{tpu_custom_call.1} parent=5 // pred_region
        // Predicated region
        $region61: #{tpu_custom_call.1} parent=59 // pred_check
          %p391 = pneg %p43
        $region62: #{tpu_custom_call.1} parent=59 // pred_check_branch
          %393 = sbr.rel (%p391) target = $region64
        $region63: #{tpu_custom_call.1} parent=59 // pred_region
          %s394 = sand.u32 %s33, 1
          %s395 = sand.u32 %s33, 1
          %s396 = smul.addr %s395, 64
          %s397 = scalar_lea.vmem [#allocation4], %s396
          %s398 = smul.u32 2, %s23
          %s399 = smul.addr %s398, 8
          %s400 = scalar_lea.vmem %s0, %s399
          // Predicated region
          $region65: #{tpu_custom_call.1} parent=63 // pred_check
            _
          $region66: #{tpu_custom_call.1} parent=63 // pred_check_branch
            %402 = sbr.rel (0) target = $region68
          $region67: #{tpu_custom_call.1} parent=63 // pred_region
            // Predicated region
            $region69: #{tpu_custom_call.1} parent=67 // pred_check
              _
            $region70: #{tpu_custom_call.1} parent=67 // pred_check_branch
              %404 = sbr.rel (0) target = $region72
            $region71: #{tpu_custom_call.1} parent=67 // pred_region
              loop: start=0, step=1, limit=1
              $region73: #{tpu_custom_call.1} parent=71 // loop_pre_header
                _
              $region74: #{tpu_custom_call.1} parent=71 // loop_header
                %s406 = sphi 0, %s410
                %p407 = scmp.ge.s32.totalorder %s406, 1
                %s411 = sphi %s400, %s400
                %s412 = sphi %s397, %s397
              $region75: #{tpu_custom_call.1} parent=71 // loop_header_branch
                %409 = sbr.rel (%p407) target = $region79
              $region76: #{tpu_custom_call.1} parent=71 // loop_body
                %v413 = vld [vmem:[%s411] sm:$0xff]
                %414 = vst [vmem:[%s412] sm:$0xff] %v413
                %v415 = vld [vmem:[%s411 + $0x8] sm:$0xff]
                %416 = vst [vmem:[%s412 + $0x8] sm:$0xff] %v415
                %v417 = vld [vmem:[%s411 + $0x20] sm:$0xff]
                %418 = vst [vmem:[%s412 + $0x10] sm:$0xff] %v417
                %v419 = vld [vmem:[%s411 + $0x28] sm:$0xff]
                %420 = vst [vmem:[%s412 + $0x18] sm:$0xff] %v419
                %v421 = vld [vmem:[%s411 + $0x40] sm:$0xff]
                %422 = vst [vmem:[%s412 + $0x20] sm:$0xff] %v421
                %v423 = vld [vmem:[%s411 + $0x48] sm:$0xff]
                %424 = vst [vmem:[%s412 + $0x28] sm:$0xff] %v423
                %v425 = vld [vmem:[%s411 + $0x60] sm:$0xff]
                %426 = vst [vmem:[%s412 + $0x30] sm:$0xff] %v425
                %v427 = vld [vmem:[%s411 + $0x68] sm:$0xff]
                %428 = vst [vmem:[%s412 + $0x38] sm:$0xff] %v427
              $region77: #{tpu_custom_call.1} parent=71 // loop_footer
                %s410 = sadd.s32 1, %s406
              $region78: #{tpu_custom_call.1} parent=71 // loop_footer_branch
                %405 = sbr.rel target = $region74
              $region79: #{tpu_custom_call.1} parent=71 // loop_exit
                _
            $region72: #{tpu_custom_call.1} parent=67 // pred_fallthru
              _
            // Predicated region
            $region80: #{tpu_custom_call.1} parent=67 // pred_check
              _
            $region81: #{tpu_custom_call.1} parent=67 // pred_check_branch
              %430 = sbr.rel target = $region83
            $region82: #{tpu_custom_call.1} parent=67 // pred_region
              _
            $region83: #{tpu_custom_call.1} parent=67 // pred_fallthru
              _
          $region68: #{tpu_custom_call.1} parent=63 // pred_fallthru
            _
          %431 = vnop
        $region64: #{tpu_custom_call.1} parent=59 // pred_fallthru
          _
      $region60: #{tpu_custom_call.1} parent=5 // pred_fallthru
        _
      %p432 = scmp.le.s32.totalorder 1, %s23
      %p433 = scmp.lt.s32.totalorder %s23, 3
      %p434 = pnand %p432, %p433
      %p435 = pneg %p434
      // Predicated region
      $region84: #{tpu_custom_call.1} parent=5 // pred_check
        _
      $region85: #{tpu_custom_call.1} parent=5 // pred_check_branch
        %437 = sbr.rel (%p434) target = $region87
      $region86: #{tpu_custom_call.1} parent=5 // pred_region
        %s438 = ssub.s32 %s23, 1
        %s439 = sand.u32 %s36, 1
        %s440 = sand.u32 %s36, 1
        %s441 = smul.addr %s440, 64
        %s442 = scalar_lea.vmem [#allocation4], %s441
        // Predicated region
        $region88: #{tpu_custom_call.1} parent=86 // pred_check
          %p443 = pneg %p49
        $region89: #{tpu_custom_call.1} parent=86 // pred_check_branch
          %445 = sbr.rel (%p443) target = $region91
        $region90: #{tpu_custom_call.1} parent=86 // pred_region
          _
        $region91: #{tpu_custom_call.1} parent=86 // pred_fallthru
          _
        // Predicated region
        $region92: #{tpu_custom_call.1} parent=86 // pred_check
          %p446 = pneg %p91
        $region93: #{tpu_custom_call.1} parent=86 // pred_check_branch
          %448 = sbr.rel (%p446) target = $region95
        $region94: #{tpu_custom_call.1} parent=86 // pred_region
          %450 = dma.done [#allocation6], 288
        $region95: #{tpu_custom_call.1} parent=86 // pred_fallthru
          _
        // Predicated region
        $region96: #{tpu_custom_call.1} parent=86 // pred_check
          %p451 = pneg %p154
        $region97: #{tpu_custom_call.1} parent=86 // pred_check_branch
          %453 = sbr.rel (%p451) target = $region99
        $region98: #{tpu_custom_call.1} parent=86 // pred_region
          %455 = dma.done [#allocation9], 512
        $region99: #{tpu_custom_call.1} parent=86 // pred_fallthru
          _
        // Predicated region
        $region100: #{tpu_custom_call.1} parent=86 // pred_check
          %p456 = pneg %p259
        $region101: #{tpu_custom_call.1} parent=86 // pred_check_branch
          %458 = sbr.rel (%p456) target = $region103
        $region102: #{tpu_custom_call.1} parent=86 // pred_region
          %460 = dma.done [#allocation9], 5120
        $region103: #{tpu_custom_call.1} parent=86 // pred_fallthru
          _
        %s461 = sand.u32 %s36, 1
        %s462 = sand.u32 %s36, 1
        %s463 = smul.addr %s462, 64
        %s464 = scalar_lea.vmem [#allocation4], %s463
        %p465 = pneg %p49
        %p466 = pneg %p46
        %p467 = pneg %p70
        %p468 = pneg %p67
        %p469 = pneg %p91
        %p470 = pneg %p88
        %p471 = pneg %p112
        %p472 = pneg %p109
        %p473 = pneg %p133
        %p474 = pneg %p130
        %p475 = pneg %p154
        %p476 = pneg %p151
        %p477 = pneg %p175
        %p478 = pneg %p172
        %p479 = pneg %p196
        %p480 = pneg %p193
        %p481 = pneg %p217
        %p482 = pneg %p214
        %p483 = pneg %p238
        %p484 = pneg %p235
        %p485 = pneg %p259
        %p486 = pneg %p256
        %p487 = pneg %p280
        %p488 = pneg %p277
        %p489 = pneg %p306
        %p490 = pneg %p303
        %s491 = sand.u32 %s293, 1
        %s492 = scalar_lea.sflag [#allocation7], %s491
        %s493 = sand.u32 %s293, 1
        %s494 = smul.addr %s493, 128
        %s495 = scalar_lea.vmem [#allocation11], %s494
        %s496 = smul.u32 2, %s28
        %s497 = smul.u32 2, %s28
        %v498 = vld [vmem:[%s442] sm:$0xff]
        %v499 = vld [vmem:[%s442 + $0x8] sm:$0xff]
        %v500 = vld [vmem:[%s442 + $0x10] sm:$0xff]
        %v501 = vld [vmem:[%s442 + $0x18] sm:$0xff]
        %v502 = vld [vmem:[%s442 + $0x20] sm:$0xff]
        %v503 = vld [vmem:[%s442 + $0x28] sm:$0xff]
        %v504 = vld [vmem:[%s442 + $0x30] sm:$0xff]
        %v505 = vld [vmem:[%s442 + $0x38] sm:$0xff]
        %v506 = vld [vmem:[#allocation8] sm:$0xff]
        %v507 = vld [vmem:[#allocation8 + $0x8] sm:$0xff]
        %v508 = vld [vmem:[#allocation8 + $0x10] sm:$0xff]
        %v509 = vld [vmem:[#allocation8 + $0x18] sm:$0xff]
        %v510 = vld [vmem:[%s3] sm:$0xff]
        %v511 = vld [vmem:[%s3 + $0x8] sm:$0xff]
        %v512 = vld [vmem:[%s3 + $0x10] sm:$0xff]
        %v513 = vld [vmem:[%s3 + $0x18] sm:$0xff]
        %v514 = vld [vmem:[%s4] sm:$0xff]
        %v515 = vld [vmem:[%s4 + $0x8] sm:$0xff]
        %v516 = vld [vmem:[%s4 + $0x10] sm:$0xff]
        %v517 = vld [vmem:[%s4 + $0x18] sm:$0xff]
        %v518 = vadd.f32 %v498, %v499
        %519 = vadd.xlane.f32.xlu0 %v518
        %v520 = vpop.xlane.xlu0 %519
        %v521 = vadd.f32 %v500, %v501
        %522 = vadd.xlane.f32.xlu0 %v521
        %v523 = vpop.xlane.xlu0 %522
        %v524 = vadd.f32 %v502, %v503
        %525 = vadd.xlane.f32.xlu0 %v524
        %v526 = vpop.xlane.xlu0 %525
        %v527 = vadd.f32 %v504, %v505
        %528 = vadd.xlane.f32.xlu0 %v527
        %v529 = vpop.xlane.xlu0 %528
        %v530 = vmul.f32 %v498, %v498
        %v531 = vmul.f32 %v499, %v499
        %v532 = vmul.f32 %v500, %v500
        %v533 = vmul.f32 %v501, %v501
        %v534 = vmul.f32 %v502, %v502
        %v535 = vmul.f32 %v503, %v503
        %v536 = vmul.f32 %v504, %v504
        %v537 = vmul.f32 %v505, %v505
        %v538 = vadd.f32 %v530, %v531
        %539 = vadd.xlane.f32.xlu0 %v538
        %v540 = vpop.xlane.xlu0 %539
        %v541 = vadd.f32 %v532, %v533
        %542 = vadd.xlane.f32.xlu0 %v541
        %v543 = vpop.xlane.xlu0 %542
        %v544 = vadd.f32 %v534, %v535
        %545 = vadd.xlane.f32.xlu0 %v544
        %v546 = vpop.xlane.xlu0 %545
        %v547 = vadd.f32 %v536, %v537
        %548 = vadd.xlane.f32.xlu0 %v547
        %v549 = vpop.xlane.xlu0 %548
        %vm550 = vcmask 261120
        %v552 = vsel %vm550, %v506, 0
        %v555 = vsel %vm550, %v507, 0
        %v558 = vsel %vm550, %v508, 0
        %v561 = vsel %vm550, %v509, 0
        %563 = vmatpush.msra.mxu0 0.0
        %564 = vmatpush.msra.mxu0 0.0
        %565 = vmatpush.msra.mxu0 0.0
        %566 = vmatpush.msra.mxu0 0.0
        %567 = vmatpush.msra.mxu0 0.0
        %568 = vmatpush.msra.mxu0 0.0
        %569 = vmatpush.msra.mxu0 0.0
        %570 = vmatpush.msra.mxu0 0.0
        %571 = vmatpush.msra.mxu0 0.0
        %572 = vmatpush.msra.mxu0 0.0
        %573 = vmatpush.msra.mxu0 0.0
        %574 = vmatpush.msra.mxu0 0.0
        %575 = vmatpush.msra.mxu0 %v529
        %576 = vmatpush.msra.mxu0 %v526
        %577 = vmatpush.msra.mxu0 %v523
        %578 = vmatpush.msra.mxu0 %v520
        %579 = vmatmul.f32.gmra.mxu0 %v552
        %v580 = vpop.f32.mrf.mxu0
        %v581 = vadd.f32 0.0, %v580
        %582 = vmatmul.f32.gmra.mxu0 %v555
        %v583 = vpop.f32.mrf.mxu0
        %v584 = vadd.f32 0.0, %v583
        %585 = vmatmul.f32.gmra.mxu0 %v558
        %v586 = vpop.f32.mrf.mxu0
        %v587 = vadd.f32 0.0, %v586
        %588 = vmatmul.f32.gmra.mxu0 %v561
        %v589 = vpop.f32.mrf.mxu0
        %v590 = vadd.f32 0.0, %v589
        %591 = vdwg.mxu0
        %592 = vmatpush.msra.mxu0 0.0
        %593 = vmatpush.msra.mxu0 0.0
        %594 = vmatpush.msra.mxu0 0.0
        %595 = vmatpush.msra.mxu0 0.0
        %596 = vmatpush.msra.mxu0 0.0
        %597 = vmatpush.msra.mxu0 0.0
        %598 = vmatpush.msra.mxu0 0.0
        %599 = vmatpush.msra.mxu0 0.0
        %600 = vmatpush.msra.mxu0 0.0
        %601 = vmatpush.msra.mxu0 0.0
        %602 = vmatpush.msra.mxu0 0.0
        %603 = vmatpush.msra.mxu0 0.0
        %604 = vmatpush.msra.mxu0 %v549
        %605 = vmatpush.msra.mxu0 %v546
        %606 = vmatpush.msra.mxu0 %v543
        %607 = vmatpush.msra.mxu0 %v540
        %608 = vmatmul.f32.gmra.mxu0 %v552
        %v609 = vpop.f32.mrf.mxu0
        %v610 = vadd.f32 0.0, %v609
        %611 = vmatmul.f32.gmra.mxu0 %v555
        %v612 = vpop.f32.mrf.mxu0
        %v613 = vadd.f32 0.0, %v612
        %614 = vmatmul.f32.gmra.mxu0 %v558
        %v615 = vpop.f32.mrf.mxu0
        %v616 = vadd.f32 0.0, %v615
        %617 = vmatmul.f32.gmra.mxu0 %v561
        %v618 = vpop.f32.mrf.mxu0
        %v619 = vadd.f32 0.0, %v618
        %620 = vdwg.mxu0
        %v621 = vmul.f32 %v581, %v581
        %v622 = vmul.f32 %v584, %v584
        %v623 = vmul.f32 %v587, %v587
        %v624 = vmul.f32 %v590, %v590
        %v625 = vsub.f32 %v610, %v621
        %v626 = vsub.f32 %v613, %v622
        %v627 = vsub.f32 %v616, %v623
        %v628 = vsub.f32 %v619, %v624
        %v629 = vmax.f32 %v625, 0.0
        %v630 = vmax.f32 %v626, 0.0
        %v631 = vmax.f32 %v627, 0.0
        %v632 = vmax.f32 %v628, 0.0
        %v633 = vadd.f32 %v629, 1e-05
        %v634 = vadd.f32 %v630, 1e-05
        %v635 = vadd.f32 %v631, 1e-05
        %v636 = vadd.f32 %v632, 1e-05
        %v637 = vrsqrt.pop %v633
        %v638 = vmul.f32 %v637, %v633
        %v639 = vmul.f32 %v638, %v637
        %v640 = vmul.f32 0.5, %v639
        %v641 = vsub.f32 1.5, %v640
        %v642 = vmul.f32 %v637, %v641
        %vm643 = vweird.f32 %v633
        %vm644 = vweird.f32 %v637
        %vm645 = vmor %vm643, %vm644
        %v646 = vsel %vm645, %v637, %v642
        %v647 = vrsqrt.pop %v634
        %v648 = vmul.f32 %v647, %v634
        %v649 = vmul.f32 %v648, %v647
        %v650 = vmul.f32 0.5, %v649
        %v651 = vsub.f32 1.5, %v650
        %v652 = vmul.f32 %v647, %v651
        %vm653 = vweird.f32 %v634
        %vm654 = vweird.f32 %v647
        %vm655 = vmor %vm653, %vm654
        %v656 = vsel %vm655, %v647, %v652
        %v657 = vrsqrt.pop %v635
        %v658 = vmul.f32 %v657, %v635
        %v659 = vmul.f32 %v658, %v657
        %v660 = vmul.f32 0.5, %v659
        %v661 = vsub.f32 1.5, %v660
        %v662 = vmul.f32 %v657, %v661
        %vm663 = vweird.f32 %v635
        %vm664 = vweird.f32 %v657
        %vm665 = vmor %vm663, %vm664
        %v666 = vsel %vm665, %v657, %v662
        %v667 = vrsqrt.pop %v636
        %v668 = vmul.f32 %v667, %v636
        %v669 = vmul.f32 %v668, %v667
        %v670 = vmul.f32 0.5, %v669
        %v671 = vsub.f32 1.5, %v670
        %v672 = vmul.f32 %v667, %v671
        %vm673 = vweird.f32 %v636
        %vm674 = vweird.f32 %v667
        %vm675 = vmor %vm673, %vm674
        %v676 = vsel %vm675, %v667, %v672
        %678 = vset.pattern.permute.xlu0 0
        %679 = vperm.xlu0 %678, %v581
        %v680 = vpop.permute.xlu0 %679
        %683 = vset.pattern.permute.xlu0 0
        %684 = vperm.xlu0 %683, %v584
        %v685 = vpop.permute.xlu0 %684
        %688 = vset.pattern.permute.xlu0 0
        %689 = vperm.xlu0 %688, %v587
        %v690 = vpop.permute.xlu0 %689
        %693 = vset.pattern.permute.xlu0 0
        %694 = vperm.xlu0 %693, %v590
        %v695 = vpop.permute.xlu0 %694
        %v697 = vsub.f32 %v498, %v680
        %v698 = vsub.f32 %v499, %v680
        %v699 = vsub.f32 %v500, %v685
        %v700 = vsub.f32 %v501, %v685
        %v701 = vsub.f32 %v502, %v690
        %v702 = vsub.f32 %v503, %v690
        %v703 = vsub.f32 %v504, %v695
        %v704 = vsub.f32 %v505, %v695
        %706 = vset.pattern.permute.xlu0 0
        %707 = vperm.xlu0 %706, %v646
        %v708 = vpop.permute.xlu0 %707
        %711 = vset.pattern.permute.xlu0 0
        %712 = vperm.xlu0 %711, %v656
        %v713 = vpop.permute.xlu0 %712
        %716 = vset.pattern.permute.xlu0 0
        %717 = vperm.xlu0 %716, %v666
        %v718 = vpop.permute.xlu0 %717
        %721 = vset.pattern.permute.xlu0 0
        %722 = vperm.xlu0 %721, %v676
        %v723 = vpop.permute.xlu0 %722
        %v725 = vmul.f32 %v697, %v708
        %v726 = vmul.f32 %v698, %v708
        %v727 = vmul.f32 %v699, %v713
        %v728 = vmul.f32 %v700, %v713
        %v729 = vmul.f32 %v701, %v718
        %v730 = vmul.f32 %v702, %v718
        %v731 = vmul.f32 %v703, %v723
        %v732 = vmul.f32 %v704, %v723
        %734 = vset.pattern.permute.xlu0 0
        %735 = vperm.xlu0 %734, %v510
        %v736 = vpop.permute.xlu0 %735
        %739 = vset.pattern.permute.xlu0 0
        %740 = vperm.xlu0 %739, %v511
        %v741 = vpop.permute.xlu0 %740
        %744 = vset.pattern.permute.xlu0 0
        %745 = vperm.xlu0 %744, %v512
        %v746 = vpop.permute.xlu0 %745
        %749 = vset.pattern.permute.xlu0 0
        %750 = vperm.xlu0 %749, %v513
        %v751 = vpop.permute.xlu0 %750
        %v753 = vmul.f32 %v725, %v736
        %v754 = vmul.f32 %v726, %v736
        %v755 = vmul.f32 %v727, %v741
        %v756 = vmul.f32 %v728, %v741
        %v757 = vmul.f32 %v729, %v746
        %v758 = vmul.f32 %v730, %v746
        %v759 = vmul.f32 %v731, %v751
        %v760 = vmul.f32 %v732, %v751
        %762 = vset.pattern.permute.xlu0 0
        %763 = vperm.xlu0 %762, %v514
        %v764 = vpop.permute.xlu0 %763
        %767 = vset.pattern.permute.xlu0 0
        %768 = vperm.xlu0 %767, %v515
        %v769 = vpop.permute.xlu0 %768
        %772 = vset.pattern.permute.xlu0 0
        %773 = vperm.xlu0 %772, %v516
        %v774 = vpop.permute.xlu0 %773
        %777 = vset.pattern.permute.xlu0 0
        %778 = vperm.xlu0 %777, %v517
        %v779 = vpop.permute.xlu0 %778
        %v781 = vadd.f32 %v753, %v764
        %v782 = vadd.f32 %v754, %v764
        %v783 = vadd.f32 %v755, %v769
        %v784 = vadd.f32 %v756, %v769
        %v785 = vadd.f32 %v757, %v774
        %v786 = vadd.f32 %v758, %v774
        %v787 = vadd.f32 %v759, %v779
        %v788 = vadd.f32 %v760, %v779
        %v789 = vsub.f32 0.0, %v781
        %v790 = vsub.f32 0.0, %v782
        %v791 = vsub.f32 0.0, %v783
        %v792 = vsub.f32 0.0, %v784
        %v793 = vsub.f32 0.0, %v785
        %v794 = vsub.f32 0.0, %v786
        %v795 = vsub.f32 0.0, %v787
        %v796 = vsub.f32 0.0, %v788
        %v797 = vmul.f32 %v789, 1.442695
        %v798 = vpow.pop %v797
        %v799 = vmul.f32 %v790, 1.442695
        %v800 = vpow.pop %v799
        %v801 = vmul.f32 %v791, 1.442695
        %v802 = vpow.pop %v801
        %v803 = vmul.f32 %v792, 1.442695
        %v804 = vpow.pop %v803
        %v805 = vmul.f32 %v793, 1.442695
        %v806 = vpow.pop %v805
        %v807 = vmul.f32 %v794, 1.442695
        %v808 = vpow.pop %v807
        %v809 = vmul.f32 %v795, 1.442695
        %v810 = vpow.pop %v809
        %v811 = vmul.f32 %v796, 1.442695
        %v812 = vpow.pop %v811
        %v813 = vadd.f32 %v798, 1.0
        %v814 = vadd.f32 %v800, 1.0
        %v815 = vadd.f32 %v802, 1.0
        %v816 = vadd.f32 %v804, 1.0
        %v817 = vadd.f32 %v806, 1.0
        %v818 = vadd.f32 %v808, 1.0
        %v819 = vadd.f32 %v810, 1.0
        %v820 = vadd.f32 %v812, 1.0
        %v821 = vrcp.pop %v813
        %v822 = vmul.f32 %v813, %v821
        %v823 = vsub.f32 1.0, %v822
        %v824 = vmul.f32 %v821, %v823
        %v825 = vadd.f32 %v821, %v824
        %vm826 = vweird.f32 %v813
        %vm827 = vweird.f32 %v821
        %vm828 = vmor %vm826, %vm827
        %v829 = vsel %vm828, %v821, %v825
        %v830 = vand.u32 2147483647, %v813
        %vm831 = vcmp.eq.f32.partialorder %v830, 8.507059e+37
        %v832 = vand.u32 %v813, 2147483648
        %v833 = vor.u32 1.1754944e-38, %v832
        %v834 = vsel %vm831, %v833, %v829
        %v835 = vmul.f32 1.0, %v834
        %v836 = vrcp.pop %v814
        %v837 = vmul.f32 %v814, %v836
        %v838 = vsub.f32 1.0, %v837
        %v839 = vmul.f32 %v836, %v838
        %v840 = vadd.f32 %v836, %v839
        %vm841 = vweird.f32 %v814
        %vm842 = vweird.f32 %v836
        %vm843 = vmor %vm841, %vm842
        %v844 = vsel %vm843, %v836, %v840
        %v845 = vand.u32 2147483647, %v814
        %vm846 = vcmp.eq.f32.partialorder %v845, 8.507059e+37
        %v847 = vand.u32 %v814, 2147483648
        %v848 = vor.u32 1.1754944e-38, %v847
        %v849 = vsel %vm846, %v848, %v844
        %v850 = vmul.f32 1.0, %v849
        %v851 = vrcp.pop %v815
        %v852 = vmul.f32 %v815, %v851
        %v853 = vsub.f32 1.0, %v852
        %v854 = vmul.f32 %v851, %v853
        %v855 = vadd.f32 %v851, %v854
        %vm856 = vweird.f32 %v815
        %vm857 = vweird.f32 %v851
        %vm858 = vmor %vm856, %vm857
        %v859 = vsel %vm858, %v851, %v855
        %v860 = vand.u32 2147483647, %v815
        %vm861 = vcmp.eq.f32.partialorder %v860, 8.507059e+37
        %v862 = vand.u32 %v815, 2147483648
        %v863 = vor.u32 1.1754944e-38, %v862
        %v864 = vsel %vm861, %v863, %v859
        %v865 = vmul.f32 1.0, %v864
        %v866 = vrcp.pop %v816
        %v867 = vmul.f32 %v816, %v866
        %v868 = vsub.f32 1.0, %v867
        %v869 = vmul.f32 %v866, %v868
        %v870 = vadd.f32 %v866, %v869
        %vm871 = vweird.f32 %v816
        %vm872 = vweird.f32 %v866
        %vm873 = vmor %vm871, %vm872
        %v874 = vsel %vm873, %v866, %v870
        %v875 = vand.u32 2147483647, %v816
        %vm876 = vcmp.eq.f32.partialorder %v875, 8.507059e+37
        %v877 = vand.u32 %v816, 2147483648
        %v878 = vor.u32 1.1754944e-38, %v877
        %v879 = vsel %vm876, %v878, %v874
        %v880 = vmul.f32 1.0, %v879
        %v881 = vrcp.pop %v817
        %v882 = vmul.f32 %v817, %v881
        %v883 = vsub.f32 1.0, %v882
        %v884 = vmul.f32 %v881, %v883
        %v885 = vadd.f32 %v881, %v884
        %vm886 = vweird.f32 %v817
        %vm887 = vweird.f32 %v881
        %vm888 = vmor %vm886, %vm887
        %v889 = vsel %vm888, %v881, %v885
        %v890 = vand.u32 2147483647, %v817
        %vm891 = vcmp.eq.f32.partialorder %v890, 8.507059e+37
        %v892 = vand.u32 %v817, 2147483648
        %v893 = vor.u32 1.1754944e-38, %v892
        %v894 = vsel %vm891, %v893, %v889
        %v895 = vmul.f32 1.0, %v894
        %v896 = vrcp.pop %v818
        %v897 = vmul.f32 %v818, %v896
        %v898 = vsub.f32 1.0, %v897
        %v899 = vmul.f32 %v896, %v898
        %v900 = vadd.f32 %v896, %v899
        %vm901 = vweird.f32 %v818
        %vm902 = vweird.f32 %v896
        %vm903 = vmor %vm901, %vm902
        %v904 = vsel %vm903, %v896, %v900
        %v905 = vand.u32 2147483647, %v818
        %vm906 = vcmp.eq.f32.partialorder %v905, 8.507059e+37
        %v907 = vand.u32 %v818, 2147483648
        %v908 = vor.u32 1.1754944e-38, %v907
        %v909 = vsel %vm906, %v908, %v904
        %v910 = vmul.f32 1.0, %v909
        %v911 = vrcp.pop %v819
        %v912 = vmul.f32 %v819, %v911
        %v913 = vsub.f32 1.0, %v912
        %v914 = vmul.f32 %v911, %v913
        %v915 = vadd.f32 %v911, %v914
        %vm916 = vweird.f32 %v819
        %vm917 = vweird.f32 %v911
        %vm918 = vmor %vm916, %vm917
        %v919 = vsel %vm918, %v911, %v915
        %v920 = vand.u32 2147483647, %v819
        %vm921 = vcmp.eq.f32.partialorder %v920, 8.507059e+37
        %v922 = vand.u32 %v819, 2147483648
        %v923 = vor.u32 1.1754944e-38, %v922
        %v924 = vsel %vm921, %v923, %v919
        %v925 = vmul.f32 1.0, %v924
        %v926 = vrcp.pop %v820
        %v927 = vmul.f32 %v820, %v926
        %v928 = vsub.f32 1.0, %v927
        %v929 = vmul.f32 %v926, %v928
        %v930 = vadd.f32 %v926, %v929
        %vm931 = vweird.f32 %v820
        %vm932 = vweird.f32 %v926
        %vm933 = vmor %vm931, %vm932
        %v934 = vsel %vm933, %v926, %v930
        %v935 = vand.u32 2147483647, %v820
        %vm936 = vcmp.eq.f32.partialorder %v935, 8.507059e+37
        %v937 = vand.u32 %v820, 2147483648
        %v938 = vor.u32 1.1754944e-38, %v937
        %v939 = vsel %vm936, %v938, %v934
        %v940 = vmul.f32 1.0, %v939
        %v941 = vmul.f32 %v781, %v835
        %v942 = vmul.f32 %v782, %v850
        %v943 = vmul.f32 %v783, %v865
        %v944 = vmul.f32 %v784, %v880
        %v945 = vmul.f32 %v785, %v895
        %v946 = vmul.f32 %v786, %v910
        %v947 = vmul.f32 %v787, %v925
        %v948 = vmul.f32 %v788, %v940
        %949 = vst [vmem:[#allocation2] sm:$0xff] %v941
        %950 = vst [vmem:[#allocation2 + $0x8] sm:$0xff] %v942
        %951 = vst [vmem:[#allocation2 + $0x10] sm:$0xff] %v943
        %952 = vst [vmem:[#allocation2 + $0x18] sm:$0xff] %v944
        %953 = vst [vmem:[#allocation2 + $0x20] sm:$0xff] %v945
        %954 = vst [vmem:[#allocation2 + $0x28] sm:$0xff] %v946
        %955 = vst [vmem:[#allocation2 + $0x30] sm:$0xff] %v947
        %956 = vst [vmem:[#allocation2 + $0x38] sm:$0xff] %v948
        %v957 = vld [vmem:[#allocation2] sm:$0xff]
        %v958 = vld [vmem:[#allocation2 + $0x8] sm:$0xff]
        %v959 = vld [vmem:[#allocation2 + $0x10] sm:$0xff]
        %v960 = vld [vmem:[#allocation2 + $0x18] sm:$0xff]
        %v961 = vld [vmem:[#allocation2 + $0x20] sm:$0xff]
        %v962 = vld [vmem:[#allocation2 + $0x28] sm:$0xff]
        %v963 = vld [vmem:[#allocation2 + $0x30] sm:$0xff]
        %v964 = vld [vmem:[#allocation2 + $0x38] sm:$0xff]
        %965 = vrot.lane.b32.xlu0 %v957, 17
        %v966 = vpop.permute.xlu0 %965
        %967 = vrot.lane.b32.xlu0 %v959, 17
        %v968 = vpop.permute.xlu0 %967
        %969 = vrot.lane.b32.xlu0 %v961, 17
        %v970 = vpop.permute.xlu0 %969
        %971 = vrot.lane.b32.xlu0 %v963, 17
        %v972 = vpop.permute.xlu0 %971
        %973 = vrot.lane.b32.xlu0 %v958, 17
        %v974 = vpop.permute.xlu0 %973
        %975 = vrot.lane.b32.xlu0 %v960, 17
        %v976 = vpop.permute.xlu0 %975
        %977 = vrot.lane.b32.xlu0 %v962, 17
        %v978 = vpop.permute.xlu0 %977
        %979 = vrot.lane.b32.xlu0 %v964, 17
        %v980 = vpop.permute.xlu0 %979
        %v981 = vlaneseq
        %v982 = vand.u32 %v981, 127
        %vm983 = vcmp.lt.s32.totalorder %v982, 17
        %v984 = vsel %vm983, %v966, %v974
        %v985 = vsel %vm983, %v968, %v976
        %v986 = vsel %vm983, %v970, %v978
        %v987 = vsel %vm983, %v972, %v980
        %v988 = vsel %vm983, %v974, %v966
        %v989 = vsel %vm983, %v976, %v968
        %v990 = vsel %vm983, %v978, %v970
        %v991 = vsel %vm983, %v980, %v972
        %v992 = vld [vmem:[#allocation5] sm:$0x3]
        %v994 = vperm.slane %v992, 0
        %v995 = vperm.slane %v992, 1
        %v998 = vmul.f32 %v988, %v994
        %v999 = vmul.f32 %v984, %v995
        %v1000 = vmul.f32 %v989, %v994
        %v1001 = vmul.f32 %v985, %v995
        %v1002 = vmul.f32 %v990, %v994
        %v1003 = vmul.f32 %v986, %v995
        %v1004 = vmul.f32 %v991, %v994
        %v1005 = vmul.f32 %v987, %v995
        %1006 = vst [vmem:[#allocation3] sm:$0xff] %v998
        %1007 = vst [vmem:[#allocation3 + $0x8] sm:$0xff] %v999
        %1008 = vst [vmem:[#allocation3 + $0x10] sm:$0xff] %v1000
        %1009 = vst [vmem:[#allocation3 + $0x18] sm:$0xff] %v1001
        %1010 = vst [vmem:[#allocation3 + $0x20] sm:$0xff] %v1002
        %1011 = vst [vmem:[#allocation3 + $0x28] sm:$0xff] %v1003
        %1012 = vst [vmem:[#allocation3 + $0x30] sm:$0xff] %v1004
        %1013 = vst [vmem:[#allocation3 + $0x38] sm:$0xff] %v1005
        %1014 = vrot.lane.b32.xlu0 %v957, 16
        %v1015 = vpop.permute.xlu0 %1014
        %1016 = vrot.lane.b32.xlu0 %v959, 16
        %v1017 = vpop.permute.xlu0 %1016
        %1018 = vrot.lane.b32.xlu0 %v961, 16
        %v1019 = vpop.permute.xlu0 %1018
        %1020 = vrot.lane.b32.xlu0 %v963, 16
        %v1021 = vpop.permute.xlu0 %1020
        %1022 = vrot.lane.b32.xlu0 %v958, 16
        %v1023 = vpop.permute.xlu0 %1022
        %1024 = vrot.lane.b32.xlu0 %v960, 16
        %v1025 = vpop.permute.xlu0 %1024
        %1026 = vrot.lane.b32.xlu0 %v962, 16
        %v1027 = vpop.permute.xlu0 %1026
        %1028 = vrot.lane.b32.xlu0 %v964, 16
        %v1029 = vpop.permute.xlu0 %1028
        %vm1030 = vcmp.lt.s32.totalorder %v982, 16
        %v1031 = vsel %vm1030, %v1015, %v1023
        %v1032 = vsel %vm1030, %v1017, %v1025
        %v1033 = vsel %vm1030, %v1019, %v1027
        %v1034 = vsel %vm1030, %v1021, %v1029
        %v1035 = vsel %vm1030, %v1023, %v1015
        %v1036 = vsel %vm1030, %v1025, %v1017
        %v1037 = vsel %vm1030, %v1027, %v1019
        %v1038 = vsel %vm1030, %v1029, %v1021
        %s1039 = scalar_lea.vmem [#allocation5], 2
        %v1040 = vld [vmem:[%s1039] sm:$0x3]
        %v1042 = vperm.slane %v1040, 0
        %v1043 = vperm.slane %v1040, 1
        %v1046 = vmul.f32 %v1035, %v1042
        %v1047 = vmul.f32 %v1031, %v1043
        %v1048 = vmul.f32 %v1036, %v1042
        %v1049 = vmul.f32 %v1032, %v1043
        %v1050 = vmul.f32 %v1037, %v1042
        %v1051 = vmul.f32 %v1033, %v1043
        %v1052 = vmul.f32 %v1038, %v1042
        %v1053 = vmul.f32 %v1034, %v1043
        %1054 = vst [vmem:[#allocation3 + $0x40] sm:$0xff] %v1046
        %1055 = vst [vmem:[#allocation3 + $0x48] sm:$0xff] %v1047
        %1056 = vst [vmem:[#allocation3 + $0x50] sm:$0xff] %v1048
        %1057 = vst [vmem:[#allocation3 + $0x58] sm:$0xff] %v1049
        %1058 = vst [vmem:[#allocation3 + $0x60] sm:$0xff] %v1050
        %1059 = vst [vmem:[#allocation3 + $0x68] sm:$0xff] %v1051
        %1060 = vst [vmem:[#allocation3 + $0x70] sm:$0xff] %v1052
        %1061 = vst [vmem:[#allocation3 + $0x78] sm:$0xff] %v1053
        %1062 = vrot.lane.b32.xlu0 %v957, 15
        %v1063 = vpop.permute.xlu0 %1062
        %1064 = vrot.lane.b32.xlu0 %v959, 15
        %v1065 = vpop.permute.xlu0 %1064
        %1066 = vrot.lane.b32.xlu0 %v961, 15
        %v1067 = vpop.permute.xlu0 %1066
        %1068 = vrot.lane.b32.xlu0 %v963, 15
        %v1069 = vpop.permute.xlu0 %1068
        %1070 = vrot.lane.b32.xlu0 %v958, 15
        %v1071 = vpop.permute.xlu0 %1070
        %1072 = vrot.lane.b32.xlu0 %v960, 15
        %v1073 = vpop.permute.xlu0 %1072
        %1074 = vrot.lane.b32.xlu0 %v962, 15
        %v1075 = vpop.permute.xlu0 %1074
        %1076 = vrot.lane.b32.xlu0 %v964, 15
        %v1077 = vpop.permute.xlu0 %1076
        %vm1078 = vcmp.lt.s32.totalorder %v982, 15
        %v1079 = vsel %vm1078, %v1063, %v1071
        %v1080 = vsel %vm1078, %v1065, %v1073
        %v1081 = vsel %vm1078, %v1067, %v1075
        %v1082 = vsel %vm1078, %v1069, %v1077
        %v1083 = vsel %vm1078, %v1071, %v1063
        %v1084 = vsel %vm1078, %v1073, %v1065
        %v1085 = vsel %vm1078, %v1075, %v1067
        %v1086 = vsel %vm1078, %v1077, %v1069
        %s1087 = scalar_lea.vmem [#allocation5], 4
        %v1088 = vld [vmem:[%s1087] sm:$0x3]
        %v1090 = vperm.slane %v1088, 0
        %v1091 = vperm.slane %v1088, 1
        %v1094 = vmul.f32 %v1083, %v1090
        %v1095 = vmul.f32 %v1079, %v1091
        %v1096 = vmul.f32 %v1084, %v1090
        %v1097 = vmul.f32 %v1080, %v1091
        %v1098 = vmul.f32 %v1085, %v1090
        %v1099 = vmul.f32 %v1081, %v1091
        %v1100 = vmul.f32 %v1086, %v1090
        %v1101 = vmul.f32 %v1082, %v1091
        %1102 = vst [vmem:[#allocation3 + $0x80] sm:$0xff] %v1094
        %1103 = vst [vmem:[#allocation3 + $0x88] sm:$0xff] %v1095
        %1104 = vst [vmem:[#allocation3 + $0x90] sm:$0xff] %v1096
        %1105 = vst [vmem:[#allocation3 + $0x98] sm:$0xff] %v1097
        %1106 = vst [vmem:[#allocation3 + $0xa0] sm:$0xff] %v1098
        %1107 = vst [vmem:[#allocation3 + $0xa8] sm:$0xff] %v1099
        %1108 = vst [vmem:[#allocation3 + $0xb0] sm:$0xff] %v1100
        %1109 = vst [vmem:[#allocation3 + $0xb8] sm:$0xff] %v1101
        %1110 = vrot.lane.b32.xlu0 %v957, 1
        %v1111 = vpop.permute.xlu0 %1110
        %1112 = vrot.lane.b32.xlu0 %v959, 1
        %v1113 = vpop.permute.xlu0 %1112
        %1114 = vrot.lane.b32.xlu0 %v961, 1
        %v1115 = vpop.permute.xlu0 %1114
        %1116 = vrot.lane.b32.xlu0 %v963, 1
        %v1117 = vpop.permute.xlu0 %1116
        %1118 = vrot.lane.b32.xlu0 %v958, 1
        %v1119 = vpop.permute.xlu0 %1118
        %1120 = vrot.lane.b32.xlu0 %v960, 1
        %v1121 = vpop.permute.xlu0 %1120
        %1122 = vrot.lane.b32.xlu0 %v962, 1
        %v1123 = vpop.permute.xlu0 %1122
        %1124 = vrot.lane.b32.xlu0 %v964, 1
        %v1125 = vpop.permute.xlu0 %1124
        %vm1126 = vcmp.lt.s32.totalorder %v982, 1
        %v1127 = vsel %vm1126, %v1111, %v1119
        %v1128 = vsel %vm1126, %v1113, %v1121
        %v1129 = vsel %vm1126, %v1115, %v1123
        %v1130 = vsel %vm1126, %v1117, %v1125
        %v1131 = vsel %vm1126, %v1119, %v1111
        %v1132 = vsel %vm1126, %v1121, %v1113
        %v1133 = vsel %vm1126, %v1123, %v1115
        %v1134 = vsel %vm1126, %v1125, %v1117
        %s1135 = scalar_lea.vmem [#allocation5], 6
        %v1136 = vld [vmem:[%s1135] sm:$0x3]
        %v1138 = vperm.slane %v1136, 0
        %v1139 = vperm.slane %v1136, 1
        %v1142 = vmul.f32 %v1131, %v1138
        %v1143 = vmul.f32 %v1127, %v1139
        %v1144 = vmul.f32 %v1132, %v1138
        %v1145 = vmul.f32 %v1128, %v1139
        %v1146 = vmul.f32 %v1133, %v1138
        %v1147 = vmul.f32 %v1129, %v1139
        %v1148 = vmul.f32 %v1134, %v1138
        %v1149 = vmul.f32 %v1130, %v1139
        %1150 = vst [vmem:[#allocation3 + $0xc0] sm:$0xff] %v1142
        %1151 = vst [vmem:[#allocation3 + $0xc8] sm:$0xff] %v1143
        %1152 = vst [vmem:[#allocation3 + $0xd0] sm:$0xff] %v1144
        %1153 = vst [vmem:[#allocation3 + $0xd8] sm:$0xff] %v1145
        %1154 = vst [vmem:[#allocation3 + $0xe0] sm:$0xff] %v1146
        %1155 = vst [vmem:[#allocation3 + $0xe8] sm:$0xff] %v1147
        %1156 = vst [vmem:[#allocation3 + $0xf0] sm:$0xff] %v1148
        %1157 = vst [vmem:[#allocation3 + $0xf8] sm:$0xff] %v1149
        %1158 = vst [vmem:[#allocation3 + $0x100] sm:$0xff] %v957
        %1159 = vst [vmem:[#allocation3 + $0x108] sm:$0xff] %v958
        %1160 = vst [vmem:[#allocation3 + $0x110] sm:$0xff] %v959
        %1161 = vst [vmem:[#allocation3 + $0x118] sm:$0xff] %v960
        %1162 = vst [vmem:[#allocation3 + $0x120] sm:$0xff] %v961
        %1163 = vst [vmem:[#allocation3 + $0x128] sm:$0xff] %v962
        %1164 = vst [vmem:[#allocation3 + $0x130] sm:$0xff] %v963
        %1165 = vst [vmem:[#allocation3 + $0x138] sm:$0xff] %v964
        %1166 = vrot.lane.b32.xlu0 %v957, 127
        %v1167 = vpop.permute.xlu0 %1166
        %1168 = vrot.lane.b32.xlu0 %v959, 127
        %v1169 = vpop.permute.xlu0 %1168
        %1170 = vrot.lane.b32.xlu0 %v961, 127
        %v1171 = vpop.permute.xlu0 %1170
        %1172 = vrot.lane.b32.xlu0 %v963, 127
        %v1173 = vpop.permute.xlu0 %1172
        %1174 = vrot.lane.b32.xlu0 %v958, 127
        %v1175 = vpop.permute.xlu0 %1174
        %1176 = vrot.lane.b32.xlu0 %v960, 127
        %v1177 = vpop.permute.xlu0 %1176
        %1178 = vrot.lane.b32.xlu0 %v962, 127
        %v1179 = vpop.permute.xlu0 %1178
        %1180 = vrot.lane.b32.xlu0 %v964, 127
        %v1181 = vpop.permute.xlu0 %1180
        %vm1182 = vcmp.lt.s32.totalorder %v982, 127
        %v1183 = vsel %vm1182, %v1167, %v1175
        %v1184 = vsel %vm1182, %v1169, %v1177
        %v1185 = vsel %vm1182, %v1171, %v1179
        %v1186 = vsel %vm1182, %v1173, %v1181
        %v1187 = vsel %vm1182, %v1175, %v1167
        %v1188 = vsel %vm1182, %v1177, %v1169
        %v1189 = vsel %vm1182, %v1179, %v1171
        %v1190 = vsel %vm1182, %v1181, %v1173
        %s1191 = scalar_lea.vmem [#allocation5], 10
        %v1192 = vld [vmem:[%s1191] sm:$0x3]
        %v1194 = vperm.slane %v1192, 0
        %v1195 = vperm.slane %v1192, 1
        %v1198 = vmul.f32 %v1183, %v1194
        %v1199 = vmul.f32 %v1187, %v1195
        %v1200 = vmul.f32 %v1184, %v1194
        %v1201 = vmul.f32 %v1188, %v1195
        %v1202 = vmul.f32 %v1185, %v1194
        %v1203 = vmul.f32 %v1189, %v1195
        %v1204 = vmul.f32 %v1186, %v1194
        %v1205 = vmul.f32 %v1190, %v1195
        %1206 = vst [vmem:[#allocation3 + $0x140] sm:$0xff] %v1198
        %1207 = vst [vmem:[#allocation3 + $0x148] sm:$0xff] %v1199
        %1208 = vst [vmem:[#allocation3 + $0x150] sm:$0xff] %v1200
        %1209 = vst [vmem:[#allocation3 + $0x158] sm:$0xff] %v1201
        %1210 = vst [vmem:[#allocation3 + $0x160] sm:$0xff] %v1202
        %1211 = vst [vmem:[#allocation3 + $0x168] sm:$0xff] %v1203
        %1212 = vst [vmem:[#allocation3 + $0x170] sm:$0xff] %v1204
        %1213 = vst [vmem:[#allocation3 + $0x178] sm:$0xff] %v1205
        %1214 = vrot.lane.b32.xlu0 %v957, 113
        %v1215 = vpop.permute.xlu0 %1214
        %1216 = vrot.lane.b32.xlu0 %v959, 113
        %v1217 = vpop.permute.xlu0 %1216
        %1218 = vrot.lane.b32.xlu0 %v961, 113
        %v1219 = vpop.permute.xlu0 %1218
        %1220 = vrot.lane.b32.xlu0 %v963, 113
        %v1221 = vpop.permute.xlu0 %1220
        %1222 = vrot.lane.b32.xlu0 %v958, 113
        %v1223 = vpop.permute.xlu0 %1222
        %1224 = vrot.lane.b32.xlu0 %v960, 113
        %v1225 = vpop.permute.xlu0 %1224
        %1226 = vrot.lane.b32.xlu0 %v962, 113
        %v1227 = vpop.permute.xlu0 %1226
        %1228 = vrot.lane.b32.xlu0 %v964, 113
        %v1229 = vpop.permute.xlu0 %1228
        %vm1230 = vcmp.lt.s32.totalorder %v982, 113
        %v1231 = vsel %vm1230, %v1215, %v1223
        %v1232 = vsel %vm1230, %v1217, %v1225
        %v1233 = vsel %vm1230, %v1219, %v1227
        %v1234 = vsel %vm1230, %v1221, %v1229
        %v1235 = vsel %vm1230, %v1223, %v1215
        %v1236 = vsel %vm1230, %v1225, %v1217
        %v1237 = vsel %vm1230, %v1227, %v1219
        %v1238 = vsel %vm1230, %v1229, %v1221
        %s1239 = scalar_lea.vmem [#allocation5], 12
        %v1240 = vld [vmem:[%s1239] sm:$0x3]
        %v1242 = vperm.slane %v1240, 0
        %v1243 = vperm.slane %v1240, 1
        %v1246 = vmul.f32 %v1231, %v1242
        %v1247 = vmul.f32 %v1235, %v1243
        %v1248 = vmul.f32 %v1232, %v1242
        %v1249 = vmul.f32 %v1236, %v1243
        %v1250 = vmul.f32 %v1233, %v1242
        %v1251 = vmul.f32 %v1237, %v1243
        %v1252 = vmul.f32 %v1234, %v1242
        %v1253 = vmul.f32 %v1238, %v1243
        %1254 = vst [vmem:[#allocation3 + $0x180] sm:$0xff] %v1246
        %1255 = vst [vmem:[#allocation3 + $0x188] sm:$0xff] %v1247
        %1256 = vst [vmem:[#allocation3 + $0x190] sm:$0xff] %v1248
        %1257 = vst [vmem:[#allocation3 + $0x198] sm:$0xff] %v1249
        %1258 = vst [vmem:[#allocation3 + $0x1a0] sm:$0xff] %v1250
        %1259 = vst [vmem:[#allocation3 + $0x1a8] sm:$0xff] %v1251
        %1260 = vst [vmem:[#allocation3 + $0x1b0] sm:$0xff] %v1252
        %1261 = vst [vmem:[#allocation3 + $0x1b8] sm:$0xff] %v1253
        %1262 = vrot.lane.b32.xlu0 %v957, 112
        %v1263 = vpop.permute.xlu0 %1262
        %1264 = vrot.lane.b32.xlu0 %v959, 112
        %v1265 = vpop.permute.xlu0 %1264
        %1266 = vrot.lane.b32.xlu0 %v961, 112
        %v1267 = vpop.permute.xlu0 %1266
        %1268 = vrot.lane.b32.xlu0 %v963, 112
        %v1269 = vpop.permute.xlu0 %1268
        %1270 = vrot.lane.b32.xlu0 %v958, 112
        %v1271 = vpop.permute.xlu0 %1270
        %1272 = vrot.lane.b32.xlu0 %v960, 112
        %v1273 = vpop.permute.xlu0 %1272
        %1274 = vrot.lane.b32.xlu0 %v962, 112
        %v1275 = vpop.permute.xlu0 %1274
        %1276 = vrot.lane.b32.xlu0 %v964, 112
        %v1277 = vpop.permute.xlu0 %1276
        %vm1278 = vcmp.lt.s32.totalorder %v982, 112
        %v1279 = vsel %vm1278, %v1263, %v1271
        %v1280 = vsel %vm1278, %v1265, %v1273
        %v1281 = vsel %vm1278, %v1267, %v1275
        %v1282 = vsel %vm1278, %v1269, %v1277
        %v1283 = vsel %vm1278, %v1271, %v1263
        %v1284 = vsel %vm1278, %v1273, %v1265
        %v1285 = vsel %vm1278, %v1275, %v1267
        %v1286 = vsel %vm1278, %v1277, %v1269
        %s1287 = scalar_lea.vmem [#allocation5], 14
        %v1288 = vld [vmem:[%s1287] sm:$0x3]
        %v1290 = vperm.slane %v1288, 0
        %v1291 = vperm.slane %v1288, 1
        %v1294 = vmul.f32 %v1279, %v1290
        %v1295 = vmul.f32 %v1283, %v1291
        %v1296 = vmul.f32 %v1280, %v1290
        %v1297 = vmul.f32 %v1284, %v1291
        %v1298 = vmul.f32 %v1281, %v1290
        %v1299 = vmul.f32 %v1285, %v1291
        %v1300 = vmul.f32 %v1282, %v1290
        %v1301 = vmul.f32 %v1286, %v1291
        %1302 = vst [vmem:[#allocation3 + $0x1c0] sm:$0xff] %v1294
        %1303 = vst [vmem:[#allocation3 + $0x1c8] sm:$0xff] %v1295
        %1304 = vst [vmem:[#allocation3 + $0x1d0] sm:$0xff] %v1296
        %1305 = vst [vmem:[#allocation3 + $0x1d8] sm:$0xff] %v1297
        %1306 = vst [vmem:[#allocation3 + $0x1e0] sm:$0xff] %v1298
        %1307 = vst [vmem:[#allocation3 + $0x1e8] sm:$0xff] %v1299
        %1308 = vst [vmem:[#allocation3 + $0x1f0] sm:$0xff] %v1300
        %1309 = vst [vmem:[#allocation3 + $0x1f8] sm:$0xff] %v1301
        %1310 = vrot.lane.b32.xlu0 %v957, 111
        %v1311 = vpop.permute.xlu0 %1310
        %1312 = vrot.lane.b32.xlu0 %v959, 111
        %v1313 = vpop.permute.xlu0 %1312
        %1314 = vrot.lane.b32.xlu0 %v961, 111
        %v1315 = vpop.permute.xlu0 %1314
        %1316 = vrot.lane.b32.xlu0 %v963, 111
        %v1317 = vpop.permute.xlu0 %1316
        %1318 = vrot.lane.b32.xlu0 %v958, 111
        %v1319 = vpop.permute.xlu0 %1318
        %1320 = vrot.lane.b32.xlu0 %v960, 111
        %v1321 = vpop.permute.xlu0 %1320
        %1322 = vrot.lane.b32.xlu0 %v962, 111
        %v1323 = vpop.permute.xlu0 %1322
        %1324 = vrot.lane.b32.xlu0 %v964, 111
        %v1325 = vpop.permute.xlu0 %1324
        %vm1326 = vcmp.lt.s32.totalorder %v982, 111
        %v1327 = vsel %vm1326, %v1311, %v1319
        %v1328 = vsel %vm1326, %v1313, %v1321
        %v1329 = vsel %vm1326, %v1315, %v1323
        %v1330 = vsel %vm1326, %v1317, %v1325
        %v1331 = vsel %vm1326, %v1319, %v1311
        %v1332 = vsel %vm1326, %v1321, %v1313
        %v1333 = vsel %vm1326, %v1323, %v1315
        %v1334 = vsel %vm1326, %v1325, %v1317
        %s1335 = scalar_lea.vmem [#allocation5], 16
        %v1336 = vld [vmem:[%s1335] sm:$0x3]
        %v1338 = vperm.slane %v1336, 0
        %v1339 = vperm.slane %v1336, 1
        %v1342 = vmul.f32 %v1327, %v1338
        %v1343 = vmul.f32 %v1331, %v1339
        %v1344 = vmul.f32 %v1328, %v1338
        %v1345 = vmul.f32 %v1332, %v1339
        %v1346 = vmul.f32 %v1329, %v1338
        %v1347 = vmul.f32 %v1333, %v1339
        %v1348 = vmul.f32 %v1330, %v1338
        %v1349 = vmul.f32 %v1334, %v1339
        %1350 = vst [vmem:[#allocation3 + $0x200] sm:$0xff] %v1342
        %1351 = vst [vmem:[#allocation3 + $0x208] sm:$0xff] %v1343
        %1352 = vst [vmem:[#allocation3 + $0x210] sm:$0xff] %v1344
        %1353 = vst [vmem:[#allocation3 + $0x218] sm:$0xff] %v1345
        %1354 = vst [vmem:[#allocation3 + $0x220] sm:$0xff] %v1346
        %1355 = vst [vmem:[#allocation3 + $0x228] sm:$0xff] %v1347
        %1356 = vst [vmem:[#allocation3 + $0x230] sm:$0xff] %v1348
        %1357 = vst [vmem:[#allocation3 + $0x238] sm:$0xff] %v1349
        %v1358 = vld [vmem:[%s6] sm:$0xff]
        %v1359 = vld [vmem:[%s6 + $0x8] sm:$0xff]
        %v1360 = vld [vmem:[%s6 + $0x10] sm:$0xff]
        %v1361 = vld [vmem:[%s6 + $0x18] sm:$0xff]
        %v1362 = vld [vmem:[%s6 + $0x20] sm:$0xff]
        %v1363 = vld [vmem:[%s6 + $0x28] sm:$0xff]
        %v1364 = vld [vmem:[%s6 + $0x30] sm:$0xff]
        %v1365 = vld [vmem:[%s6 + $0x38] sm:$0xff]
        %v1366 = vld [vmem:[%s6 + $0x40] sm:$0xff]
        %v1367 = vld [vmem:[%s6 + $0x48] sm:$0xff]
        %v1368 = vld [vmem:[%s6 + $0x50] sm:$0xff]
        %v1369 = vld [vmem:[%s6 + $0x58] sm:$0xff]
        %v1370 = vld [vmem:[%s6 + $0x60] sm:$0xff]
        %v1371 = vld [vmem:[%s6 + $0x68] sm:$0xff]
        %v1372 = vld [vmem:[%s6 + $0x70] sm:$0xff]
        %v1373 = vld [vmem:[%s6 + $0x78] sm:$0xff]
        %v1374 = vld [vmem:[%s6 + $0x80] sm:$0xff]
        %v1375 = vld [vmem:[%s6 + $0x88] sm:$0xff]
        %v1376 = vld [vmem:[%s6 + $0x90] sm:$0xff]
        %v1377 = vld [vmem:[%s6 + $0x98] sm:$0xff]
        %v1378 = vld [vmem:[%s6 + $0xa0] sm:$0xff]
        %v1379 = vld [vmem:[%s6 + $0xa8] sm:$0xff]
        %v1380 = vld [vmem:[%s6 + $0xb0] sm:$0xff]
        %v1381 = vld [vmem:[%s6 + $0xb8] sm:$0xff]
        %v1382 = vld [vmem:[#allocation3] sm:$0xff]
        %v1383 = vld [vmem:[#allocation3 + $0x8] sm:$0xff]
        %v1384 = vld [vmem:[#allocation3 + $0x10] sm:$0xff]
        %v1385 = vld [vmem:[#allocation3 + $0x18] sm:$0xff]
        %v1386 = vld [vmem:[#allocation3 + $0x20] sm:$0xff]
        %v1387 = vld [vmem:[#allocation3 + $0x28] sm:$0xff]
        %v1388 = vld [vmem:[#allocation3 + $0x30] sm:$0xff]
        %v1389 = vld [vmem:[#allocation3 + $0x38] sm:$0xff]
        %v1390 = vld [vmem:[#allocation3 + $0x40] sm:$0xff]
        %v1391 = vld [vmem:[#allocation3 + $0x48] sm:$0xff]
        %v1392 = vld [vmem:[#allocation3 + $0x50] sm:$0xff]
        %v1393 = vld [vmem:[#allocation3 + $0x58] sm:$0xff]
        %v1394 = vld [vmem:[#allocation3 + $0x60] sm:$0xff]
        %v1395 = vld [vmem:[#allocation3 + $0x68] sm:$0xff]
        %v1396 = vld [vmem:[#allocation3 + $0x70] sm:$0xff]
        %v1397 = vld [vmem:[#allocation3 + $0x78] sm:$0xff]
        %v1398 = vld [vmem:[#allocation3 + $0x80] sm:$0xff]
        %v1399 = vld [vmem:[#allocation3 + $0x88] sm:$0xff]
        %v1400 = vld [vmem:[#allocation3 + $0x90] sm:$0xff]
        %v1401 = vld [vmem:[#allocation3 + $0x98] sm:$0xff]
        %v1402 = vld [vmem:[#allocation3 + $0xa0] sm:$0xff]
        %v1403 = vld [vmem:[#allocation3 + $0xa8] sm:$0xff]
        %v1404 = vld [vmem:[#allocation3 + $0xb0] sm:$0xff]
        %v1405 = vld [vmem:[#allocation3 + $0xb8] sm:$0xff]
        %v1406 = vld [vmem:[#allocation3 + $0xc0] sm:$0xff]
        %v1407 = vld [vmem:[#allocation3 + $0xc8] sm:$0xff]
        %v1408 = vld [vmem:[#allocation3 + $0xd0] sm:$0xff]
        %v1409 = vld [vmem:[#allocation3 + $0xd8] sm:$0xff]
        %v1410 = vld [vmem:[#allocation3 + $0xe0] sm:$0xff]
        %v1411 = vld [vmem:[#allocation3 + $0xe8] sm:$0xff]
        %v1412 = vld [vmem:[#allocation3 + $0xf0] sm:$0xff]
        %v1413 = vld [vmem:[#allocation3 + $0xf8] sm:$0xff]
        %v1414 = vld [vmem:[#allocation3 + $0x100] sm:$0xff]
        %v1415 = vld [vmem:[#allocation3 + $0x108] sm:$0xff]
        %v1416 = vld [vmem:[#allocation3 + $0x110] sm:$0xff]
        %v1417 = vld [vmem:[#allocation3 + $0x118] sm:$0xff]
        %v1418 = vld [vmem:[#allocation3 + $0x120] sm:$0xff]
        %v1419 = vld [vmem:[#allocation3 + $0x128] sm:$0xff]
        %v1420 = vld [vmem:[#allocation3 + $0x130] sm:$0xff]
        %v1421 = vld [vmem:[#allocation3 + $0x138] sm:$0xff]
        %v1422 = vld [vmem:[#allocation3 + $0x140] sm:$0xff]
        %v1423 = vld [vmem:[#allocation3 + $0x148] sm:$0xff]
        %v1424 = vld [vmem:[#allocation3 + $0x150] sm:$0xff]
        %v1425 = vld [vmem:[#allocation3 + $0x158] sm:$0xff]
        %v1426 = vld [vmem:[#allocation3 + $0x160] sm:$0xff]
        %v1427 = vld [vmem:[#allocation3 + $0x168] sm:$0xff]
        %v1428 = vld [vmem:[#allocation3 + $0x170] sm:$0xff]
        %v1429 = vld [vmem:[#allocation3 + $0x178] sm:$0xff]
        %v1430 = vld [vmem:[#allocation3 + $0x180] sm:$0xff]
        %v1431 = vld [vmem:[#allocation3 + $0x188] sm:$0xff]
        %v1432 = vld [vmem:[#allocation3 + $0x190] sm:$0xff]
        %v1433 = vld [vmem:[#allocation3 + $0x198] sm:$0xff]
        %v1434 = vld [vmem:[#allocation3 + $0x1a0] sm:$0xff]
        %v1435 = vld [vmem:[#allocation3 + $0x1a8] sm:$0xff]
        %v1436 = vld [vmem:[#allocation3 + $0x1b0] sm:$0xff]
        %v1437 = vld [vmem:[#allocation3 + $0x1b8] sm:$0xff]
        %v1438 = vld [vmem:[#allocation3 + $0x1c0] sm:$0xff]
        %v1439 = vld [vmem:[#allocation3 + $0x1c8] sm:$0xff]
        %v1440 = vld [vmem:[#allocation3 + $0x1d0] sm:$0xff]
        %v1441 = vld [vmem:[#allocation3 + $0x1d8] sm:$0xff]
        %v1442 = vld [vmem:[#allocation3 + $0x1e0] sm:$0xff]
        %v1443 = vld [vmem:[#allocation3 + $0x1e8] sm:$0xff]
        %v1444 = vld [vmem:[#allocation3 + $0x1f0] sm:$0xff]
        %v1445 = vld [vmem:[#allocation3 + $0x1f8] sm:$0xff]
        %v1446 = vld [vmem:[#allocation3 + $0x200] sm:$0xff]
        %v1447 = vld [vmem:[#allocation3 + $0x208] sm:$0xff]
        %v1448 = vld [vmem:[#allocation3 + $0x210] sm:$0xff]
        %v1449 = vld [vmem:[#allocation3 + $0x218] sm:$0xff]
        %v1450 = vld [vmem:[#allocation3 + $0x220] sm:$0xff]
        %v1451 = vld [vmem:[#allocation3 + $0x228] sm:$0xff]
        %v1452 = vld [vmem:[#allocation3 + $0x230] sm:$0xff]
        %v1453 = vld [vmem:[#allocation3 + $0x238] sm:$0xff]
        %s1454 = smul.u32 %s28, 64
        %s1455 = scalar_lea.vmem %s1, %s1454
        %v1456 = vld [vmem:[%s1455] sm:$0xff]
        %v1457 = vld [vmem:[%s1455 + $0x8] sm:$0xff]
        %v1458 = vld [vmem:[%s1455 + $0x10] sm:$0xff]
        %v1459 = vld [vmem:[%s1455 + $0x18] sm:$0xff]
        %v1460 = vld [vmem:[%s1455 + $0x20] sm:$0xff]
        %v1461 = vld [vmem:[%s1455 + $0x28] sm:$0xff]
        %v1462 = vld [vmem:[%s1455 + $0x30] sm:$0xff]
        %v1463 = vld [vmem:[%s1455 + $0x38] sm:$0xff]
        %1465 = vset.pattern.permute.xlu0 0
        %1466 = vperm.xlu0 %1465, %v1456
        %v1467 = vpop.permute.xlu0 %1466
        %1470 = vset.pattern.permute.xlu0 0
        %1471 = vperm.xlu0 %1470, %v1457
        %v1472 = vpop.permute.xlu0 %1471
        %1475 = vset.pattern.permute.xlu0 0
        %1476 = vperm.xlu0 %1475, %v1458
        %v1477 = vpop.permute.xlu0 %1476
        %1480 = vset.pattern.permute.xlu0 0
        %1481 = vperm.xlu0 %1480, %v1459
        %v1482 = vpop.permute.xlu0 %1481
        %1485 = vset.pattern.permute.xlu0 0
        %1486 = vperm.xlu0 %1485, %v1460
        %v1487 = vpop.permute.xlu0 %1486
        %1490 = vset.pattern.permute.xlu0 0
        %1491 = vperm.xlu0 %1490, %v1461
        %v1492 = vpop.permute.xlu0 %1491
        %1495 = vset.pattern.permute.xlu0 0
        %1496 = vperm.xlu0 %1495, %v1462
        %v1497 = vpop.permute.xlu0 %1496
        %1500 = vset.pattern.permute.xlu0 0
        %1501 = vperm.xlu0 %1500, %v1463
        %v1502 = vpop.permute.xlu0 %1501
        %v1505 = vsel %vm550, %v1360, 0
        %v1508 = vsel %vm550, %v1363, 0
        %v1511 = vsel %vm550, %v1366, 0
        %v1514 = vsel %vm550, %v1369, 0
        %v1517 = vsel %vm550, %v1372, 0
        %v1520 = vsel %vm550, %v1375, 0
        %v1523 = vsel %vm550, %v1378, 0
        %v1526 = vsel %vm550, %v1381, 0
        %1528 = vmatpush.msra.mxu0 %v1412
        %1529 = vmatpush.msra.mxu0 %v1410
        %1530 = vmatpush.msra.mxu0 %v1408
        %1531 = vmatpush.msra.mxu0 %v1406
        %1532 = vmatpush.msra.mxu0 %v1404
        %1533 = vmatpush.msra.mxu0 %v1402
        %1534 = vmatpush.msra.mxu0 %v1400
        %1535 = vmatpush.msra.mxu0 %v1398
        %1536 = vmatpush.msra.mxu0 %v1396
        %1537 = vmatpush.msra.mxu0 %v1394
        %1538 = vmatpush.msra.mxu0 %v1392
        %1539 = vmatpush.msra.mxu0 %v1390
        %1540 = vmatpush.msra.mxu0 %v1388
        %1541 = vmatpush.msra.mxu0 %v1386
        %1542 = vmatpush.msra.mxu0 %v1384
        %1543 = vmatpush.msra.mxu0 %v1382
        %1544 = vmatmul.f32.gmra.mxu0 %v1358
        %v1545 = vpop.f32.mrf.mxu0
        %v1546 = vadd.f32 %v1467, %v1545
        %1547 = vmatmul.f32.gmra.mxu0 %v1361
        %v1548 = vpop.f32.mrf.mxu0
        %v1549 = vadd.f32 %v1472, %v1548
        %1550 = vmatmul.f32.gmra.mxu0 %v1364
        %v1551 = vpop.f32.mrf.mxu0
        %v1552 = vadd.f32 %v1477, %v1551
        %1553 = vmatmul.f32.gmra.mxu0 %v1367
        %v1554 = vpop.f32.mrf.mxu0
        %v1555 = vadd.f32 %v1482, %v1554
        %1556 = vmatmul.f32.gmra.mxu0 %v1370
        %v1557 = vpop.f32.mrf.mxu0
        %v1558 = vadd.f32 %v1487, %v1557
        %1559 = vmatmul.f32.gmra.mxu0 %v1373
        %v1560 = vpop.f32.mrf.mxu0
        %v1561 = vadd.f32 %v1492, %v1560
        %1562 = vmatmul.f32.gmra.mxu0 %v1376
        %v1563 = vpop.f32.mrf.mxu0
        %v1564 = vadd.f32 %v1497, %v1563
        %1565 = vmatmul.f32.gmra.mxu0 %v1379
        %v1566 = vpop.f32.mrf.mxu0
        %v1567 = vadd.f32 %v1502, %v1566
        %1568 = vdwg.mxu0
        %1569 = vmatpush.msra.mxu0 %v1444
        %1570 = vmatpush.msra.mxu0 %v1442
        %1571 = vmatpush.msra.mxu0 %v1440
        %1572 = vmatpush.msra.mxu0 %v1438
        %1573 = vmatpush.msra.mxu0 %v1436
        %1574 = vmatpush.msra.mxu0 %v1434
        %1575 = vmatpush.msra.mxu0 %v1432
        %1576 = vmatpush.msra.mxu0 %v1430
        %1577 = vmatpush.msra.mxu0 %v1428
        %1578 = vmatpush.msra.mxu0 %v1426
        %1579 = vmatpush.msra.mxu0 %v1424
        %1580 = vmatpush.msra.mxu0 %v1422
        %1581 = vmatpush.msra.mxu0 %v1420
        %1582 = vmatpush.msra.mxu0 %v1418
        %1583 = vmatpush.msra.mxu0 %v1416
        %1584 = vmatpush.msra.mxu0 %v1414
        %1585 = vmatmul.f32.gmra.mxu0 %v1359
        %v1586 = vpop.f32.mrf.mxu0
        %v1587 = vadd.f32 %v1546, %v1586
        %1588 = vmatmul.f32.gmra.mxu0 %v1362
        %v1589 = vpop.f32.mrf.mxu0
        %v1590 = vadd.f32 %v1549, %v1589
        %1591 = vmatmul.f32.gmra.mxu0 %v1365
        %v1592 = vpop.f32.mrf.mxu0
        %v1593 = vadd.f32 %v1552, %v1592
        %1594 = vmatmul.f32.gmra.mxu0 %v1368
        %v1595 = vpop.f32.mrf.mxu0
        %v1596 = vadd.f32 %v1555, %v1595
        %1597 = vmatmul.f32.gmra.mxu0 %v1371
        %v1598 = vpop.f32.mrf.mxu0
        %v1599 = vadd.f32 %v1558, %v1598
        %1600 = vmatmul.f32.gmra.mxu0 %v1374
        %v1601 = vpop.f32.mrf.mxu0
        %v1602 = vadd.f32 %v1561, %v1601
        %1603 = vmatmul.f32.gmra.mxu0 %v1377
        %v1604 = vpop.f32.mrf.mxu0
        %v1605 = vadd.f32 %v1564, %v1604
        %1606 = vmatmul.f32.gmra.mxu0 %v1380
        %v1607 = vpop.f32.mrf.mxu0
        %v1608 = vadd.f32 %v1567, %v1607
        %1609 = vdwg.mxu0
        %1610 = vmatpush.msra.mxu0 0.0
        %1611 = vmatpush.msra.mxu0 0.0
        %1612 = vmatpush.msra.mxu0 0.0
        %1613 = vmatpush.msra.mxu0 0.0
        %1614 = vmatpush.msra.mxu0 0.0
        %1615 = vmatpush.msra.mxu0 0.0
        %1616 = vmatpush.msra.mxu0 0.0
        %1617 = vmatpush.msra.mxu0 0.0
        %1618 = vmatpush.msra.mxu0 0.0
        %1619 = vmatpush.msra.mxu0 0.0
        %1620 = vmatpush.msra.mxu0 0.0
        %1621 = vmatpush.msra.mxu0 0.0
        %1622 = vmatpush.msra.mxu0 %v1452
        %1623 = vmatpush.msra.mxu0 %v1450
        %1624 = vmatpush.msra.mxu0 %v1448
        %1625 = vmatpush.msra.mxu0 %v1446
        %1626 = vmatmul.f32.gmra.mxu0 %v1505
        %v1627 = vpop.f32.mrf.mxu0
        %v1628 = vadd.f32 %v1587, %v1627
        %1629 = vmatmul.f32.gmra.mxu0 %v1508
        %v1630 = vpop.f32.mrf.mxu0
        %v1631 = vadd.f32 %v1590, %v1630
        %1632 = vmatmul.f32.gmra.mxu0 %v1511
        %v1633 = vpop.f32.mrf.mxu0
        %v1634 = vadd.f32 %v1593, %v1633
        %1635 = vmatmul.f32.gmra.mxu0 %v1514
        %v1636 = vpop.f32.mrf.mxu0
        %v1637 = vadd.f32 %v1596, %v1636
        %1638 = vmatmul.f32.gmra.mxu0 %v1517
        %v1639 = vpop.f32.mrf.mxu0
        %v1640 = vadd.f32 %v1599, %v1639
        %1641 = vmatmul.f32.gmra.mxu0 %v1520
        %v1642 = vpop.f32.mrf.mxu0
        %v1643 = vadd.f32 %v1602, %v1642
        %1644 = vmatmul.f32.gmra.mxu0 %v1523
        %v1645 = vpop.f32.mrf.mxu0
        %v1646 = vadd.f32 %v1605, %v1645
        %1647 = vmatmul.f32.gmra.mxu0 %v1526
        %v1648 = vpop.f32.mrf.mxu0
        %v1649 = vadd.f32 %v1608, %v1648
        %1650 = vdwg.mxu0
        %1651 = vmatpush.msra.mxu0 %v1413
        %1652 = vmatpush.msra.mxu0 %v1411
        %1653 = vmatpush.msra.mxu0 %v1409
        %1654 = vmatpush.msra.mxu0 %v1407
        %1655 = vmatpush.msra.mxu0 %v1405
        %1656 = vmatpush.msra.mxu0 %v1403
        %1657 = vmatpush.msra.mxu0 %v1401
        %1658 = vmatpush.msra.mxu0 %v1399
        %1659 = vmatpush.msra.mxu0 %v1397
        %1660 = vmatpush.msra.mxu0 %v1395
        %1661 = vmatpush.msra.mxu0 %v1393
        %1662 = vmatpush.msra.mxu0 %v1391
        %1663 = vmatpush.msra.mxu0 %v1389
        %1664 = vmatpush.msra.mxu0 %v1387
        %1665 = vmatpush.msra.mxu0 %v1385
        %1666 = vmatpush.msra.mxu0 %v1383
        %1667 = vmatmul.f32.gmra.mxu0 %v1358
        %v1668 = vpop.f32.mrf.mxu0
        %v1669 = vadd.f32 %v1467, %v1668
        %1670 = vmatmul.f32.gmra.mxu0 %v1361
        %v1671 = vpop.f32.mrf.mxu0
        %v1672 = vadd.f32 %v1472, %v1671
        %1673 = vmatmul.f32.gmra.mxu0 %v1364
        %v1674 = vpop.f32.mrf.mxu0
        %v1675 = vadd.f32 %v1477, %v1674
        %1676 = vmatmul.f32.gmra.mxu0 %v1367
        %v1677 = vpop.f32.mrf.mxu0
        %v1678 = vadd.f32 %v1482, %v1677
        %1679 = vmatmul.f32.gmra.mxu0 %v1370
        %v1680 = vpop.f32.mrf.mxu0
        %v1681 = vadd.f32 %v1487, %v1680
        %1682 = vmatmul.f32.gmra.mxu0 %v1373
        %v1683 = vpop.f32.mrf.mxu0
        %v1684 = vadd.f32 %v1492, %v1683
        %1685 = vmatmul.f32.gmra.mxu0 %v1376
        %v1686 = vpop.f32.mrf.mxu0
        %v1687 = vadd.f32 %v1497, %v1686
        %1688 = vmatmul.f32.gmra.mxu0 %v1379
        %v1689 = vpop.f32.mrf.mxu0
        %v1690 = vadd.f32 %v1502, %v1689
        %1691 = vdwg.mxu0
        %1692 = vmatpush.msra.mxu0 %v1445
        %1693 = vmatpush.msra.mxu0 %v1443
        %1694 = vmatpush.msra.mxu0 %v1441
        %1695 = vmatpush.msra.mxu0 %v1439
        %1696 = vmatpush.msra.mxu0 %v1437
        %1697 = vmatpush.msra.mxu0 %v1435
        %1698 = vmatpush.msra.mxu0 %v1433
        %1699 = vmatpush.msra.mxu0 %v1431
        %1700 = vmatpush.msra.mxu0 %v1429
        %1701 = vmatpush.msra.mxu0 %v1427
        %1702 = vmatpush.msra.mxu0 %v1425
        %1703 = vmatpush.msra.mxu0 %v1423
        %1704 = vmatpush.msra.mxu0 %v1421
        %1705 = vmatpush.msra.mxu0 %v1419
        %1706 = vmatpush.msra.mxu0 %v1417
        %1707 = vmatpush.msra.mxu0 %v1415
        %1708 = vmatmul.f32.gmra.mxu0 %v1359
        %v1709 = vpop.f32.mrf.mxu0
        %v1710 = vadd.f32 %v1669, %v1709
        %1711 = vmatmul.f32.gmra.mxu0 %v1362
        %v1712 = vpop.f32.mrf.mxu0
        %v1713 = vadd.f32 %v1672, %v1712
        %1714 = vmatmul.f32.gmra.mxu0 %v1365
        %v1715 = vpop.f32.mrf.mxu0
        %v1716 = vadd.f32 %v1675, %v1715
        %1717 = vmatmul.f32.gmra.mxu0 %v1368
        %v1718 = vpop.f32.mrf.mxu0
        %v1719 = vadd.f32 %v1678, %v1718
        %1720 = vmatmul.f32.gmra.mxu0 %v1371
        %v1721 = vpop.f32.mrf.mxu0
        %v1722 = vadd.f32 %v1681, %v1721
        %1723 = vmatmul.f32.gmra.mxu0 %v1374
        %v1724 = vpop.f32.mrf.mxu0
        %v1725 = vadd.f32 %v1684, %v1724
        %1726 = vmatmul.f32.gmra.mxu0 %v1377
        %v1727 = vpop.f32.mrf.mxu0
        %v1728 = vadd.f32 %v1687, %v1727
        %1729 = vmatmul.f32.gmra.mxu0 %v1380
        %v1730 = vpop.f32.mrf.mxu0
        %v1731 = vadd.f32 %v1690, %v1730
        %1732 = vdwg.mxu0
        %1733 = vmatpush.msra.mxu0 0.0
        %1734 = vmatpush.msra.mxu0 0.0
        %1735 = vmatpush.msra.mxu0 0.0
        %1736 = vmatpush.msra.mxu0 0.0
        %1737 = vmatpush.msra.mxu0 0.0
        %1738 = vmatpush.msra.mxu0 0.0
        %1739 = vmatpush.msra.mxu0 0.0
        %1740 = vmatpush.msra.mxu0 0.0
        %1741 = vmatpush.msra.mxu0 0.0
        %1742 = vmatpush.msra.mxu0 0.0
        %1743 = vmatpush.msra.mxu0 0.0
        %1744 = vmatpush.msra.mxu0 0.0
        %1745 = vmatpush.msra.mxu0 %v1453
        %1746 = vmatpush.msra.mxu0 %v1451
        %1747 = vmatpush.msra.mxu0 %v1449
        %1748 = vmatpush.msra.mxu0 %v1447
        %1749 = vmatmul.f32.gmra.mxu0 %v1505
        %v1750 = vpop.f32.mrf.mxu0
        %v1751 = vadd.f32 %v1710, %v1750
        %1752 = vmatmul.f32.gmra.mxu0 %v1508
        %v1753 = vpop.f32.mrf.mxu0
        %v1754 = vadd.f32 %v1713, %v1753
        %1755 = vmatmul.f32.gmra.mxu0 %v1511
        %v1756 = vpop.f32.mrf.mxu0
        %v1757 = vadd.f32 %v1716, %v1756
        %1758 = vmatmul.f32.gmra.mxu0 %v1514
        %v1759 = vpop.f32.mrf.mxu0
        %v1760 = vadd.f32 %v1719, %v1759
        %1761 = vmatmul.f32.gmra.mxu0 %v1517
        %v1762 = vpop.f32.mrf.mxu0
        %v1763 = vadd.f32 %v1722, %v1762
        %1764 = vmatmul.f32.gmra.mxu0 %v1520
        %v1765 = vpop.f32.mrf.mxu0
        %v1766 = vadd.f32 %v1725, %v1765
        %1767 = vmatmul.f32.gmra.mxu0 %v1523
        %v1768 = vpop.f32.mrf.mxu0
        %v1769 = vadd.f32 %v1728, %v1768
        %1770 = vmatmul.f32.gmra.mxu0 %v1526
        %v1771 = vpop.f32.mrf.mxu0
        %v1772 = vadd.f32 %v1731, %v1771
        %1773 = vdwg.mxu0
        %v1774 = vld [vmem:[%s9] sm:$0xff]
        %v1775 = vld [vmem:[%s9 + $0x8] sm:$0xff]
        %v1776 = vld [vmem:[%s9 + $0x10] sm:$0xff]
        %v1777 = vld [vmem:[%s9 + $0x18] sm:$0xff]
        %v1778 = vld [vmem:[%s9 + $0x20] sm:$0xff]
        %v1779 = vld [vmem:[%s9 + $0x28] sm:$0xff]
        %v1780 = vld [vmem:[%s9 + $0x30] sm:$0xff]
        %v1781 = vld [vmem:[%s9 + $0x38] sm:$0xff]
        %v1782 = vld [vmem:[%s7] sm:$0xff]
        %v1783 = vld [vmem:[%s7 + $0x8] sm:$0xff]
        %v1784 = vld [vmem:[%s7 + $0x10] sm:$0xff]
        %v1785 = vld [vmem:[%s7 + $0x18] sm:$0xff]
        %v1786 = vld [vmem:[%s7 + $0x20] sm:$0xff]
        %v1787 = vld [vmem:[%s7 + $0x28] sm:$0xff]
        %v1788 = vld [vmem:[%s7 + $0x30] sm:$0xff]
        %v1789 = vld [vmem:[%s7 + $0x38] sm:$0xff]
        %v1790 = vld [vmem:[%s8] sm:$0xff]
        %v1791 = vld [vmem:[%s8 + $0x8] sm:$0xff]
        %v1792 = vld [vmem:[%s8 + $0x10] sm:$0xff]
        %v1793 = vld [vmem:[%s8 + $0x18] sm:$0xff]
        %v1794 = vld [vmem:[%s8 + $0x20] sm:$0xff]
        %v1795 = vld [vmem:[%s8 + $0x28] sm:$0xff]
        %v1796 = vld [vmem:[%s8 + $0x30] sm:$0xff]
        %v1797 = vld [vmem:[%s8 + $0x38] sm:$0xff]
        %v1798 = vadd.f32 %v1628, %v1751
        %1799 = vadd.xlane.f32.xlu0 %v1798
        %v1800 = vpop.xlane.xlu0 %1799
        %v1801 = vadd.f32 %v1631, %v1754
        %1802 = vadd.xlane.f32.xlu0 %v1801
        %v1803 = vpop.xlane.xlu0 %1802
        %v1804 = vadd.f32 %v1634, %v1757
        %1805 = vadd.xlane.f32.xlu0 %v1804
        %v1806 = vpop.xlane.xlu0 %1805
        %v1807 = vadd.f32 %v1637, %v1760
        %1808 = vadd.xlane.f32.xlu0 %v1807
        %v1809 = vpop.xlane.xlu0 %1808
        %v1810 = vadd.f32 %v1640, %v1763
        %1811 = vadd.xlane.f32.xlu0 %v1810
        %v1812 = vpop.xlane.xlu0 %1811
        %v1813 = vadd.f32 %v1643, %v1766
        %1814 = vadd.xlane.f32.xlu0 %v1813
        %v1815 = vpop.xlane.xlu0 %1814
        %v1816 = vadd.f32 %v1646, %v1769
        %1817 = vadd.xlane.f32.xlu0 %v1816
        %v1818 = vpop.xlane.xlu0 %1817
        %v1819 = vadd.f32 %v1649, %v1772
        %1820 = vadd.xlane.f32.xlu0 %v1819
        %v1821 = vpop.xlane.xlu0 %1820
        %v1822 = vmul.f32 %v1628, %v1628
        %v1823 = vmul.f32 %v1751, %v1751
        %v1824 = vmul.f32 %v1631, %v1631
        %v1825 = vmul.f32 %v1754, %v1754
        %v1826 = vmul.f32 %v1634, %v1634
        %v1827 = vmul.f32 %v1757, %v1757
        %v1828 = vmul.f32 %v1637, %v1637
        %v1829 = vmul.f32 %v1760, %v1760
        %v1830 = vmul.f32 %v1640, %v1640
        %v1831 = vmul.f32 %v1763, %v1763
        %v1832 = vmul.f32 %v1643, %v1643
        %v1833 = vmul.f32 %v1766, %v1766
        %v1834 = vmul.f32 %v1646, %v1646
        %v1835 = vmul.f32 %v1769, %v1769
        %v1836 = vmul.f32 %v1649, %v1649
        %v1837 = vmul.f32 %v1772, %v1772
        %v1838 = vadd.f32 %v1822, %v1823
        %1839 = vadd.xlane.f32.xlu0 %v1838
        %v1840 = vpop.xlane.xlu0 %1839
        %v1841 = vadd.f32 %v1824, %v1825
        %1842 = vadd.xlane.f32.xlu0 %v1841
        %v1843 = vpop.xlane.xlu0 %1842
        %v1844 = vadd.f32 %v1826, %v1827
        %1845 = vadd.xlane.f32.xlu0 %v1844
        %v1846 = vpop.xlane.xlu0 %1845
        %v1847 = vadd.f32 %v1828, %v1829
        %1848 = vadd.xlane.f32.xlu0 %v1847
        %v1849 = vpop.xlane.xlu0 %1848
        %v1850 = vadd.f32 %v1830, %v1831
        %1851 = vadd.xlane.f32.xlu0 %v1850
        %v1852 = vpop.xlane.xlu0 %1851
        %v1853 = vadd.f32 %v1832, %v1833
        %1854 = vadd.xlane.f32.xlu0 %v1853
        %v1855 = vpop.xlane.xlu0 %1854
        %v1856 = vadd.f32 %v1834, %v1835
        %1857 = vadd.xlane.f32.xlu0 %v1856
        %v1858 = vpop.xlane.xlu0 %1857
        %v1859 = vadd.f32 %v1836, %v1837
        %1860 = vadd.xlane.f32.xlu0 %v1859
        %v1861 = vpop.xlane.xlu0 %1860
        %vm1862 = vcmask 523264
        %v1864 = vsel %vm1862, %v1774, 0
        %v1867 = vsel %vm1862, %v1775, 0
        %v1870 = vsel %vm1862, %v1776, 0
        %v1873 = vsel %vm1862, %v1777, 0
        %v1876 = vsel %vm1862, %v1778, 0
        %v1879 = vsel %vm1862, %v1779, 0
        %v1882 = vsel %vm1862, %v1780, 0
        %v1885 = vsel %vm1862, %v1781, 0
        %1887 = vmatpush.msra.mxu0 0.0
        %1888 = vmatpush.msra.mxu0 0.0
        %1889 = vmatpush.msra.mxu0 0.0
        %1890 = vmatpush.msra.mxu0 0.0
        %1891 = vmatpush.msra.mxu0 0.0
        %1892 = vmatpush.msra.mxu0 0.0
        %1893 = vmatpush.msra.mxu0 0.0
        %1894 = vmatpush.msra.mxu0 0.0
        %1895 = vmatpush.msra.mxu0 %v1821
        %1896 = vmatpush.msra.mxu0 %v1818
        %1897 = vmatpush.msra.mxu0 %v1815
        %1898 = vmatpush.msra.mxu0 %v1812
        %1899 = vmatpush.msra.mxu0 %v1809
        %1900 = vmatpush.msra.mxu0 %v1806
        %1901 = vmatpush.msra.mxu0 %v1803
        %1902 = vmatpush.msra.mxu0 %v1800
        %1903 = vmatmul.f32.gmra.mxu0 %v1864
        %v1904 = vpop.f32.mrf.mxu0
        %v1905 = vadd.f32 0.0, %v1904
        %1906 = vmatmul.f32.gmra.mxu0 %v1867
        %v1907 = vpop.f32.mrf.mxu0
        %v1908 = vadd.f32 0.0, %v1907
        %1909 = vmatmul.f32.gmra.mxu0 %v1870
        %v1910 = vpop.f32.mrf.mxu0
        %v1911 = vadd.f32 0.0, %v1910
        %1912 = vmatmul.f32.gmra.mxu0 %v1873
        %v1913 = vpop.f32.mrf.mxu0
        %v1914 = vadd.f32 0.0, %v1913
        %1915 = vmatmul.f32.gmra.mxu0 %v1876
        %v1916 = vpop.f32.mrf.mxu0
        %v1917 = vadd.f32 0.0, %v1916
        %1918 = vmatmul.f32.gmra.mxu0 %v1879
        %v1919 = vpop.f32.mrf.mxu0
        %v1920 = vadd.f32 0.0, %v1919
        %1921 = vmatmul.f32.gmra.mxu0 %v1882
        %v1922 = vpop.f32.mrf.mxu0
        %v1923 = vadd.f32 0.0, %v1922
        %1924 = vmatmul.f32.gmra.mxu0 %v1885
        %v1925 = vpop.f32.mrf.mxu0
        %v1926 = vadd.f32 0.0, %v1925
        %1927 = vdwg.mxu0
        %1928 = vmatpush.msra.mxu0 0.0
        %1929 = vmatpush.msra.mxu0 0.0
        %1930 = vmatpush.msra.mxu0 0.0
        %1931 = vmatpush.msra.mxu0 0.0
        %1932 = vmatpush.msra.mxu0 0.0
        %1933 = vmatpush.msra.mxu0 0.0
        %1934 = vmatpush.msra.mxu0 0.0
        %1935 = vmatpush.msra.mxu0 0.0
        %1936 = vmatpush.msra.mxu0 %v1861
        %1937 = vmatpush.msra.mxu0 %v1858
        %1938 = vmatpush.msra.mxu0 %v1855
        %1939 = vmatpush.msra.mxu0 %v1852
        %1940 = vmatpush.msra.mxu0 %v1849
        %1941 = vmatpush.msra.mxu0 %v1846
        %1942 = vmatpush.msra.mxu0 %v1843
        %1943 = vmatpush.msra.mxu0 %v1840
        %1944 = vmatmul.f32.gmra.mxu0 %v1864
        %v1945 = vpop.f32.mrf.mxu0
        %v1946 = vadd.f32 0.0, %v1945
        %1947 = vmatmul.f32.gmra.mxu0 %v1867
        %v1948 = vpop.f32.mrf.mxu0
        %v1949 = vadd.f32 0.0, %v1948
        %1950 = vmatmul.f32.gmra.mxu0 %v1870
        %v1951 = vpop.f32.mrf.mxu0
        %v1952 = vadd.f32 0.0, %v1951
        %1953 = vmatmul.f32.gmra.mxu0 %v1873
        %v1954 = vpop.f32.mrf.mxu0
        %v1955 = vadd.f32 0.0, %v1954
        %1956 = vmatmul.f32.gmra.mxu0 %v1876
        %v1957 = vpop.f32.mrf.mxu0
        %v1958 = vadd.f32 0.0, %v1957
        %1959 = vmatmul.f32.gmra.mxu0 %v1879
        %v1960 = vpop.f32.mrf.mxu0
        %v1961 = vadd.f32 0.0, %v1960
        %1962 = vmatmul.f32.gmra.mxu0 %v1882
        %v1963 = vpop.f32.mrf.mxu0
        %v1964 = vadd.f32 0.0, %v1963
        %1965 = vmatmul.f32.gmra.mxu0 %v1885
        %v1966 = vpop.f32.mrf.mxu0
        %v1967 = vadd.f32 0.0, %v1966
        %1968 = vdwg.mxu0
        %v1969 = vmul.f32 %v1905, %v1905
        %v1970 = vmul.f32 %v1908, %v1908
        %v1971 = vmul.f32 %v1911, %v1911
        %v1972 = vmul.f32 %v1914, %v1914
        %v1973 = vmul.f32 %v1917, %v1917
        %v1974 = vmul.f32 %v1920, %v1920
        %v1975 = vmul.f32 %v1923, %v1923
        %v1976 = vmul.f32 %v1926, %v1926
        %v1977 = vsub.f32 %v1946, %v1969
        %v1978 = vsub.f32 %v1949, %v1970
        %v1979 = vsub.f32 %v1952, %v1971
        %v1980 = vsub.f32 %v1955, %v1972
        %v1981 = vsub.f32 %v1958, %v1973
        %v1982 = vsub.f32 %v1961, %v1974
        %v1983 = vsub.f32 %v1964, %v1975
        %v1984 = vsub.f32 %v1967, %v1976
        %v1985 = vmax.f32 %v1977, 0.0
        %v1986 = vmax.f32 %v1978, 0.0
        %v1987 = vmax.f32 %v1979, 0.0
        %v1988 = vmax.f32 %v1980, 0.0
        %v1989 = vmax.f32 %v1981, 0.0
        %v1990 = vmax.f32 %v1982, 0.0
        %v1991 = vmax.f32 %v1983, 0.0
        %v1992 = vmax.f32 %v1984, 0.0
        %v1993 = vadd.f32 %v1985, 1e-05
        %v1994 = vadd.f32 %v1986, 1e-05
        %v1995 = vadd.f32 %v1987, 1e-05
        %v1996 = vadd.f32 %v1988, 1e-05
        %v1997 = vadd.f32 %v1989, 1e-05
        %v1998 = vadd.f32 %v1990, 1e-05
        %v1999 = vadd.f32 %v1991, 1e-05
        %v2000 = vadd.f32 %v1992, 1e-05
        %v2001 = vrsqrt.pop %v1993
        %v2002 = vmul.f32 %v2001, %v1993
        %v2003 = vmul.f32 %v2002, %v2001
        %v2004 = vmul.f32 0.5, %v2003
        %v2005 = vsub.f32 1.5, %v2004
        %v2006 = vmul.f32 %v2001, %v2005
        %vm2007 = vweird.f32 %v1993
        %vm2008 = vweird.f32 %v2001
        %vm2009 = vmor %vm2007, %vm2008
        %v2010 = vsel %vm2009, %v2001, %v2006
        %v2011 = vrsqrt.pop %v1994
        %v2012 = vmul.f32 %v2011, %v1994
        %v2013 = vmul.f32 %v2012, %v2011
        %v2014 = vmul.f32 0.5, %v2013
        %v2015 = vsub.f32 1.5, %v2014
        %v2016 = vmul.f32 %v2011, %v2015
        %vm2017 = vweird.f32 %v1994
        %vm2018 = vweird.f32 %v2011
        %vm2019 = vmor %vm2017, %vm2018
        %v2020 = vsel %vm2019, %v2011, %v2016
        %v2021 = vrsqrt.pop %v1995
        %v2022 = vmul.f32 %v2021, %v1995
        %v2023 = vmul.f32 %v2022, %v2021
        %v2024 = vmul.f32 0.5, %v2023
        %v2025 = vsub.f32 1.5, %v2024
        %v2026 = vmul.f32 %v2021, %v2025
        %vm2027 = vweird.f32 %v1995
        %vm2028 = vweird.f32 %v2021
        %vm2029 = vmor %vm2027, %vm2028
        %v2030 = vsel %vm2029, %v2021, %v2026
        %v2031 = vrsqrt.pop %v1996
        %v2032 = vmul.f32 %v2031, %v1996
        %v2033 = vmul.f32 %v2032, %v2031
        %v2034 = vmul.f32 0.5, %v2033
        %v2035 = vsub.f32 1.5, %v2034
        %v2036 = vmul.f32 %v2031, %v2035
        %vm2037 = vweird.f32 %v1996
        %vm2038 = vweird.f32 %v2031
        %vm2039 = vmor %vm2037, %vm2038
        %v2040 = vsel %vm2039, %v2031, %v2036
        %v2041 = vrsqrt.pop %v1997
        %v2042 = vmul.f32 %v2041, %v1997
        %v2043 = vmul.f32 %v2042, %v2041
        %v2044 = vmul.f32 0.5, %v2043
        %v2045 = vsub.f32 1.5, %v2044
        %v2046 = vmul.f32 %v2041, %v2045
        %vm2047 = vweird.f32 %v1997
        %vm2048 = vweird.f32 %v2041
        %vm2049 = vmor %vm2047, %vm2048
        %v2050 = vsel %vm2049, %v2041, %v2046
        %v2051 = vrsqrt.pop %v1998
        %v2052 = vmul.f32 %v2051, %v1998
        %v2053 = vmul.f32 %v2052, %v2051
        %v2054 = vmul.f32 0.5, %v2053
        %v2055 = vsub.f32 1.5, %v2054
        %v2056 = vmul.f32 %v2051, %v2055
        %vm2057 = vweird.f32 %v1998
        %vm2058 = vweird.f32 %v2051
        %vm2059 = vmor %vm2057, %vm2058
        %v2060 = vsel %vm2059, %v2051, %v2056
        %v2061 = vrsqrt.pop %v1999
        %v2062 = vmul.f32 %v2061, %v1999
        %v2063 = vmul.f32 %v2062, %v2061
        %v2064 = vmul.f32 0.5, %v2063
        %v2065 = vsub.f32 1.5, %v2064
        %v2066 = vmul.f32 %v2061, %v2065
        %vm2067 = vweird.f32 %v1999
        %vm2068 = vweird.f32 %v2061
        %vm2069 = vmor %vm2067, %vm2068
        %v2070 = vsel %vm2069, %v2061, %v2066
        %v2071 = vrsqrt.pop %v2000
        %v2072 = vmul.f32 %v2071, %v2000
        %v2073 = vmul.f32 %v2072, %v2071
        %v2074 = vmul.f32 0.5, %v2073
        %v2075 = vsub.f32 1.5, %v2074
        %v2076 = vmul.f32 %v2071, %v2075
        %vm2077 = vweird.f32 %v2000
        %vm2078 = vweird.f32 %v2071
        %vm2079 = vmor %vm2077, %vm2078
        %v2080 = vsel %vm2079, %v2071, %v2076
        %2082 = vset.pattern.permute.xlu0 0
        %2083 = vperm.xlu0 %2082, %v1905
        %v2084 = vpop.permute.xlu0 %2083
        %2087 = vset.pattern.permute.xlu0 0
        %2088 = vperm.xlu0 %2087, %v1908
        %v2089 = vpop.permute.xlu0 %2088
        %2092 = vset.pattern.permute.xlu0 0
        %2093 = vperm.xlu0 %2092, %v1911
        %v2094 = vpop.permute.xlu0 %2093
        %2097 = vset.pattern.permute.xlu0 0
        %2098 = vperm.xlu0 %2097, %v1914
        %v2099 = vpop.permute.xlu0 %2098
        %2102 = vset.pattern.permute.xlu0 0
        %2103 = vperm.xlu0 %2102, %v1917
        %v2104 = vpop.permute.xlu0 %2103
        %2107 = vset.pattern.permute.xlu0 0
        %2108 = vperm.xlu0 %2107, %v1920
        %v2109 = vpop.permute.xlu0 %2108
        %2112 = vset.pattern.permute.xlu0 0
        %2113 = vperm.xlu0 %2112, %v1923
        %v2114 = vpop.permute.xlu0 %2113
        %2117 = vset.pattern.permute.xlu0 0
        %2118 = vperm.xlu0 %2117, %v1926
        %v2119 = vpop.permute.xlu0 %2118
        %v2121 = vsub.f32 %v1628, %v2084
        %v2122 = vsub.f32 %v1751, %v2084
        %v2123 = vsub.f32 %v1631, %v2089
        %v2124 = vsub.f32 %v1754, %v2089
        %v2125 = vsub.f32 %v1634, %v2094
        %v2126 = vsub.f32 %v1757, %v2094
        %v2127 = vsub.f32 %v1637, %v2099
        %v2128 = vsub.f32 %v1760, %v2099
        %v2129 = vsub.f32 %v1640, %v2104
        %v2130 = vsub.f32 %v1763, %v2104
        %v2131 = vsub.f32 %v1643, %v2109
        %v2132 = vsub.f32 %v1766, %v2109
        %v2133 = vsub.f32 %v1646, %v2114
        %v2134 = vsub.f32 %v1769, %v2114
        %v2135 = vsub.f32 %v1649, %v2119
        %v2136 = vsub.f32 %v1772, %v2119
        %2138 = vset.pattern.permute.xlu0 0
        %2139 = vperm.xlu0 %2138, %v2010
        %v2140 = vpop.permute.xlu0 %2139
        %2143 = vset.pattern.permute.xlu0 0
        %2144 = vperm.xlu0 %2143, %v2020
        %v2145 = vpop.permute.xlu0 %2144
        %2148 = vset.pattern.permute.xlu0 0
        %2149 = vperm.xlu0 %2148, %v2030
        %v2150 = vpop.permute.xlu0 %2149
        %2153 = vset.pattern.permute.xlu0 0
        %2154 = vperm.xlu0 %2153, %v2040
        %v2155 = vpop.permute.xlu0 %2154
        %2158 = vset.pattern.permute.xlu0 0
        %2159 = vperm.xlu0 %2158, %v2050
        %v2160 = vpop.permute.xlu0 %2159
        %2163 = vset.pattern.permute.xlu0 0
        %2164 = vperm.xlu0 %2163, %v2060
        %v2165 = vpop.permute.xlu0 %2164
        %2168 = vset.pattern.permute.xlu0 0
        %2169 = vperm.xlu0 %2168, %v2070
        %v2170 = vpop.permute.xlu0 %2169
        %2173 = vset.pattern.permute.xlu0 0
        %2174 = vperm.xlu0 %2173, %v2080
        %v2175 = vpop.permute.xlu0 %2174
        %v2177 = vmul.f32 %v2121, %v2140
        %v2178 = vmul.f32 %v2122, %v2140
        %v2179 = vmul.f32 %v2123, %v2145
        %v2180 = vmul.f32 %v2124, %v2145
        %v2181 = vmul.f32 %v2125, %v2150
        %v2182 = vmul.f32 %v2126, %v2150
        %v2183 = vmul.f32 %v2127, %v2155
        %v2184 = vmul.f32 %v2128, %v2155
        %v2185 = vmul.f32 %v2129, %v2160
        %v2186 = vmul.f32 %v2130, %v2160
        %v2187 = vmul.f32 %v2131, %v2165
        %v2188 = vmul.f32 %v2132, %v2165
        %v2189 = vmul.f32 %v2133, %v2170
        %v2190 = vmul.f32 %v2134, %v2170
        %v2191 = vmul.f32 %v2135, %v2175
        %v2192 = vmul.f32 %v2136, %v2175
        %2194 = vset.pattern.permute.xlu0 0
        %2195 = vperm.xlu0 %2194, %v1782
        %v2196 = vpop.permute.xlu0 %2195
        %2199 = vset.pattern.permute.xlu0 0
        %2200 = vperm.xlu0 %2199, %v1783
        %v2201 = vpop.permute.xlu0 %2200
        %2204 = vset.pattern.permute.xlu0 0
        %2205 = vperm.xlu0 %2204, %v1784
        %v2206 = vpop.permute.xlu0 %2205
        %2209 = vset.pattern.permute.xlu0 0
        %2210 = vperm.xlu0 %2209, %v1785
        %v2211 = vpop.permute.xlu0 %2210
        %2214 = vset.pattern.permute.xlu0 0
        %2215 = vperm.xlu0 %2214, %v1786
        %v2216 = vpop.permute.xlu0 %2215
        %2219 = vset.pattern.permute.xlu0 0
        %2220 = vperm.xlu0 %2219, %v1787
        %v2221 = vpop.permute.xlu0 %2220
        %2224 = vset.pattern.permute.xlu0 0
        %2225 = vperm.xlu0 %2224, %v1788
        %v2226 = vpop.permute.xlu0 %2225
        %2229 = vset.pattern.permute.xlu0 0
        %2230 = vperm.xlu0 %2229, %v1789
        %v2231 = vpop.permute.xlu0 %2230
        %v2233 = vmul.f32 %v2177, %v2196
        %v2234 = vmul.f32 %v2178, %v2196
        %v2235 = vmul.f32 %v2179, %v2201
        %v2236 = vmul.f32 %v2180, %v2201
        %v2237 = vmul.f32 %v2181, %v2206
        %v2238 = vmul.f32 %v2182, %v2206
        %v2239 = vmul.f32 %v2183, %v2211
        %v2240 = vmul.f32 %v2184, %v2211
        %v2241 = vmul.f32 %v2185, %v2216
        %v2242 = vmul.f32 %v2186, %v2216
        %v2243 = vmul.f32 %v2187, %v2221
        %v2244 = vmul.f32 %v2188, %v2221
        %v2245 = vmul.f32 %v2189, %v2226
        %v2246 = vmul.f32 %v2190, %v2226
        %v2247 = vmul.f32 %v2191, %v2231
        %v2248 = vmul.f32 %v2192, %v2231
        %2250 = vset.pattern.permute.xlu0 0
        %2251 = vperm.xlu0 %2250, %v1790
        %v2252 = vpop.permute.xlu0 %2251
        %2255 = vset.pattern.permute.xlu0 0
        %2256 = vperm.xlu0 %2255, %v1791
        %v2257 = vpop.permute.xlu0 %2256
        %2260 = vset.pattern.permute.xlu0 0
        %2261 = vperm.xlu0 %2260, %v1792
        %v2262 = vpop.permute.xlu0 %2261
        %2265 = vset.pattern.permute.xlu0 0
        %2266 = vperm.xlu0 %2265, %v1793
        %v2267 = vpop.permute.xlu0 %2266
        %2270 = vset.pattern.permute.xlu0 0
        %2271 = vperm.xlu0 %2270, %v1794
        %v2272 = vpop.permute.xlu0 %2271
        %2275 = vset.pattern.permute.xlu0 0
        %2276 = vperm.xlu0 %2275, %v1795
        %v2277 = vpop.permute.xlu0 %2276
        %2280 = vset.pattern.permute.xlu0 0
        %2281 = vperm.xlu0 %2280, %v1796
        %v2282 = vpop.permute.xlu0 %2281
        %2285 = vset.pattern.permute.xlu0 0
        %2286 = vperm.xlu0 %2285, %v1797
        %v2287 = vpop.permute.xlu0 %2286
        %v2289 = vadd.f32 %v2233, %v2252
        %v2290 = vadd.f32 %v2234, %v2252
        %v2291 = vadd.f32 %v2235, %v2257
        %v2292 = vadd.f32 %v2236, %v2257
        %v2293 = vadd.f32 %v2237, %v2262
        %v2294 = vadd.f32 %v2238, %v2262
        %v2295 = vadd.f32 %v2239, %v2267
        %v2296 = vadd.f32 %v2240, %v2267
        %v2297 = vadd.f32 %v2241, %v2272
        %v2298 = vadd.f32 %v2242, %v2272
        %v2299 = vadd.f32 %v2243, %v2277
        %v2300 = vadd.f32 %v2244, %v2277
        %v2301 = vadd.f32 %v2245, %v2282
        %v2302 = vadd.f32 %v2246, %v2282
        %v2303 = vadd.f32 %v2247, %v2287
        %v2304 = vadd.f32 %v2248, %v2287
        %v2305 = vsub.f32 0.0, %v2289
        %v2306 = vsub.f32 0.0, %v2290
        %v2307 = vsub.f32 0.0, %v2291
        %v2308 = vsub.f32 0.0, %v2292
        %v2309 = vsub.f32 0.0, %v2293
        %v2310 = vsub.f32 0.0, %v2294
        %v2311 = vsub.f32 0.0, %v2295
        %v2312 = vsub.f32 0.0, %v2296
        %v2313 = vsub.f32 0.0, %v2297
        %v2314 = vsub.f32 0.0, %v2298
        %v2315 = vsub.f32 0.0, %v2299
        %v2316 = vsub.f32 0.0, %v2300
        %v2317 = vsub.f32 0.0, %v2301
        %v2318 = vsub.f32 0.0, %v2302
        %v2319 = vsub.f32 0.0, %v2303
        %v2320 = vsub.f32 0.0, %v2304
        %v2321 = vmul.f32 %v2305, 1.442695
        %v2322 = vpow.pop %v2321
        %v2323 = vmul.f32 %v2306, 1.442695
        %v2324 = vpow.pop %v2323
        %v2325 = vmul.f32 %v2307, 1.442695
        %v2326 = vpow.pop %v2325
        %v2327 = vmul.f32 %v2308, 1.442695
        %v2328 = vpow.pop %v2327
        %v2329 = vmul.f32 %v2309, 1.442695
        %v2330 = vpow.pop %v2329
        %v2331 = vmul.f32 %v2310, 1.442695
        %v2332 = vpow.pop %v2331
        %v2333 = vmul.f32 %v2311, 1.442695
        %v2334 = vpow.pop %v2333
        %v2335 = vmul.f32 %v2312, 1.442695
        %v2336 = vpow.pop %v2335
        %v2337 = vmul.f32 %v2313, 1.442695
        %v2338 = vpow.pop %v2337
        %v2339 = vmul.f32 %v2314, 1.442695
        %v2340 = vpow.pop %v2339
        %v2341 = vmul.f32 %v2315, 1.442695
        %v2342 = vpow.pop %v2341
        %v2343 = vmul.f32 %v2316, 1.442695
        %v2344 = vpow.pop %v2343
        %v2345 = vmul.f32 %v2317, 1.442695
        %v2346 = vpow.pop %v2345
        %v2347 = vmul.f32 %v2318, 1.442695
        %v2348 = vpow.pop %v2347
        %v2349 = vmul.f32 %v2319, 1.442695
        %v2350 = vpow.pop %v2349
        %v2351 = vmul.f32 %v2320, 1.442695
        %v2352 = vpow.pop %v2351
        %v2353 = vadd.f32 %v2322, 1.0
        %v2354 = vadd.f32 %v2324, 1.0
        %v2355 = vadd.f32 %v2326, 1.0
        %v2356 = vadd.f32 %v2328, 1.0
        %v2357 = vadd.f32 %v2330, 1.0
        %v2358 = vadd.f32 %v2332, 1.0
        %v2359 = vadd.f32 %v2334, 1.0
        %v2360 = vadd.f32 %v2336, 1.0
        %v2361 = vadd.f32 %v2338, 1.0
        %v2362 = vadd.f32 %v2340, 1.0
        %v2363 = vadd.f32 %v2342, 1.0
        %v2364 = vadd.f32 %v2344, 1.0
        %v2365 = vadd.f32 %v2346, 1.0
        %v2366 = vadd.f32 %v2348, 1.0
        %v2367 = vadd.f32 %v2350, 1.0
        %v2368 = vadd.f32 %v2352, 1.0
        %v2369 = vrcp.pop %v2353
        %v2370 = vmul.f32 %v2353, %v2369
        %v2371 = vsub.f32 1.0, %v2370
        %v2372 = vmul.f32 %v2369, %v2371
        %v2373 = vadd.f32 %v2369, %v2372
        %vm2374 = vweird.f32 %v2353
        %vm2375 = vweird.f32 %v2369
        %vm2376 = vmor %vm2374, %vm2375
        %v2377 = vsel %vm2376, %v2369, %v2373
        %v2378 = vand.u32 2147483647, %v2353
        %vm2379 = vcmp.eq.f32.partialorder %v2378, 8.507059e+37
        %v2380 = vand.u32 %v2353, 2147483648
        %v2381 = vor.u32 1.1754944e-38, %v2380
        %v2382 = vsel %vm2379, %v2381, %v2377
        %v2383 = vmul.f32 1.0, %v2382
        %v2384 = vrcp.pop %v2354
        %v2385 = vmul.f32 %v2354, %v2384
        %v2386 = vsub.f32 1.0, %v2385
        %v2387 = vmul.f32 %v2384, %v2386
        %v2388 = vadd.f32 %v2384, %v2387
        %vm2389 = vweird.f32 %v2354
        %vm2390 = vweird.f32 %v2384
        %vm2391 = vmor %vm2389, %vm2390
        %v2392 = vsel %vm2391, %v2384, %v2388
        %v2393 = vand.u32 2147483647, %v2354
        %vm2394 = vcmp.eq.f32.partialorder %v2393, 8.507059e+37
        %v2395 = vand.u32 %v2354, 2147483648
        %v2396 = vor.u32 1.1754944e-38, %v2395
        %v2397 = vsel %vm2394, %v2396, %v2392
        %v2398 = vmul.f32 1.0, %v2397
        %v2399 = vrcp.pop %v2355
        %v2400 = vmul.f32 %v2355, %v2399
        %v2401 = vsub.f32 1.0, %v2400
        %v2402 = vmul.f32 %v2399, %v2401
        %v2403 = vadd.f32 %v2399, %v2402
        %vm2404 = vweird.f32 %v2355
        %vm2405 = vweird.f32 %v2399
        %vm2406 = vmor %vm2404, %vm2405
        %v2407 = vsel %vm2406, %v2399, %v2403
        %v2408 = vand.u32 2147483647, %v2355
        %vm2409 = vcmp.eq.f32.partialorder %v2408, 8.507059e+37
        %v2410 = vand.u32 %v2355, 2147483648
        %v2411 = vor.u32 1.1754944e-38, %v2410
        %v2412 = vsel %vm2409, %v2411, %v2407
        %v2413 = vmul.f32 1.0, %v2412
        %v2414 = vrcp.pop %v2356
        %v2415 = vmul.f32 %v2356, %v2414
        %v2416 = vsub.f32 1.0, %v2415
        %v2417 = vmul.f32 %v2414, %v2416
        %v2418 = vadd.f32 %v2414, %v2417
        %vm2419 = vweird.f32 %v2356
        %vm2420 = vweird.f32 %v2414
        %vm2421 = vmor %vm2419, %vm2420
        %v2422 = vsel %vm2421, %v2414, %v2418
        %v2423 = vand.u32 2147483647, %v2356
        %vm2424 = vcmp.eq.f32.partialorder %v2423, 8.507059e+37
        %v2425 = vand.u32 %v2356, 2147483648
        %v2426 = vor.u32 1.1754944e-38, %v2425
        %v2427 = vsel %vm2424, %v2426, %v2422
        %v2428 = vmul.f32 1.0, %v2427
        %v2429 = vrcp.pop %v2357
        %v2430 = vmul.f32 %v2357, %v2429
        %v2431 = vsub.f32 1.0, %v2430
        %v2432 = vmul.f32 %v2429, %v2431
        %v2433 = vadd.f32 %v2429, %v2432
        %vm2434 = vweird.f32 %v2357
        %vm2435 = vweird.f32 %v2429
        %vm2436 = vmor %vm2434, %vm2435
        %v2437 = vsel %vm2436, %v2429, %v2433
        %v2438 = vand.u32 2147483647, %v2357
        %vm2439 = vcmp.eq.f32.partialorder %v2438, 8.507059e+37
        %v2440 = vand.u32 %v2357, 2147483648
        %v2441 = vor.u32 1.1754944e-38, %v2440
        %v2442 = vsel %vm2439, %v2441, %v2437
        %v2443 = vmul.f32 1.0, %v2442
        %v2444 = vrcp.pop %v2358
        %v2445 = vmul.f32 %v2358, %v2444
        %v2446 = vsub.f32 1.0, %v2445
        %v2447 = vmul.f32 %v2444, %v2446
        %v2448 = vadd.f32 %v2444, %v2447
        %vm2449 = vweird.f32 %v2358
        %vm2450 = vweird.f32 %v2444
        %vm2451 = vmor %vm2449, %vm2450
        %v2452 = vsel %vm2451, %v2444, %v2448
        %v2453 = vand.u32 2147483647, %v2358
        %vm2454 = vcmp.eq.f32.partialorder %v2453, 8.507059e+37
        %v2455 = vand.u32 %v2358, 2147483648
        %v2456 = vor.u32 1.1754944e-38, %v2455
        %v2457 = vsel %vm2454, %v2456, %v2452
        %v2458 = vmul.f32 1.0, %v2457
        %v2459 = vrcp.pop %v2359
        %v2460 = vmul.f32 %v2359, %v2459
        %v2461 = vsub.f32 1.0, %v2460
        %v2462 = vmul.f32 %v2459, %v2461
        %v2463 = vadd.f32 %v2459, %v2462
        %vm2464 = vweird.f32 %v2359
        %vm2465 = vweird.f32 %v2459
        %vm2466 = vmor %vm2464, %vm2465
        %v2467 = vsel %vm2466, %v2459, %v2463
        %v2468 = vand.u32 2147483647, %v2359
        %vm2469 = vcmp.eq.f32.partialorder %v2468, 8.507059e+37
        %v2470 = vand.u32 %v2359, 2147483648
        %v2471 = vor.u32 1.1754944e-38, %v2470
        %v2472 = vsel %vm2469, %v2471, %v2467
        %v2473 = vmul.f32 1.0, %v2472
        %v2474 = vrcp.pop %v2360
        %v2475 = vmul.f32 %v2360, %v2474
        %v2476 = vsub.f32 1.0, %v2475
        %v2477 = vmul.f32 %v2474, %v2476
        %v2478 = vadd.f32 %v2474, %v2477
        %vm2479 = vweird.f32 %v2360
        %vm2480 = vweird.f32 %v2474
        %vm2481 = vmor %vm2479, %vm2480
        %v2482 = vsel %vm2481, %v2474, %v2478
        %v2483 = vand.u32 2147483647, %v2360
        %vm2484 = vcmp.eq.f32.partialorder %v2483, 8.507059e+37
        %v2485 = vand.u32 %v2360, 2147483648
        %v2486 = vor.u32 1.1754944e-38, %v2485
        %v2487 = vsel %vm2484, %v2486, %v2482
        %v2488 = vmul.f32 1.0, %v2487
        %v2489 = vrcp.pop %v2361
        %v2490 = vmul.f32 %v2361, %v2489
        %v2491 = vsub.f32 1.0, %v2490
        %v2492 = vmul.f32 %v2489, %v2491
        %v2493 = vadd.f32 %v2489, %v2492
        %vm2494 = vweird.f32 %v2361
        %vm2495 = vweird.f32 %v2489
        %vm2496 = vmor %vm2494, %vm2495
        %v2497 = vsel %vm2496, %v2489, %v2493
        %v2498 = vand.u32 2147483647, %v2361
        %vm2499 = vcmp.eq.f32.partialorder %v2498, 8.507059e+37
        %v2500 = vand.u32 %v2361, 2147483648
        %v2501 = vor.u32 1.1754944e-38, %v2500
        %v2502 = vsel %vm2499, %v2501, %v2497
        %v2503 = vmul.f32 1.0, %v2502
        %v2504 = vrcp.pop %v2362
        %v2505 = vmul.f32 %v2362, %v2504
        %v2506 = vsub.f32 1.0, %v2505
        %v2507 = vmul.f32 %v2504, %v2506
        %v2508 = vadd.f32 %v2504, %v2507
        %vm2509 = vweird.f32 %v2362
        %vm2510 = vweird.f32 %v2504
        %vm2511 = vmor %vm2509, %vm2510
        %v2512 = vsel %vm2511, %v2504, %v2508
        %v2513 = vand.u32 2147483647, %v2362
        %vm2514 = vcmp.eq.f32.partialorder %v2513, 8.507059e+37
        %v2515 = vand.u32 %v2362, 2147483648
        %v2516 = vor.u32 1.1754944e-38, %v2515
        %v2517 = vsel %vm2514, %v2516, %v2512
        %v2518 = vmul.f32 1.0, %v2517
        %v2519 = vrcp.pop %v2363
        %v2520 = vmul.f32 %v2363, %v2519
        %v2521 = vsub.f32 1.0, %v2520
        %v2522 = vmul.f32 %v2519, %v2521
        %v2523 = vadd.f32 %v2519, %v2522
        %vm2524 = vweird.f32 %v2363
        %vm2525 = vweird.f32 %v2519
        %vm2526 = vmor %vm2524, %vm2525
        %v2527 = vsel %vm2526, %v2519, %v2523
        %v2528 = vand.u32 2147483647, %v2363
        %vm2529 = vcmp.eq.f32.partialorder %v2528, 8.507059e+37
        %v2530 = vand.u32 %v2363, 2147483648
        %v2531 = vor.u32 1.1754944e-38, %v2530
        %v2532 = vsel %vm2529, %v2531, %v2527
        %v2533 = vmul.f32 1.0, %v2532
        %v2534 = vrcp.pop %v2364
        %v2535 = vmul.f32 %v2364, %v2534
        %v2536 = vsub.f32 1.0, %v2535
        %v2537 = vmul.f32 %v2534, %v2536
        %v2538 = vadd.f32 %v2534, %v2537
        %vm2539 = vweird.f32 %v2364
        %vm2540 = vweird.f32 %v2534
        %vm2541 = vmor %vm2539, %vm2540
        %v2542 = vsel %vm2541, %v2534, %v2538
        %v2543 = vand.u32 2147483647, %v2364
        %vm2544 = vcmp.eq.f32.partialorder %v2543, 8.507059e+37
        %v2545 = vand.u32 %v2364, 2147483648
        %v2546 = vor.u32 1.1754944e-38, %v2545
        %v2547 = vsel %vm2544, %v2546, %v2542
        %v2548 = vmul.f32 1.0, %v2547
        %v2549 = vrcp.pop %v2365
        %v2550 = vmul.f32 %v2365, %v2549
        %v2551 = vsub.f32 1.0, %v2550
        %v2552 = vmul.f32 %v2549, %v2551
        %v2553 = vadd.f32 %v2549, %v2552
        %vm2554 = vweird.f32 %v2365
        %vm2555 = vweird.f32 %v2549
        %vm2556 = vmor %vm2554, %vm2555
        %v2557 = vsel %vm2556, %v2549, %v2553
        %v2558 = vand.u32 2147483647, %v2365
        %vm2559 = vcmp.eq.f32.partialorder %v2558, 8.507059e+37
        %v2560 = vand.u32 %v2365, 2147483648
        %v2561 = vor.u32 1.1754944e-38, %v2560
        %v2562 = vsel %vm2559, %v2561, %v2557
        %v2563 = vmul.f32 1.0, %v2562
        %v2564 = vrcp.pop %v2366
        %v2565 = vmul.f32 %v2366, %v2564
        %v2566 = vsub.f32 1.0, %v2565
        %v2567 = vmul.f32 %v2564, %v2566
        %v2568 = vadd.f32 %v2564, %v2567
        %vm2569 = vweird.f32 %v2366
        %vm2570 = vweird.f32 %v2564
        %vm2571 = vmor %vm2569, %vm2570
        %v2572 = vsel %vm2571, %v2564, %v2568
        %v2573 = vand.u32 2147483647, %v2366
        %vm2574 = vcmp.eq.f32.partialorder %v2573, 8.507059e+37
        %v2575 = vand.u32 %v2366, 2147483648
        %v2576 = vor.u32 1.1754944e-38, %v2575
        %v2577 = vsel %vm2574, %v2576, %v2572
        %v2578 = vmul.f32 1.0, %v2577
        %v2579 = vrcp.pop %v2367
        %v2580 = vmul.f32 %v2367, %v2579
        %v2581 = vsub.f32 1.0, %v2580
        %v2582 = vmul.f32 %v2579, %v2581
        %v2583 = vadd.f32 %v2579, %v2582
        %vm2584 = vweird.f32 %v2367
        %vm2585 = vweird.f32 %v2579
        %vm2586 = vmor %vm2584, %vm2585
        %v2587 = vsel %vm2586, %v2579, %v2583
        %v2588 = vand.u32 2147483647, %v2367
        %vm2589 = vcmp.eq.f32.partialorder %v2588, 8.507059e+37
        %v2590 = vand.u32 %v2367, 2147483648
        %v2591 = vor.u32 1.1754944e-38, %v2590
        %v2592 = vsel %vm2589, %v2591, %v2587
        %v2593 = vmul.f32 1.0, %v2592
        %v2594 = vrcp.pop %v2368
        %v2595 = vmul.f32 %v2368, %v2594
        %v2596 = vsub.f32 1.0, %v2595
        %v2597 = vmul.f32 %v2594, %v2596
        %v2598 = vadd.f32 %v2594, %v2597
        %vm2599 = vweird.f32 %v2368
        %vm2600 = vweird.f32 %v2594
        %vm2601 = vmor %vm2599, %vm2600
        %v2602 = vsel %vm2601, %v2594, %v2598
        %v2603 = vand.u32 2147483647, %v2368
        %vm2604 = vcmp.eq.f32.partialorder %v2603, 8.507059e+37
        %v2605 = vand.u32 %v2368, 2147483648
        %v2606 = vor.u32 1.1754944e-38, %v2605
        %v2607 = vsel %vm2604, %v2606, %v2602
        %v2608 = vmul.f32 1.0, %v2607
        %v2609 = vmul.f32 %v2289, %v2383
        %v2610 = vmul.f32 %v2290, %v2398
        %v2611 = vmul.f32 %v2291, %v2413
        %v2612 = vmul.f32 %v2292, %v2428
        %v2613 = vmul.f32 %v2293, %v2443
        %v2614 = vmul.f32 %v2294, %v2458
        %v2615 = vmul.f32 %v2295, %v2473
        %v2616 = vmul.f32 %v2296, %v2488
        %v2617 = vmul.f32 %v2297, %v2503
        %v2618 = vmul.f32 %v2298, %v2518
        %v2619 = vmul.f32 %v2299, %v2533
        %v2620 = vmul.f32 %v2300, %v2548
        %v2621 = vmul.f32 %v2301, %v2563
        %v2622 = vmul.f32 %v2302, %v2578
        %v2623 = vmul.f32 %v2303, %v2593
        %v2624 = vmul.f32 %v2304, %v2608
        %2625 = vst [vmem:[#allocation2] sm:$0xff] %v2609
        %2626 = vst [vmem:[#allocation2 + $0x8] sm:$0xff] %v2610
        %2627 = vst [vmem:[#allocation2 + $0x10] sm:$0xff] %v2611
        %2628 = vst [vmem:[#allocation2 + $0x18] sm:$0xff] %v2612
        %2629 = vst [vmem:[#allocation2 + $0x20] sm:$0xff] %v2613
        %2630 = vst [vmem:[#allocation2 + $0x28] sm:$0xff] %v2614
        %2631 = vst [vmem:[#allocation2 + $0x30] sm:$0xff] %v2615
        %2632 = vst [vmem:[#allocation2 + $0x38] sm:$0xff] %v2616
        %2633 = vst [vmem:[#allocation2 + $0x40] sm:$0xff] %v2617
        %2634 = vst [vmem:[#allocation2 + $0x48] sm:$0xff] %v2618
        %2635 = vst [vmem:[#allocation2 + $0x50] sm:$0xff] %v2619
        %2636 = vst [vmem:[#allocation2 + $0x58] sm:$0xff] %v2620
        %2637 = vst [vmem:[#allocation2 + $0x60] sm:$0xff] %v2621
        %2638 = vst [vmem:[#allocation2 + $0x68] sm:$0xff] %v2622
        %2639 = vst [vmem:[#allocation2 + $0x70] sm:$0xff] %v2623
        %2640 = vst [vmem:[#allocation2 + $0x78] sm:$0xff] %v2624
        %v2641 = vld [vmem:[#allocation2] sm:$0xff]
        %v2642 = vld [vmem:[#allocation2 + $0x8] sm:$0xff]
        %v2643 = vld [vmem:[#allocation2 + $0x10] sm:$0xff]
        %v2644 = vld [vmem:[#allocation2 + $0x18] sm:$0xff]
        %v2645 = vld [vmem:[#allocation2 + $0x20] sm:$0xff]
        %v2646 = vld [vmem:[#allocation2 + $0x28] sm:$0xff]
        %v2647 = vld [vmem:[#allocation2 + $0x30] sm:$0xff]
        %v2648 = vld [vmem:[#allocation2 + $0x38] sm:$0xff]
        %v2649 = vld [vmem:[#allocation2 + $0x40] sm:$0xff]
        %v2650 = vld [vmem:[#allocation2 + $0x48] sm:$0xff]
        %v2651 = vld [vmem:[#allocation2 + $0x50] sm:$0xff]
        %v2652 = vld [vmem:[#allocation2 + $0x58] sm:$0xff]
        %v2653 = vld [vmem:[#allocation2 + $0x60] sm:$0xff]
        %v2654 = vld [vmem:[#allocation2 + $0x68] sm:$0xff]
        %v2655 = vld [vmem:[#allocation2 + $0x70] sm:$0xff]
        %v2656 = vld [vmem:[#allocation2 + $0x78] sm:$0xff]
        %2657 = vrot.lane.b32.xlu0 %v2641, 17
        %v2658 = vpop.permute.xlu0 %2657
        %2659 = vrot.lane.b32.xlu0 %v2643, 17
        %v2660 = vpop.permute.xlu0 %2659
        %2661 = vrot.lane.b32.xlu0 %v2645, 17
        %v2662 = vpop.permute.xlu0 %2661
        %2663 = vrot.lane.b32.xlu0 %v2647, 17
        %v2664 = vpop.permute.xlu0 %2663
        %2665 = vrot.lane.b32.xlu0 %v2649, 17
        %v2666 = vpop.permute.xlu0 %2665
        %2667 = vrot.lane.b32.xlu0 %v2651, 17
        %v2668 = vpop.permute.xlu0 %2667
        %2669 = vrot.lane.b32.xlu0 %v2653, 17
        %v2670 = vpop.permute.xlu0 %2669
        %2671 = vrot.lane.b32.xlu0 %v2655, 17
        %v2672 = vpop.permute.xlu0 %2671
        %2673 = vrot.lane.b32.xlu0 %v2642, 17
        %v2674 = vpop.permute.xlu0 %2673
        %2675 = vrot.lane.b32.xlu0 %v2644, 17
        %v2676 = vpop.permute.xlu0 %2675
        %2677 = vrot.lane.b32.xlu0 %v2646, 17
        %v2678 = vpop.permute.xlu0 %2677
        %2679 = vrot.lane.b32.xlu0 %v2648, 17
        %v2680 = vpop.permute.xlu0 %2679
        %2681 = vrot.lane.b32.xlu0 %v2650, 17
        %v2682 = vpop.permute.xlu0 %2681
        %2683 = vrot.lane.b32.xlu0 %v2652, 17
        %v2684 = vpop.permute.xlu0 %2683
        %2685 = vrot.lane.b32.xlu0 %v2654, 17
        %v2686 = vpop.permute.xlu0 %2685
        %2687 = vrot.lane.b32.xlu0 %v2656, 17
        %v2688 = vpop.permute.xlu0 %2687
        %v2689 = vsel %vm983, %v2658, %v2674
        %v2690 = vsel %vm983, %v2660, %v2676
        %v2691 = vsel %vm983, %v2662, %v2678
        %v2692 = vsel %vm983, %v2664, %v2680
        %v2693 = vsel %vm983, %v2666, %v2682
        %v2694 = vsel %vm983, %v2668, %v2684
        %v2695 = vsel %vm983, %v2670, %v2686
        %v2696 = vsel %vm983, %v2672, %v2688
        %v2697 = vsel %vm983, %v2674, %v2658
        %v2698 = vsel %vm983, %v2676, %v2660
        %v2699 = vsel %vm983, %v2678, %v2662
        %v2700 = vsel %vm983, %v2680, %v2664
        %v2701 = vsel %vm983, %v2682, %v2666
        %v2702 = vsel %vm983, %v2684, %v2668
        %v2703 = vsel %vm983, %v2686, %v2670
        %v2704 = vsel %vm983, %v2688, %v2672
        %v2705 = vld [vmem:[#allocation5] sm:$0x3]
        %v2707 = vperm.slane %v2705, 0
        %v2708 = vperm.slane %v2705, 1
        %v2711 = vmul.f32 %v2697, %v2707
        %v2712 = vmul.f32 %v2689, %v2708
        %v2713 = vmul.f32 %v2698, %v2707
        %v2714 = vmul.f32 %v2690, %v2708
        %v2715 = vmul.f32 %v2699, %v2707
        %v2716 = vmul.f32 %v2691, %v2708
        %v2717 = vmul.f32 %v2700, %v2707
        %v2718 = vmul.f32 %v2692, %v2708
        %v2719 = vmul.f32 %v2701, %v2707
        %v2720 = vmul.f32 %v2693, %v2708
        %v2721 = vmul.f32 %v2702, %v2707
        %v2722 = vmul.f32 %v2694, %v2708
        %v2723 = vmul.f32 %v2703, %v2707
        %v2724 = vmul.f32 %v2695, %v2708
        %v2725 = vmul.f32 %v2704, %v2707
        %v2726 = vmul.f32 %v2696, %v2708
        %2727 = vst [vmem:[#allocation3] sm:$0xff] %v2711
        %2728 = vst [vmem:[#allocation3 + $0x8] sm:$0xff] %v2712
        %2729 = vst [vmem:[#allocation3 + $0x10] sm:$0xff] %v2713
        %2730 = vst [vmem:[#allocation3 + $0x18] sm:$0xff] %v2714
        %2731 = vst [vmem:[#allocation3 + $0x20] sm:$0xff] %v2715
        %2732 = vst [vmem:[#allocation3 + $0x28] sm:$0xff] %v2716
        %2733 = vst [vmem:[#allocation3 + $0x30] sm:$0xff] %v2717
        %2734 = vst [vmem:[#allocation3 + $0x38] sm:$0xff] %v2718
        %2735 = vst [vmem:[#allocation3 + $0x40] sm:$0xff] %v2719
        %2736 = vst [vmem:[#allocation3 + $0x48] sm:$0xff] %v2720
        %2737 = vst [vmem:[#allocation3 + $0x50] sm:$0xff] %v2721
        %2738 = vst [vmem:[#allocation3 + $0x58] sm:$0xff] %v2722
        %2739 = vst [vmem:[#allocation3 + $0x60] sm:$0xff] %v2723
        %2740 = vst [vmem:[#allocation3 + $0x68] sm:$0xff] %v2724
        %2741 = vst [vmem:[#allocation3 + $0x70] sm:$0xff] %v2725
        %2742 = vst [vmem:[#allocation3 + $0x78] sm:$0xff] %v2726
        %2743 = vrot.lane.b32.xlu0 %v2641, 16
        %v2744 = vpop.permute.xlu0 %2743
        %2745 = vrot.lane.b32.xlu0 %v2643, 16
        %v2746 = vpop.permute.xlu0 %2745
        %2747 = vrot.lane.b32.xlu0 %v2645, 16
        %v2748 = vpop.permute.xlu0 %2747
        %2749 = vrot.lane.b32.xlu0 %v2647, 16
        %v2750 = vpop.permute.xlu0 %2749
        %2751 = vrot.lane.b32.xlu0 %v2649, 16
        %v2752 = vpop.permute.xlu0 %2751
        %2753 = vrot.lane.b32.xlu0 %v2651, 16
        %v2754 = vpop.permute.xlu0 %2753
        %2755 = vrot.lane.b32.xlu0 %v2653, 16
        %v2756 = vpop.permute.xlu0 %2755
        %2757 = vrot.lane.b32.xlu0 %v2655, 16
        %v2758 = vpop.permute.xlu0 %2757
        %2759 = vrot.lane.b32.xlu0 %v2642, 16
        %v2760 = vpop.permute.xlu0 %2759
        %2761 = vrot.lane.b32.xlu0 %v2644, 16
        %v2762 = vpop.permute.xlu0 %2761
        %2763 = vrot.lane.b32.xlu0 %v2646, 16
        %v2764 = vpop.permute.xlu0 %2763
        %2765 = vrot.lane.b32.xlu0 %v2648, 16
        %v2766 = vpop.permute.xlu0 %2765
        %2767 = vrot.lane.b32.xlu0 %v2650, 16
        %v2768 = vpop.permute.xlu0 %2767
        %2769 = vrot.lane.b32.xlu0 %v2652, 16
        %v2770 = vpop.permute.xlu0 %2769
        %2771 = vrot.lane.b32.xlu0 %v2654, 16
        %v2772 = vpop.permute.xlu0 %2771
        %2773 = vrot.lane.b32.xlu0 %v2656, 16
        %v2774 = vpop.permute.xlu0 %2773
        %v2775 = vsel %vm1030, %v2744, %v2760
        %v2776 = vsel %vm1030, %v2746, %v2762
        %v2777 = vsel %vm1030, %v2748, %v2764
        %v2778 = vsel %vm1030, %v2750, %v2766
        %v2779 = vsel %vm1030, %v2752, %v2768
        %v2780 = vsel %vm1030, %v2754, %v2770
        %v2781 = vsel %vm1030, %v2756, %v2772
        %v2782 = vsel %vm1030, %v2758, %v2774
        %v2783 = vsel %vm1030, %v2760, %v2744
        %v2784 = vsel %vm1030, %v2762, %v2746
        %v2785 = vsel %vm1030, %v2764, %v2748
        %v2786 = vsel %vm1030, %v2766, %v2750
        %v2787 = vsel %vm1030, %v2768, %v2752
        %v2788 = vsel %vm1030, %v2770, %v2754
        %v2789 = vsel %vm1030, %v2772, %v2756
        %v2790 = vsel %vm1030, %v2774, %v2758
        %v2791 = vld [vmem:[%s1039] sm:$0x3]
        %v2793 = vperm.slane %v2791, 0
        %v2794 = vperm.slane %v2791, 1
        %v2797 = vmul.f32 %v2783, %v2793
        %v2798 = vmul.f32 %v2775, %v2794
        %v2799 = vmul.f32 %v2784, %v2793
        %v2800 = vmul.f32 %v2776, %v2794
        %v2801 = vmul.f32 %v2785, %v2793
        %v2802 = vmul.f32 %v2777, %v2794
        %v2803 = vmul.f32 %v2786, %v2793
        %v2804 = vmul.f32 %v2778, %v2794
        %v2805 = vmul.f32 %v2787, %v2793
        %v2806 = vmul.f32 %v2779, %v2794
        %v2807 = vmul.f32 %v2788, %v2793
        %v2808 = vmul.f32 %v2780, %v2794
        %v2809 = vmul.f32 %v2789, %v2793
        %v2810 = vmul.f32 %v2781, %v2794
        %v2811 = vmul.f32 %v2790, %v2793
        %v2812 = vmul.f32 %v2782, %v2794
        %2813 = vst [vmem:[#allocation3 + $0x80] sm:$0xff] %v2797
        %2814 = vst [vmem:[#allocation3 + $0x88] sm:$0xff] %v2798
        %2815 = vst [vmem:[#allocation3 + $0x90] sm:$0xff] %v2799
        %2816 = vst [vmem:[#allocation3 + $0x98] sm:$0xff] %v2800
        %2817 = vst [vmem:[#allocation3 + $0xa0] sm:$0xff] %v2801
        %2818 = vst [vmem:[#allocation3 + $0xa8] sm:$0xff] %v2802
        %2819 = vst [vmem:[#allocation3 + $0xb0] sm:$0xff] %v2803
        %2820 = vst [vmem:[#allocation3 + $0xb8] sm:$0xff] %v2804
        %2821 = vst [vmem:[#allocation3 + $0xc0] sm:$0xff] %v2805
        %2822 = vst [vmem:[#allocation3 + $0xc8] sm:$0xff] %v2806
        %2823 = vst [vmem:[#allocation3 + $0xd0] sm:$0xff] %v2807
        %2824 = vst [vmem:[#allocation3 + $0xd8] sm:$0xff] %v2808
        %2825 = vst [vmem:[#allocation3 + $0xe0] sm:$0xff] %v2809
        %2826 = vst [vmem:[#allocation3 + $0xe8] sm:$0xff] %v2810
        %2827 = vst [vmem:[#allocation3 + $0xf0] sm:$0xff] %v2811
        %2828 = vst [vmem:[#allocation3 + $0xf8] sm:$0xff] %v2812
        %2829 = vrot.lane.b32.xlu0 %v2641, 15
        %v2830 = vpop.permute.xlu0 %2829
        %2831 = vrot.lane.b32.xlu0 %v2643, 15
        %v2832 = vpop.permute.xlu0 %2831
        %2833 = vrot.lane.b32.xlu0 %v2645, 15
        %v2834 = vpop.permute.xlu0 %2833
        %2835 = vrot.lane.b32.xlu0 %v2647, 15
        %v2836 = vpop.permute.xlu0 %2835
        %2837 = vrot.lane.b32.xlu0 %v2649, 15
        %v2838 = vpop.permute.xlu0 %2837
        %2839 = vrot.lane.b32.xlu0 %v2651, 15
        %v2840 = vpop.permute.xlu0 %2839
        %2841 = vrot.lane.b32.xlu0 %v2653, 15
        %v2842 = vpop.permute.xlu0 %2841
        %2843 = vrot.lane.b32.xlu0 %v2655, 15
        %v2844 = vpop.permute.xlu0 %2843
        %2845 = vrot.lane.b32.xlu0 %v2642, 15
        %v2846 = vpop.permute.xlu0 %2845
        %2847 = vrot.lane.b32.xlu0 %v2644, 15
        %v2848 = vpop.permute.xlu0 %2847
        %2849 = vrot.lane.b32.xlu0 %v2646, 15
        %v2850 = vpop.permute.xlu0 %2849
        %2851 = vrot.lane.b32.xlu0 %v2648, 15
        %v2852 = vpop.permute.xlu0 %2851
        %2853 = vrot.lane.b32.xlu0 %v2650, 15
        %v2854 = vpop.permute.xlu0 %2853
        %2855 = vrot.lane.b32.xlu0 %v2652, 15
        %v2856 = vpop.permute.xlu0 %2855
        %2857 = vrot.lane.b32.xlu0 %v2654, 15
        %v2858 = vpop.permute.xlu0 %2857
        %2859 = vrot.lane.b32.xlu0 %v2656, 15
        %v2860 = vpop.permute.xlu0 %2859
        %v2861 = vsel %vm1078, %v2830, %v2846
        %v2862 = vsel %vm1078, %v2832, %v2848
        %v2863 = vsel %vm1078, %v2834, %v2850
        %v2864 = vsel %vm1078, %v2836, %v2852
        %v2865 = vsel %vm1078, %v2838, %v2854
        %v2866 = vsel %vm1078, %v2840, %v2856
        %v2867 = vsel %vm1078, %v2842, %v2858
        %v2868 = vsel %vm1078, %v2844, %v2860
        %v2869 = vsel %vm1078, %v2846, %v2830
        %v2870 = vsel %vm1078, %v2848, %v2832
        %v2871 = vsel %vm1078, %v2850, %v2834
        %v2872 = vsel %vm1078, %v2852, %v2836
        %v2873 = vsel %vm1078, %v2854, %v2838
        %v2874 = vsel %vm1078, %v2856, %v2840
        %v2875 = vsel %vm1078, %v2858, %v2842
        %v2876 = vsel %vm1078, %v2860, %v2844
        %v2877 = vld [vmem:[%s1087] sm:$0x3]
        %v2879 = vperm.slane %v2877, 0
        %v2880 = vperm.slane %v2877, 1
        %v2883 = vmul.f32 %v2869, %v2879
        %v2884 = vmul.f32 %v2861, %v2880
        %v2885 = vmul.f32 %v2870, %v2879
        %v2886 = vmul.f32 %v2862, %v2880
        %v2887 = vmul.f32 %v2871, %v2879
        %v2888 = vmul.f32 %v2863, %v2880
        %v2889 = vmul.f32 %v2872, %v2879
        %v2890 = vmul.f32 %v2864, %v2880
        %v2891 = vmul.f32 %v2873, %v2879
        %v2892 = vmul.f32 %v2865, %v2880
        %v2893 = vmul.f32 %v2874, %v2879
        %v2894 = vmul.f32 %v2866, %v2880
        %v2895 = vmul.f32 %v2875, %v2879
        %v2896 = vmul.f32 %v2867, %v2880
        %v2897 = vmul.f32 %v2876, %v2879
        %v2898 = vmul.f32 %v2868, %v2880
        %2899 = vst [vmem:[#allocation3 + $0x100] sm:$0xff] %v2883
        %2900 = vst [vmem:[#allocation3 + $0x108] sm:$0xff] %v2884
        %2901 = vst [vmem:[#allocation3 + $0x110] sm:$0xff] %v2885
        %2902 = vst [vmem:[#allocation3 + $0x118] sm:$0xff] %v2886
        %2903 = vst [vmem:[#allocation3 + $0x120] sm:$0xff] %v2887
        %2904 = vst [vmem:[#allocation3 + $0x128] sm:$0xff] %v2888
        %2905 = vst [vmem:[#allocation3 + $0x130] sm:$0xff] %v2889
        %2906 = vst [vmem:[#allocation3 + $0x138] sm:$0xff] %v2890
        %2907 = vst [vmem:[#allocation3 + $0x140] sm:$0xff] %v2891
        %2908 = vst [vmem:[#allocation3 + $0x148] sm:$0xff] %v2892
        %2909 = vst [vmem:[#allocation3 + $0x150] sm:$0xff] %v2893
        %2910 = vst [vmem:[#allocation3 + $0x158] sm:$0xff] %v2894
        %2911 = vst [vmem:[#allocation3 + $0x160] sm:$0xff] %v2895
        %2912 = vst [vmem:[#allocation3 + $0x168] sm:$0xff] %v2896
        %2913 = vst [vmem:[#allocation3 + $0x170] sm:$0xff] %v2897
        %2914 = vst [vmem:[#allocation3 + $0x178] sm:$0xff] %v2898
        %2915 = vrot.lane.b32.xlu0 %v2641, 1
        %v2916 = vpop.permute.xlu0 %2915
        %2917 = vrot.lane.b32.xlu0 %v2643, 1
        %v2918 = vpop.permute.xlu0 %2917
        %2919 = vrot.lane.b32.xlu0 %v2645, 1
        %v2920 = vpop.permute.xlu0 %2919
        %2921 = vrot.lane.b32.xlu0 %v2647, 1
        %v2922 = vpop.permute.xlu0 %2921
        %2923 = vrot.lane.b32.xlu0 %v2649, 1
        %v2924 = vpop.permute.xlu0 %2923
        %2925 = vrot.lane.b32.xlu0 %v2651, 1
        %v2926 = vpop.permute.xlu0 %2925
        %2927 = vrot.lane.b32.xlu0 %v2653, 1
        %v2928 = vpop.permute.xlu0 %2927
        %2929 = vrot.lane.b32.xlu0 %v2655, 1
        %v2930 = vpop.permute.xlu0 %2929
        %2931 = vrot.lane.b32.xlu0 %v2642, 1
        %v2932 = vpop.permute.xlu0 %2931
        %2933 = vrot.lane.b32.xlu0 %v2644, 1
        %v2934 = vpop.permute.xlu0 %2933
        %2935 = vrot.lane.b32.xlu0 %v2646, 1
        %v2936 = vpop.permute.xlu0 %2935
        %2937 = vrot.lane.b32.xlu0 %v2648, 1
        %v2938 = vpop.permute.xlu0 %2937
        %2939 = vrot.lane.b32.xlu0 %v2650, 1
        %v2940 = vpop.permute.xlu0 %2939
        %2941 = vrot.lane.b32.xlu0 %v2652, 1
        %v2942 = vpop.permute.xlu0 %2941
        %2943 = vrot.lane.b32.xlu0 %v2654, 1
        %v2944 = vpop.permute.xlu0 %2943
        %2945 = vrot.lane.b32.xlu0 %v2656, 1
        %v2946 = vpop.permute.xlu0 %2945
        %v2947 = vsel %vm1126, %v2916, %v2932
        %v2948 = vsel %vm1126, %v2918, %v2934
        %v2949 = vsel %vm1126, %v2920, %v2936
        %v2950 = vsel %vm1126, %v2922, %v2938
        %v2951 = vsel %vm1126, %v2924, %v2940
        %v2952 = vsel %vm1126, %v2926, %v2942
        %v2953 = vsel %vm1126, %v2928, %v2944
        %v2954 = vsel %vm1126, %v2930, %v2946
        %v2955 = vsel %vm1126, %v2932, %v2916
        %v2956 = vsel %vm1126, %v2934, %v2918
        %v2957 = vsel %vm1126, %v2936, %v2920
        %v2958 = vsel %vm1126, %v2938, %v2922
        %v2959 = vsel %vm1126, %v2940, %v2924
        %v2960 = vsel %vm1126, %v2942, %v2926
        %v2961 = vsel %vm1126, %v2944, %v2928
        %v2962 = vsel %vm1126, %v2946, %v2930
        %v2963 = vld [vmem:[%s1135] sm:$0x3]
        %v2965 = vperm.slane %v2963, 0
        %v2966 = vperm.slane %v2963, 1
        %v2969 = vmul.f32 %v2955, %v2965
        %v2970 = vmul.f32 %v2947, %v2966
        %v2971 = vmul.f32 %v2956, %v2965
        %v2972 = vmul.f32 %v2948, %v2966
        %v2973 = vmul.f32 %v2957, %v2965
        %v2974 = vmul.f32 %v2949, %v2966
        %v2975 = vmul.f32 %v2958, %v2965
        %v2976 = vmul.f32 %v2950, %v2966
        %v2977 = vmul.f32 %v2959, %v2965
        %v2978 = vmul.f32 %v2951, %v2966
        %v2979 = vmul.f32 %v2960, %v2965
        %v2980 = vmul.f32 %v2952, %v2966
        %v2981 = vmul.f32 %v2961, %v2965
        %v2982 = vmul.f32 %v2953, %v2966
        %v2983 = vmul.f32 %v2962, %v2965
        %v2984 = vmul.f32 %v2954, %v2966
        %2985 = vst [vmem:[#allocation3 + $0x180] sm:$0xff] %v2969
        %2986 = vst [vmem:[#allocation3 + $0x188] sm:$0xff] %v2970
        %2987 = vst [vmem:[#allocation3 + $0x190] sm:$0xff] %v2971
        %2988 = vst [vmem:[#allocation3 + $0x198] sm:$0xff] %v2972
        %2989 = vst [vmem:[#allocation3 + $0x1a0] sm:$0xff] %v2973
        %2990 = vst [vmem:[#allocation3 + $0x1a8] sm:$0xff] %v2974
        %2991 = vst [vmem:[#allocation3 + $0x1b0] sm:$0xff] %v2975
        %2992 = vst [vmem:[#allocation3 + $0x1b8] sm:$0xff] %v2976
        %2993 = vst [vmem:[#allocation3 + $0x1c0] sm:$0xff] %v2977
        %2994 = vst [vmem:[#allocation3 + $0x1c8] sm:$0xff] %v2978
        %2995 = vst [vmem:[#allocation3 + $0x1d0] sm:$0xff] %v2979
        %2996 = vst [vmem:[#allocation3 + $0x1d8] sm:$0xff] %v2980
        %2997 = vst [vmem:[#allocation3 + $0x1e0] sm:$0xff] %v2981
        %2998 = vst [vmem:[#allocation3 + $0x1e8] sm:$0xff] %v2982
        %2999 = vst [vmem:[#allocation3 + $0x1f0] sm:$0xff] %v2983
        %3000 = vst [vmem:[#allocation3 + $0x1f8] sm:$0xff] %v2984
        %3001 = vst [vmem:[#allocation3 + $0x200] sm:$0xff] %v2641
        %3002 = vst [vmem:[#allocation3 + $0x208] sm:$0xff] %v2642
        %3003 = vst [vmem:[#allocation3 + $0x210] sm:$0xff] %v2643
        %3004 = vst [vmem:[#allocation3 + $0x218] sm:$0xff] %v2644
        %3005 = vst [vmem:[#allocation3 + $0x220] sm:$0xff] %v2645
        %3006 = vst [vmem:[#allocation3 + $0x228] sm:$0xff] %v2646
        %3007 = vst [vmem:[#allocation3 + $0x230] sm:$0xff] %v2647
        %3008 = vst [vmem:[#allocation3 + $0x238] sm:$0xff] %v2648
        %3009 = vst [vmem:[#allocation3 + $0x240] sm:$0xff] %v2649
        %3010 = vst [vmem:[#allocation3 + $0x248] sm:$0xff] %v2650
        %3011 = vst [vmem:[#allocation3 + $0x250] sm:$0xff] %v2651
        %3012 = vst [vmem:[#allocation3 + $0x258] sm:$0xff] %v2652
        %3013 = vst [vmem:[#allocation3 + $0x260] sm:$0xff] %v2653
        %3014 = vst [vmem:[#allocation3 + $0x268] sm:$0xff] %v2654
        %3015 = vst [vmem:[#allocation3 + $0x270] sm:$0xff] %v2655
        %3016 = vst [vmem:[#allocation3 + $0x278] sm:$0xff] %v2656
        %3017 = vrot.lane.b32.xlu0 %v2641, 127
        %v3018 = vpop.permute.xlu0 %3017
        %3019 = vrot.lane.b32.xlu0 %v2643, 127
        %v3020 = vpop.permute.xlu0 %3019
        %3021 = vrot.lane.b32.xlu0 %v2645, 127
        %v3022 = vpop.permute.xlu0 %3021
        %3023 = vrot.lane.b32.xlu0 %v2647, 127
        %v3024 = vpop.permute.xlu0 %3023
        %3025 = vrot.lane.b32.xlu0 %v2649, 127
        %v3026 = vpop.permute.xlu0 %3025
        %3027 = vrot.lane.b32.xlu0 %v2651, 127
        %v3028 = vpop.permute.xlu0 %3027
        %3029 = vrot.lane.b32.xlu0 %v2653, 127
        %v3030 = vpop.permute.xlu0 %3029
        %3031 = vrot.lane.b32.xlu0 %v2655, 127
        %v3032 = vpop.permute.xlu0 %3031
        %3033 = vrot.lane.b32.xlu0 %v2642, 127
        %v3034 = vpop.permute.xlu0 %3033
        %3035 = vrot.lane.b32.xlu0 %v2644, 127
        %v3036 = vpop.permute.xlu0 %3035
        %3037 = vrot.lane.b32.xlu0 %v2646, 127
        %v3038 = vpop.permute.xlu0 %3037
        %3039 = vrot.lane.b32.xlu0 %v2648, 127
        %v3040 = vpop.permute.xlu0 %3039
        %3041 = vrot.lane.b32.xlu0 %v2650, 127
        %v3042 = vpop.permute.xlu0 %3041
        %3043 = vrot.lane.b32.xlu0 %v2652, 127
        %v3044 = vpop.permute.xlu0 %3043
        %3045 = vrot.lane.b32.xlu0 %v2654, 127
        %v3046 = vpop.permute.xlu0 %3045
        %3047 = vrot.lane.b32.xlu0 %v2656, 127
        %v3048 = vpop.permute.xlu0 %3047
        %v3049 = vsel %vm1182, %v3018, %v3034
        %v3050 = vsel %vm1182, %v3020, %v3036
        %v3051 = vsel %vm1182, %v3022, %v3038
        %v3052 = vsel %vm1182, %v3024, %v3040
        %v3053 = vsel %vm1182, %v3026, %v3042
        %v3054 = vsel %vm1182, %v3028, %v3044
        %v3055 = vsel %vm1182, %v3030, %v3046
        %v3056 = vsel %vm1182, %v3032, %v3048
        %v3057 = vsel %vm1182, %v3034, %v3018
        %v3058 = vsel %vm1182, %v3036, %v3020
        %v3059 = vsel %vm1182, %v3038, %v3022
        %v3060 = vsel %vm1182, %v3040, %v3024
        %v3061 = vsel %vm1182, %v3042, %v3026
        %v3062 = vsel %vm1182, %v3044, %v3028
        %v3063 = vsel %vm1182, %v3046, %v3030
        %v3064 = vsel %vm1182, %v3048, %v3032
        %v3065 = vld [vmem:[%s1191] sm:$0x3]
        %v3067 = vperm.slane %v3065, 0
        %v3068 = vperm.slane %v3065, 1
        %v3071 = vmul.f32 %v3049, %v3067
        %v3072 = vmul.f32 %v3057, %v3068
        %v3073 = vmul.f32 %v3050, %v3067
        %v3074 = vmul.f32 %v3058, %v3068
        %v3075 = vmul.f32 %v3051, %v3067
        %v3076 = vmul.f32 %v3059, %v3068
        %v3077 = vmul.f32 %v3052, %v3067
        %v3078 = vmul.f32 %v3060, %v3068
        %v3079 = vmul.f32 %v3053, %v3067
        %v3080 = vmul.f32 %v3061, %v3068
        %v3081 = vmul.f32 %v3054, %v3067
        %v3082 = vmul.f32 %v3062, %v3068
        %v3083 = vmul.f32 %v3055, %v3067
        %v3084 = vmul.f32 %v3063, %v3068
        %v3085 = vmul.f32 %v3056, %v3067
        %v3086 = vmul.f32 %v3064, %v3068
        %3087 = vst [vmem:[#allocation3 + $0x280] sm:$0xff] %v3071
        %3088 = vst [vmem:[#allocation3 + $0x288] sm:$0xff] %v3072
        %3089 = vst [vmem:[#allocation3 + $0x290] sm:$0xff] %v3073
        %3090 = vst [vmem:[#allocation3 + $0x298] sm:$0xff] %v3074
        %3091 = vst [vmem:[#allocation3 + $0x2a0] sm:$0xff] %v3075
        %3092 = vst [vmem:[#allocation3 + $0x2a8] sm:$0xff] %v3076
        %3093 = vst [vmem:[#allocation3 + $0x2b0] sm:$0xff] %v3077
        %3094 = vst [vmem:[#allocation3 + $0x2b8] sm:$0xff] %v3078
        %3095 = vst [vmem:[#allocation3 + $0x2c0] sm:$0xff] %v3079
        %3096 = vst [vmem:[#allocation3 + $0x2c8] sm:$0xff] %v3080
        %3097 = vst [vmem:[#allocation3 + $0x2d0] sm:$0xff] %v3081
        %3098 = vst [vmem:[#allocation3 + $0x2d8] sm:$0xff] %v3082
        %3099 = vst [vmem:[#allocation3 + $0x2e0] sm:$0xff] %v3083
        %3100 = vst [vmem:[#allocation3 + $0x2e8] sm:$0xff] %v3084
        %3101 = vst [vmem:[#allocation3 + $0x2f0] sm:$0xff] %v3085
        %3102 = vst [vmem:[#allocation3 + $0x2f8] sm:$0xff] %v3086
        %3103 = vrot.lane.b32.xlu0 %v2641, 113
        %v3104 = vpop.permute.xlu0 %3103
        %3105 = vrot.lane.b32.xlu0 %v2643, 113
        %v3106 = vpop.permute.xlu0 %3105
        %3107 = vrot.lane.b32.xlu0 %v2645, 113
        %v3108 = vpop.permute.xlu0 %3107
        %3109 = vrot.lane.b32.xlu0 %v2647, 113
        %v3110 = vpop.permute.xlu0 %3109
        %3111 = vrot.lane.b32.xlu0 %v2649, 113
        %v3112 = vpop.permute.xlu0 %3111
        %3113 = vrot.lane.b32.xlu0 %v2651, 113
        %v3114 = vpop.permute.xlu0 %3113
        %3115 = vrot.lane.b32.xlu0 %v2653, 113
        %v3116 = vpop.permute.xlu0 %3115
        %3117 = vrot.lane.b32.xlu0 %v2655, 113
        %v3118 = vpop.permute.xlu0 %3117
        %3119 = vrot.lane.b32.xlu0 %v2642, 113
        %v3120 = vpop.permute.xlu0 %3119
        %3121 = vrot.lane.b32.xlu0 %v2644, 113
        %v3122 = vpop.permute.xlu0 %3121
        %3123 = vrot.lane.b32.xlu0 %v2646, 113
        %v3124 = vpop.permute.xlu0 %3123
        %3125 = vrot.lane.b32.xlu0 %v2648, 113
        %v3126 = vpop.permute.xlu0 %3125
        %3127 = vrot.lane.b32.xlu0 %v2650, 113
        %v3128 = vpop.permute.xlu0 %3127
        %3129 = vrot.lane.b32.xlu0 %v2652, 113
        %v3130 = vpop.permute.xlu0 %3129
        %3131 = vrot.lane.b32.xlu0 %v2654, 113
        %v3132 = vpop.permute.xlu0 %3131
        %3133 = vrot.lane.b32.xlu0 %v2656, 113
        %v3134 = vpop.permute.xlu0 %3133
        %v3135 = vsel %vm1230, %v3104, %v3120
        %v3136 = vsel %vm1230, %v3106, %v3122
        %v3137 = vsel %vm1230, %v3108, %v3124
        %v3138 = vsel %vm1230, %v3110, %v3126
        %v3139 = vsel %vm1230, %v3112, %v3128
        %v3140 = vsel %vm1230, %v3114, %v3130
        %v3141 = vsel %vm1230, %v3116, %v3132
        %v3142 = vsel %vm1230, %v3118, %v3134
        %v3143 = vsel %vm1230, %v3120, %v3104
        %v3144 = vsel %vm1230, %v3122, %v3106
        %v3145 = vsel %vm1230, %v3124, %v3108
        %v3146 = vsel %vm1230, %v3126, %v3110
        %v3147 = vsel %vm1230, %v3128, %v3112
        %v3148 = vsel %vm1230, %v3130, %v3114
        %v3149 = vsel %vm1230, %v3132, %v3116
        %v3150 = vsel %vm1230, %v3134, %v3118
        %v3151 = vld [vmem:[%s1239] sm:$0x3]
        %v3153 = vperm.slane %v3151, 0
        %v3154 = vperm.slane %v3151, 1
        %v3157 = vmul.f32 %v3135, %v3153
        %v3158 = vmul.f32 %v3143, %v3154
        %v3159 = vmul.f32 %v3136, %v3153
        %v3160 = vmul.f32 %v3144, %v3154
        %v3161 = vmul.f32 %v3137, %v3153
        %v3162 = vmul.f32 %v3145, %v3154
        %v3163 = vmul.f32 %v3138, %v3153
        %v3164 = vmul.f32 %v3146, %v3154
        %v3165 = vmul.f32 %v3139, %v3153
        %v3166 = vmul.f32 %v3147, %v3154
        %v3167 = vmul.f32 %v3140, %v3153
        %v3168 = vmul.f32 %v3148, %v3154
        %v3169 = vmul.f32 %v3141, %v3153
        %v3170 = vmul.f32 %v3149, %v3154
        %v3171 = vmul.f32 %v3142, %v3153
        %v3172 = vmul.f32 %v3150, %v3154
        %3173 = vst [vmem:[#allocation3 + $0x300] sm:$0xff] %v3157
        %3174 = vst [vmem:[#allocation3 + $0x308] sm:$0xff] %v3158
        %3175 = vst [vmem:[#allocation3 + $0x310] sm:$0xff] %v3159
        %3176 = vst [vmem:[#allocation3 + $0x318] sm:$0xff] %v3160
        %3177 = vst [vmem:[#allocation3 + $0x320] sm:$0xff] %v3161
        %3178 = vst [vmem:[#allocation3 + $0x328] sm:$0xff] %v3162
        %3179 = vst [vmem:[#allocation3 + $0x330] sm:$0xff] %v3163
        %3180 = vst [vmem:[#allocation3 + $0x338] sm:$0xff] %v3164
        %3181 = vst [vmem:[#allocation3 + $0x340] sm:$0xff] %v3165
        %3182 = vst [vmem:[#allocation3 + $0x348] sm:$0xff] %v3166
        %3183 = vst [vmem:[#allocation3 + $0x350] sm:$0xff] %v3167
        %3184 = vst [vmem:[#allocation3 + $0x358] sm:$0xff] %v3168
        %3185 = vst [vmem:[#allocation3 + $0x360] sm:$0xff] %v3169
        %3186 = vst [vmem:[#allocation3 + $0x368] sm:$0xff] %v3170
        %3187 = vst [vmem:[#allocation3 + $0x370] sm:$0xff] %v3171
        %3188 = vst [vmem:[#allocation3 + $0x378] sm:$0xff] %v3172
        %3189 = vrot.lane.b32.xlu0 %v2641, 112
        %v3190 = vpop.permute.xlu0 %3189
        %3191 = vrot.lane.b32.xlu0 %v2643, 112
        %v3192 = vpop.permute.xlu0 %3191
        %3193 = vrot.lane.b32.xlu0 %v2645, 112
        %v3194 = vpop.permute.xlu0 %3193
        %3195 = vrot.lane.b32.xlu0 %v2647, 112
        %v3196 = vpop.permute.xlu0 %3195
        %3197 = vrot.lane.b32.xlu0 %v2649, 112
        %v3198 = vpop.permute.xlu0 %3197
        %3199 = vrot.lane.b32.xlu0 %v2651, 112
        %v3200 = vpop.permute.xlu0 %3199
        %3201 = vrot.lane.b32.xlu0 %v2653, 112
        %v3202 = vpop.permute.xlu0 %3201
        %3203 = vrot.lane.b32.xlu0 %v2655, 112
        %v3204 = vpop.permute.xlu0 %3203
        %3205 = vrot.lane.b32.xlu0 %v2642, 112
        %v3206 = vpop.permute.xlu0 %3205
        %3207 = vrot.lane.b32.xlu0 %v2644, 112
        %v3208 = vpop.permute.xlu0 %3207
        %3209 = vrot.lane.b32.xlu0 %v2646, 112
        %v3210 = vpop.permute.xlu0 %3209
        %3211 = vrot.lane.b32.xlu0 %v2648, 112
        %v3212 = vpop.permute.xlu0 %3211
        %3213 = vrot.lane.b32.xlu0 %v2650, 112
        %v3214 = vpop.permute.xlu0 %3213
        %3215 = vrot.lane.b32.xlu0 %v2652, 112
        %v3216 = vpop.permute.xlu0 %3215
        %3217 = vrot.lane.b32.xlu0 %v2654, 112
        %v3218 = vpop.permute.xlu0 %3217
        %3219 = vrot.lane.b32.xlu0 %v2656, 112
        %v3220 = vpop.permute.xlu0 %3219
        %v3221 = vsel %vm1278, %v3190, %v3206
        %v3222 = vsel %vm1278, %v3192, %v3208
        %v3223 = vsel %vm1278, %v3194, %v3210
        %v3224 = vsel %vm1278, %v3196, %v3212
        %v3225 = vsel %vm1278, %v3198, %v3214
        %v3226 = vsel %vm1278, %v3200, %v3216
        %v3227 = vsel %vm1278, %v3202, %v3218
        %v3228 = vsel %vm1278, %v3204, %v3220
        %v3229 = vsel %vm1278, %v3206, %v3190
        %v3230 = vsel %vm1278, %v3208, %v3192
        %v3231 = vsel %vm1278, %v3210, %v3194
        %v3232 = vsel %vm1278, %v3212, %v3196
        %v3233 = vsel %vm1278, %v3214, %v3198
        %v3234 = vsel %vm1278, %v3216, %v3200
        %v3235 = vsel %vm1278, %v3218, %v3202
        %v3236 = vsel %vm1278, %v3220, %v3204
        %v3237 = vld [vmem:[%s1287] sm:$0x3]
        %v3239 = vperm.slane %v3237, 0
        %v3240 = vperm.slane %v3237, 1
        %v3243 = vmul.f32 %v3221, %v3239
        %v3244 = vmul.f32 %v3229, %v3240
        %v3245 = vmul.f32 %v3222, %v3239
        %v3246 = vmul.f32 %v3230, %v3240
        %v3247 = vmul.f32 %v3223, %v3239
        %v3248 = vmul.f32 %v3231, %v3240
        %v3249 = vmul.f32 %v3224, %v3239
        %v3250 = vmul.f32 %v3232, %v3240
        %v3251 = vmul.f32 %v3225, %v3239
        %v3252 = vmul.f32 %v3233, %v3240
        %v3253 = vmul.f32 %v3226, %v3239
        %v3254 = vmul.f32 %v3234, %v3240
        %v3255 = vmul.f32 %v3227, %v3239
        %v3256 = vmul.f32 %v3235, %v3240
        %v3257 = vmul.f32 %v3228, %v3239
        %v3258 = vmul.f32 %v3236, %v3240
        %3259 = vst [vmem:[#allocation3 + $0x380] sm:$0xff] %v3243
        %3260 = vst [vmem:[#allocation3 + $0x388] sm:$0xff] %v3244
        %3261 = vst [vmem:[#allocation3 + $0x390] sm:$0xff] %v3245
        %3262 = vst [vmem:[#allocation3 + $0x398] sm:$0xff] %v3246
        %3263 = vst [vmem:[#allocation3 + $0x3a0] sm:$0xff] %v3247
        %3264 = vst [vmem:[#allocation3 + $0x3a8] sm:$0xff] %v3248
        %3265 = vst [vmem:[#allocation3 + $0x3b0] sm:$0xff] %v3249
        %3266 = vst [vmem:[#allocation3 + $0x3b8] sm:$0xff] %v3250
        %3267 = vst [vmem:[#allocation3 + $0x3c0] sm:$0xff] %v3251
        %3268 = vst [vmem:[#allocation3 + $0x3c8] sm:$0xff] %v3252
        %3269 = vst [vmem:[#allocation3 + $0x3d0] sm:$0xff] %v3253
        %3270 = vst [vmem:[#allocation3 + $0x3d8] sm:$0xff] %v3254
        %3271 = vst [vmem:[#allocation3 + $0x3e0] sm:$0xff] %v3255
        %3272 = vst [vmem:[#allocation3 + $0x3e8] sm:$0xff] %v3256
        %3273 = vst [vmem:[#allocation3 + $0x3f0] sm:$0xff] %v3257
        %3274 = vst [vmem:[#allocation3 + $0x3f8] sm:$0xff] %v3258
        %3275 = vrot.lane.b32.xlu0 %v2641, 111
        %v3276 = vpop.permute.xlu0 %3275
        %3277 = vrot.lane.b32.xlu0 %v2643, 111
        %v3278 = vpop.permute.xlu0 %3277
        %3279 = vrot.lane.b32.xlu0 %v2645, 111
        %v3280 = vpop.permute.xlu0 %3279
        %3281 = vrot.lane.b32.xlu0 %v2647, 111
        %v3282 = vpop.permute.xlu0 %3281
        %3283 = vrot.lane.b32.xlu0 %v2649, 111
        %v3284 = vpop.permute.xlu0 %3283
        %3285 = vrot.lane.b32.xlu0 %v2651, 111
        %v3286 = vpop.permute.xlu0 %3285
        %3287 = vrot.lane.b32.xlu0 %v2653, 111
        %v3288 = vpop.permute.xlu0 %3287
        %3289 = vrot.lane.b32.xlu0 %v2655, 111
        %v3290 = vpop.permute.xlu0 %3289
        %3291 = vrot.lane.b32.xlu0 %v2642, 111
        %v3292 = vpop.permute.xlu0 %3291
        %3293 = vrot.lane.b32.xlu0 %v2644, 111
        %v3294 = vpop.permute.xlu0 %3293
        %3295 = vrot.lane.b32.xlu0 %v2646, 111
        %v3296 = vpop.permute.xlu0 %3295
        %3297 = vrot.lane.b32.xlu0 %v2648, 111
        %v3298 = vpop.permute.xlu0 %3297
        %3299 = vrot.lane.b32.xlu0 %v2650, 111
        %v3300 = vpop.permute.xlu0 %3299
        %3301 = vrot.lane.b32.xlu0 %v2652, 111
        %v3302 = vpop.permute.xlu0 %3301
        %3303 = vrot.lane.b32.xlu0 %v2654, 111
        %v3304 = vpop.permute.xlu0 %3303
        %3305 = vrot.lane.b32.xlu0 %v2656, 111
        %v3306 = vpop.permute.xlu0 %3305
        %v3307 = vsel %vm1326, %v3276, %v3292
        %v3308 = vsel %vm1326, %v3278, %v3294
        %v3309 = vsel %vm1326, %v3280, %v3296
        %v3310 = vsel %vm1326, %v3282, %v3298
        %v3311 = vsel %vm1326, %v3284, %v3300
        %v3312 = vsel %vm1326, %v3286, %v3302
        %v3313 = vsel %vm1326, %v3288, %v3304
        %v3314 = vsel %vm1326, %v3290, %v3306
        %v3315 = vsel %vm1326, %v3292, %v3276
        %v3316 = vsel %vm1326, %v3294, %v3278
        %v3317 = vsel %vm1326, %v3296, %v3280
        %v3318 = vsel %vm1326, %v3298, %v3282
        %v3319 = vsel %vm1326, %v3300, %v3284
        %v3320 = vsel %vm1326, %v3302, %v3286
        %v3321 = vsel %vm1326, %v3304, %v3288
        %v3322 = vsel %vm1326, %v3306, %v3290
        %v3323 = vld [vmem:[%s1335] sm:$0x3]
        %v3325 = vperm.slane %v3323, 0
        %v3326 = vperm.slane %v3323, 1
        %v3329 = vmul.f32 %v3307, %v3325
        %v3330 = vmul.f32 %v3315, %v3326
        %v3331 = vmul.f32 %v3308, %v3325
        %v3332 = vmul.f32 %v3316, %v3326
        %v3333 = vmul.f32 %v3309, %v3325
        %v3334 = vmul.f32 %v3317, %v3326
        %v3335 = vmul.f32 %v3310, %v3325
        %v3336 = vmul.f32 %v3318, %v3326
        %v3337 = vmul.f32 %v3311, %v3325
        %v3338 = vmul.f32 %v3319, %v3326
        %v3339 = vmul.f32 %v3312, %v3325
        %v3340 = vmul.f32 %v3320, %v3326
        %v3341 = vmul.f32 %v3313, %v3325
        %v3342 = vmul.f32 %v3321, %v3326
        %v3343 = vmul.f32 %v3314, %v3325
        %v3344 = vmul.f32 %v3322, %v3326
        %3345 = vst [vmem:[#allocation3 + $0x400] sm:$0xff] %v3329
        %3346 = vst [vmem:[#allocation3 + $0x408] sm:$0xff] %v3330
        %3347 = vst [vmem:[#allocation3 + $0x410] sm:$0xff] %v3331
        %3348 = vst [vmem:[#allocation3 + $0x418] sm:$0xff] %v3332
        %3349 = vst [vmem:[#allocation3 + $0x420] sm:$0xff] %v3333
        %3350 = vst [vmem:[#allocation3 + $0x428] sm:$0xff] %v3334
        %3351 = vst [vmem:[#allocation3 + $0x430] sm:$0xff] %v3335
        %3352 = vst [vmem:[#allocation3 + $0x438] sm:$0xff] %v3336
        %3353 = vst [vmem:[#allocation3 + $0x440] sm:$0xff] %v3337
        %3354 = vst [vmem:[#allocation3 + $0x448] sm:$0xff] %v3338
        %3355 = vst [vmem:[#allocation3 + $0x450] sm:$0xff] %v3339
        %3356 = vst [vmem:[#allocation3 + $0x458] sm:$0xff] %v3340
        %3357 = vst [vmem:[#allocation3 + $0x460] sm:$0xff] %v3341
        %3358 = vst [vmem:[#allocation3 + $0x468] sm:$0xff] %v3342
        %3359 = vst [vmem:[#allocation3 + $0x470] sm:$0xff] %v3343
        %3360 = vst [vmem:[#allocation3 + $0x478] sm:$0xff] %v3344
        %v3361 = vld [vmem:[%s442] sm:$0xff]
        %v3362 = vld [vmem:[%s442 + $0x8] sm:$0xff]
        %v3363 = vld [vmem:[%s442 + $0x10] sm:$0xff]
        %v3364 = vld [vmem:[%s442 + $0x18] sm:$0xff]
        %v3365 = vld [vmem:[%s442 + $0x20] sm:$0xff]
        %v3366 = vld [vmem:[%s442 + $0x28] sm:$0xff]
        %v3367 = vld [vmem:[%s442 + $0x30] sm:$0xff]
        %v3368 = vld [vmem:[%s442 + $0x38] sm:$0xff]
        %3369 = vst [vmem:[#allocation3 + $0x480] sm:$0xff] %v3361
        %3370 = vst [vmem:[#allocation3 + $0x488] sm:$0xff] %v3362
        %3371 = vst [vmem:[#allocation3 + $0x490] sm:$0xff] %v3363
        %3372 = vst [vmem:[#allocation3 + $0x498] sm:$0xff] %v3364
        %3373 = vst [vmem:[#allocation3 + $0x4a0] sm:$0xff] %v3365
        %3374 = vst [vmem:[#allocation3 + $0x4a8] sm:$0xff] %v3366
        %3375 = vst [vmem:[#allocation3 + $0x4b0] sm:$0xff] %v3367
        %3376 = vst [vmem:[#allocation3 + $0x4b8] sm:$0xff] %v3368
        %v3377 = vld [vmem:[#allocation10] sm:$0xff]
        %v3378 = vld [vmem:[#allocation10 + $0x8] sm:$0xff]
        %v3379 = vld [vmem:[#allocation10 + $0x10] sm:$0xff]
        %v3380 = vld [vmem:[#allocation10 + $0x18] sm:$0xff]
        %v3381 = vld [vmem:[#allocation10 + $0x20] sm:$0xff]
        %v3382 = vld [vmem:[#allocation10 + $0x28] sm:$0xff]
        %v3383 = vld [vmem:[#allocation10 + $0x30] sm:$0xff]
        %v3384 = vld [vmem:[#allocation10 + $0x38] sm:$0xff]
        %v3385 = vld [vmem:[#allocation10 + $0x40] sm:$0xff]
        %v3386 = vld [vmem:[#allocation10 + $0x48] sm:$0xff]
        %v3387 = vld [vmem:[#allocation10 + $0x50] sm:$0xff]
        %v3388 = vld [vmem:[#allocation10 + $0x58] sm:$0xff]
        %v3389 = vld [vmem:[#allocation10 + $0x60] sm:$0xff]
        %v3390 = vld [vmem:[#allocation10 + $0x68] sm:$0xff]
        %v3391 = vld [vmem:[#allocation10 + $0x70] sm:$0xff]
        %v3392 = vld [vmem:[#allocation10 + $0x78] sm:$0xff]
        %v3393 = vld [vmem:[#allocation10 + $0x80] sm:$0xff]
        %v3394 = vld [vmem:[#allocation10 + $0x88] sm:$0xff]
        %v3395 = vld [vmem:[#allocation10 + $0x90] sm:$0xff]
        %v3396 = vld [vmem:[#allocation10 + $0x98] sm:$0xff]
        %v3397 = vld [vmem:[#allocation10 + $0xa0] sm:$0xff]
        %v3398 = vld [vmem:[#allocation10 + $0xa8] sm:$0xff]
        %v3399 = vld [vmem:[#allocation10 + $0xb0] sm:$0xff]
        %v3400 = vld [vmem:[#allocation10 + $0xb8] sm:$0xff]
        %v3401 = vld [vmem:[#allocation10 + $0xc0] sm:$0xff]
        %v3402 = vld [vmem:[#allocation10 + $0xc8] sm:$0xff]
        %v3403 = vld [vmem:[#allocation10 + $0xd0] sm:$0xff]
        %v3404 = vld [vmem:[#allocation10 + $0xd8] sm:$0xff]
        %v3405 = vld [vmem:[#allocation10 + $0xe0] sm:$0xff]
        %v3406 = vld [vmem:[#allocation10 + $0xe8] sm:$0xff]
        %v3407 = vld [vmem:[#allocation10 + $0xf0] sm:$0xff]
        %v3408 = vld [vmem:[#allocation10 + $0xf8] sm:$0xff]
        %v3409 = vld [vmem:[#allocation10 + $0x100] sm:$0xff]
        %v3410 = vld [vmem:[#allocation10 + $0x108] sm:$0xff]
        %v3411 = vld [vmem:[#allocation10 + $0x110] sm:$0xff]
        %v3412 = vld [vmem:[#allocation10 + $0x118] sm:$0xff]
        %v3413 = vld [vmem:[#allocation10 + $0x120] sm:$0xff]
        %v3414 = vld [vmem:[#allocation10 + $0x128] sm:$0xff]
        %v3415 = vld [vmem:[#allocation10 + $0x130] sm:$0xff]
        %v3416 = vld [vmem:[#allocation10 + $0x138] sm:$0xff]
        %v3417 = vld [vmem:[#allocation3] sm:$0xff]
        %v3418 = vld [vmem:[#allocation3 + $0x8] sm:$0xff]
        %v3419 = vld [vmem:[#allocation3 + $0x10] sm:$0xff]
        %v3420 = vld [vmem:[#allocation3 + $0x18] sm:$0xff]
        %v3421 = vld [vmem:[#allocation3 + $0x20] sm:$0xff]
        %v3422 = vld [vmem:[#allocation3 + $0x28] sm:$0xff]
        %v3423 = vld [vmem:[#allocation3 + $0x30] sm:$0xff]
        %v3424 = vld [vmem:[#allocation3 + $0x38] sm:$0xff]
        %v3425 = vld [vmem:[#allocation3 + $0x40] sm:$0xff]
        %v3426 = vld [vmem:[#allocation3 + $0x48] sm:$0xff]
        %v3427 = vld [vmem:[#allocation3 + $0x50] sm:$0xff]
        %v3428 = vld [vmem:[#allocation3 + $0x58] sm:$0xff]
        %v3429 = vld [vmem:[#allocation3 + $0x60] sm:$0xff]
        %v3430 = vld [vmem:[#allocation3 + $0x68] sm:$0xff]
        %v3431 = vld [vmem:[#allocation3 + $0x70] sm:$0xff]
        %v3432 = vld [vmem:[#allocation3 + $0x78] sm:$0xff]
        %v3433 = vld [vmem:[#allocation3 + $0x80] sm:$0xff]
        %v3434 = vld [vmem:[#allocation3 + $0x88] sm:$0xff]
        %v3435 = vld [vmem:[#allocation3 + $0x90] sm:$0xff]
        %v3436 = vld [vmem:[#allocation3 + $0x98] sm:$0xff]
        %v3437 = vld [vmem:[#allocation3 + $0xa0] sm:$0xff]
        %v3438 = vld [vmem:[#allocation3 + $0xa8] sm:$0xff]
        %v3439 = vld [vmem:[#allocation3 + $0xb0] sm:$0xff]
        %v3440 = vld [vmem:[#allocation3 + $0xb8] sm:$0xff]
        %v3441 = vld [vmem:[#allocation3 + $0xc0] sm:$0xff]
        %v3442 = vld [vmem:[#allocation3 + $0xc8] sm:$0xff]
        %v3443 = vld [vmem:[#allocation3 + $0xd0] sm:$0xff]
        %v3444 = vld [vmem:[#allocation3 + $0xd8] sm:$0xff]
        %v3445 = vld [vmem:[#allocation3 + $0xe0] sm:$0xff]
        %v3446 = vld [vmem:[#allocation3 + $0xe8] sm:$0xff]
        %v3447 = vld [vmem:[#allocation3 + $0xf0] sm:$0xff]
        %v3448 = vld [vmem:[#allocation3 + $0xf8] sm:$0xff]
        %v3449 = vld [vmem:[#allocation3 + $0x100] sm:$0xff]
        %v3450 = vld [vmem:[#allocation3 + $0x108] sm:$0xff]
        %v3451 = vld [vmem:[#allocation3 + $0x110] sm:$0xff]
        %v3452 = vld [vmem:[#allocation3 + $0x118] sm:$0xff]
        %v3453 = vld [vmem:[#allocation3 + $0x120] sm:$0xff]
        %v3454 = vld [vmem:[#allocation3 + $0x128] sm:$0xff]
        %v3455 = vld [vmem:[#allocation3 + $0x130] sm:$0xff]
        %v3456 = vld [vmem:[#allocation3 + $0x138] sm:$0xff]
        %v3457 = vld [vmem:[#allocation3 + $0x140] sm:$0xff]
        %v3458 = vld [vmem:[#allocation3 + $0x148] sm:$0xff]
        %v3459 = vld [vmem:[#allocation3 + $0x150] sm:$0xff]
        %v3460 = vld [vmem:[#allocation3 + $0x158] sm:$0xff]
        %v3461 = vld [vmem:[#allocation3 + $0x160] sm:$0xff]
        %v3462 = vld [vmem:[#allocation3 + $0x168] sm:$0xff]
        %v3463 = vld [vmem:[#allocation3 + $0x170] sm:$0xff]
        %v3464 = vld [vmem:[#allocation3 + $0x178] sm:$0xff]
        %v3465 = vld [vmem:[#allocation3 + $0x180] sm:$0xff]
        %v3466 = vld [vmem:[#allocation3 + $0x188] sm:$0xff]
        %v3467 = vld [vmem:[#allocation3 + $0x190] sm:$0xff]
        %v3468 = vld [vmem:[#allocation3 + $0x198] sm:$0xff]
        %v3469 = vld [vmem:[#allocation3 + $0x1a0] sm:$0xff]
        %v3470 = vld [vmem:[#allocation3 + $0x1a8] sm:$0xff]
        %v3471 = vld [vmem:[#allocation3 + $0x1b0] sm:$0xff]
        %v3472 = vld [vmem:[#allocation3 + $0x1b8] sm:$0xff]
        %v3473 = vld [vmem:[#allocation3 + $0x1c0] sm:$0xff]
        %v3474 = vld [vmem:[#allocation3 + $0x1c8] sm:$0xff]
        %v3475 = vld [vmem:[#allocation3 + $0x1d0] sm:$0xff]
        %v3476 = vld [vmem:[#allocation3 + $0x1d8] sm:$0xff]
        %v3477 = vld [vmem:[#allocation3 + $0x1e0] sm:$0xff]
        %v3478 = vld [vmem:[#allocation3 + $0x1e8] sm:$0xff]
        %v3479 = vld [vmem:[#allocation3 + $0x1f0] sm:$0xff]
        %v3480 = vld [vmem:[#allocation3 + $0x1f8] sm:$0xff]
        %v3481 = vld [vmem:[#allocation3 + $0x200] sm:$0xff]
        %v3482 = vld [vmem:[#allocation3 + $0x208] sm:$0xff]
        %v3483 = vld [vmem:[#allocation3 + $0x210] sm:$0xff]
        %v3484 = vld [vmem:[#allocation3 + $0x218] sm:$0xff]
        %v3485 = vld [vmem:[#allocation3 + $0x220] sm:$0xff]
        %v3486 = vld [vmem:[#allocation3 + $0x228] sm:$0xff]
        %v3487 = vld [vmem:[#allocation3 + $0x230] sm:$0xff]
        %v3488 = vld [vmem:[#allocation3 + $0x238] sm:$0xff]
        %v3489 = vld [vmem:[#allocation3 + $0x240] sm:$0xff]
        %v3490 = vld [vmem:[#allocation3 + $0x248] sm:$0xff]
        %v3491 = vld [vmem:[#allocation3 + $0x250] sm:$0xff]
        %v3492 = vld [vmem:[#allocation3 + $0x258] sm:$0xff]
        %v3493 = vld [vmem:[#allocation3 + $0x260] sm:$0xff]
        %v3494 = vld [vmem:[#allocation3 + $0x268] sm:$0xff]
        %v3495 = vld [vmem:[#allocation3 + $0x270] sm:$0xff]
        %v3496 = vld [vmem:[#allocation3 + $0x278] sm:$0xff]
        %v3497 = vld [vmem:[#allocation3 + $0x280] sm:$0xff]
        %v3498 = vld [vmem:[#allocation3 + $0x288] sm:$0xff]
        %v3499 = vld [vmem:[#allocation3 + $0x290] sm:$0xff]
        %v3500 = vld [vmem:[#allocation3 + $0x298] sm:$0xff]
        %v3501 = vld [vmem:[#allocation3 + $0x2a0] sm:$0xff]
        %v3502 = vld [vmem:[#allocation3 + $0x2a8] sm:$0xff]
        %v3503 = vld [vmem:[#allocation3 + $0x2b0] sm:$0xff]
        %v3504 = vld [vmem:[#allocation3 + $0x2b8] sm:$0xff]
        %v3505 = vld [vmem:[#allocation3 + $0x2c0] sm:$0xff]
        %v3506 = vld [vmem:[#allocation3 + $0x2c8] sm:$0xff]
        %v3507 = vld [vmem:[#allocation3 + $0x2d0] sm:$0xff]
        %v3508 = vld [vmem:[#allocation3 + $0x2d8] sm:$0xff]
        %v3509 = vld [vmem:[#allocation3 + $0x2e0] sm:$0xff]
        %v3510 = vld [vmem:[#allocation3 + $0x2e8] sm:$0xff]
        %v3511 = vld [vmem:[#allocation3 + $0x2f0] sm:$0xff]
        %v3512 = vld [vmem:[#allocation3 + $0x2f8] sm:$0xff]
        %v3513 = vld [vmem:[#allocation3 + $0x300] sm:$0xff]
        %v3514 = vld [vmem:[#allocation3 + $0x308] sm:$0xff]
        %v3515 = vld [vmem:[#allocation3 + $0x310] sm:$0xff]
        %v3516 = vld [vmem:[#allocation3 + $0x318] sm:$0xff]
        %v3517 = vld [vmem:[#allocation3 + $0x320] sm:$0xff]
        %v3518 = vld [vmem:[#allocation3 + $0x328] sm:$0xff]
        %v3519 = vld [vmem:[#allocation3 + $0x330] sm:$0xff]
        %v3520 = vld [vmem:[#allocation3 + $0x338] sm:$0xff]
        %v3521 = vld [vmem:[#allocation3 + $0x340] sm:$0xff]
        %v3522 = vld [vmem:[#allocation3 + $0x348] sm:$0xff]
        %v3523 = vld [vmem:[#allocation3 + $0x350] sm:$0xff]
        %v3524 = vld [vmem:[#allocation3 + $0x358] sm:$0xff]
        %v3525 = vld [vmem:[#allocation3 + $0x360] sm:$0xff]
        %v3526 = vld [vmem:[#allocation3 + $0x368] sm:$0xff]
        %v3527 = vld [vmem:[#allocation3 + $0x370] sm:$0xff]
        %v3528 = vld [vmem:[#allocation3 + $0x378] sm:$0xff]
        %v3529 = vld [vmem:[#allocation3 + $0x380] sm:$0xff]
        %v3530 = vld [vmem:[#allocation3 + $0x388] sm:$0xff]
        %v3531 = vld [vmem:[#allocation3 + $0x390] sm:$0xff]
        %v3532 = vld [vmem:[#allocation3 + $0x398] sm:$0xff]
        %v3533 = vld [vmem:[#allocation3 + $0x3a0] sm:$0xff]
        %v3534 = vld [vmem:[#allocation3 + $0x3a8] sm:$0xff]
        %v3535 = vld [vmem:[#allocation3 + $0x3b0] sm:$0xff]
        %v3536 = vld [vmem:[#allocation3 + $0x3b8] sm:$0xff]
        %v3537 = vld [vmem:[#allocation3 + $0x3c0] sm:$0xff]
        %v3538 = vld [vmem:[#allocation3 + $0x3c8] sm:$0xff]
        %v3539 = vld [vmem:[#allocation3 + $0x3d0] sm:$0xff]
        %v3540 = vld [vmem:[#allocation3 + $0x3d8] sm:$0xff]
        %v3541 = vld [vmem:[#allocation3 + $0x3e0] sm:$0xff]
        %v3542 = vld [vmem:[#allocation3 + $0x3e8] sm:$0xff]
        %v3543 = vld [vmem:[#allocation3 + $0x3f0] sm:$0xff]
        %v3544 = vld [vmem:[#allocation3 + $0x3f8] sm:$0xff]
        %v3545 = vld [vmem:[#allocation3 + $0x400] sm:$0xff]
        %v3546 = vld [vmem:[#allocation3 + $0x408] sm:$0xff]
        %v3547 = vld [vmem:[#allocation3 + $0x410] sm:$0xff]
        %v3548 = vld [vmem:[#allocation3 + $0x418] sm:$0xff]
        %v3549 = vld [vmem:[#allocation3 + $0x420] sm:$0xff]
        %v3550 = vld [vmem:[#allocation3 + $0x428] sm:$0xff]
        %v3551 = vld [vmem:[#allocation3 + $0x430] sm:$0xff]
        %v3552 = vld [vmem:[#allocation3 + $0x438] sm:$0xff]
        %v3553 = vld [vmem:[#allocation3 + $0x440] sm:$0xff]
        %v3554 = vld [vmem:[#allocation3 + $0x448] sm:$0xff]
        %v3555 = vld [vmem:[#allocation3 + $0x450] sm:$0xff]
        %v3556 = vld [vmem:[#allocation3 + $0x458] sm:$0xff]
        %v3557 = vld [vmem:[#allocation3 + $0x460] sm:$0xff]
        %v3558 = vld [vmem:[#allocation3 + $0x468] sm:$0xff]
        %v3559 = vld [vmem:[#allocation3 + $0x470] sm:$0xff]
        %v3560 = vld [vmem:[#allocation3 + $0x478] sm:$0xff]
        %v3561 = vld [vmem:[#allocation3 + $0x480] sm:$0xff]
        %v3562 = vld [vmem:[#allocation3 + $0x488] sm:$0xff]
        %v3563 = vld [vmem:[#allocation3 + $0x490] sm:$0xff]
        %v3564 = vld [vmem:[#allocation3 + $0x498] sm:$0xff]
        %v3565 = vld [vmem:[#allocation3 + $0x4a0] sm:$0xff]
        %v3566 = vld [vmem:[#allocation3 + $0x4a8] sm:$0xff]
        %v3567 = vld [vmem:[#allocation3 + $0x4b0] sm:$0xff]
        %v3568 = vld [vmem:[#allocation3 + $0x4b8] sm:$0xff]
        %v3569 = vld [vmem:[%s11] sm:$0xff]
        %v3570 = vld [vmem:[%s11 + $0x8] sm:$0xff]
        %v3571 = vld [vmem:[%s11 + $0x10] sm:$0xff]
        %v3572 = vld [vmem:[%s11 + $0x18] sm:$0xff]
        %v3573 = vld [vmem:[%s11 + $0x20] sm:$0xff]
        %v3574 = vld [vmem:[%s11 + $0x28] sm:$0xff]
        %v3575 = vld [vmem:[%s11 + $0x30] sm:$0xff]
        %v3576 = vld [vmem:[%s11 + $0x38] sm:$0xff]
        %3578 = vset.pattern.permute.xlu0 0
        %3579 = vperm.xlu0 %3578, %v3569
        %v3580 = vpop.permute.xlu0 %3579
        %3583 = vset.pattern.permute.xlu0 0
        %3584 = vperm.xlu0 %3583, %v3570
        %v3585 = vpop.permute.xlu0 %3584
        %3588 = vset.pattern.permute.xlu0 0
        %3589 = vperm.xlu0 %3588, %v3571
        %v3590 = vpop.permute.xlu0 %3589
        %3593 = vset.pattern.permute.xlu0 0
        %3594 = vperm.xlu0 %3593, %v3572
        %v3595 = vpop.permute.xlu0 %3594
        %3598 = vset.pattern.permute.xlu0 0
        %3599 = vperm.xlu0 %3598, %v3573
        %v3600 = vpop.permute.xlu0 %3599
        %3603 = vset.pattern.permute.xlu0 0
        %3604 = vperm.xlu0 %3603, %v3574
        %v3605 = vpop.permute.xlu0 %3604
        %3608 = vset.pattern.permute.xlu0 0
        %3609 = vperm.xlu0 %3608, %v3575
        %v3610 = vpop.permute.xlu0 %3609
        %3613 = vset.pattern.permute.xlu0 0
        %3614 = vperm.xlu0 %3613, %v3576
        %v3615 = vpop.permute.xlu0 %3614
        %vm3617 = vcmask 785408
        %v3619 = vsel %vm3617, %v3381, 0
        %v3622 = vsel %vm3617, %v3386, 0
        %v3625 = vsel %vm3617, %v3391, 0
        %v3628 = vsel %vm3617, %v3396, 0
        %v3631 = vsel %vm3617, %v3401, 0
        %v3634 = vsel %vm3617, %v3406, 0
        %v3637 = vsel %vm3617, %v3411, 0
        %v3640 = vsel %vm3617, %v3416, 0
        %3642 = vmatpush.msra.mxu0 %v3447
        %3643 = vmatpush.msra.mxu0 %v3445
        %3644 = vmatpush.msra.mxu0 %v3443
        %3645 = vmatpush.msra.mxu0 %v3441
        %3646 = vmatpush.msra.mxu0 %v3439
        %3647 = vmatpush.msra.mxu0 %v3437
        %3648 = vmatpush.msra.mxu0 %v3435
        %3649 = vmatpush.msra.mxu0 %v3433
        %3650 = vmatpush.msra.mxu0 %v3431
        %3651 = vmatpush.msra.mxu0 %v3429
        %3652 = vmatpush.msra.mxu0 %v3427
        %3653 = vmatpush.msra.mxu0 %v3425
        %3654 = vmatpush.msra.mxu0 %v3423
        %3655 = vmatpush.msra.mxu0 %v3421
        %3656 = vmatpush.msra.mxu0 %v3419
        %3657 = vmatpush.msra.mxu0 %v3417
        %3658 = vmatmul.f32.gmra.mxu0 %v3377
        %v3659 = vpop.f32.mrf.mxu0
        %v3660 = vadd.f32 %v3580, %v3659
        %3661 = vmatmul.f32.gmra.mxu0 %v3382
        %v3662 = vpop.f32.mrf.mxu0
        %v3663 = vadd.f32 %v3585, %v3662
        %3664 = vmatmul.f32.gmra.mxu0 %v3387
        %v3665 = vpop.f32.mrf.mxu0
        %v3666 = vadd.f32 %v3590, %v3665
        %3667 = vmatmul.f32.gmra.mxu0 %v3392
        %v3668 = vpop.f32.mrf.mxu0
        %v3669 = vadd.f32 %v3595, %v3668
        %3670 = vmatmul.f32.gmra.mxu0 %v3397
        %v3671 = vpop.f32.mrf.mxu0
        %v3672 = vadd.f32 %v3600, %v3671
        %3673 = vmatmul.f32.gmra.mxu0 %v3402
        %v3674 = vpop.f32.mrf.mxu0
        %v3675 = vadd.f32 %v3605, %v3674
        %3676 = vmatmul.f32.gmra.mxu0 %v3407
        %v3677 = vpop.f32.mrf.mxu0
        %v3678 = vadd.f32 %v3610, %v3677
        %3679 = vmatmul.f32.gmra.mxu0 %v3412
        %v3680 = vpop.f32.mrf.mxu0
        %v3681 = vadd.f32 %v3615, %v3680
        %3682 = vdwg.mxu0
        %3683 = vmatpush.msra.mxu0 %v3479
        %3684 = vmatpush.msra.mxu0 %v3477
        %3685 = vmatpush.msra.mxu0 %v3475
        %3686 = vmatpush.msra.mxu0 %v3473
        %3687 = vmatpush.msra.mxu0 %v3471
        %3688 = vmatpush.msra.mxu0 %v3469
        %3689 = vmatpush.msra.mxu0 %v3467
        %3690 = vmatpush.msra.mxu0 %v3465
        %3691 = vmatpush.msra.mxu0 %v3463
        %3692 = vmatpush.msra.mxu0 %v3461
        %3693 = vmatpush.msra.mxu0 %v3459
        %3694 = vmatpush.msra.mxu0 %v3457
        %3695 = vmatpush.msra.mxu0 %v3455
        %3696 = vmatpush.msra.mxu0 %v3453
        %3697 = vmatpush.msra.mxu0 %v3451
        %3698 = vmatpush.msra.mxu0 %v3449
        %3699 = vmatmul.f32.gmra.mxu0 %v3378
        %v3700 = vpop.f32.mrf.mxu0
        %v3701 = vadd.f32 %v3660, %v3700
        %3702 = vmatmul.f32.gmra.mxu0 %v3383
        %v3703 = vpop.f32.mrf.mxu0
        %v3704 = vadd.f32 %v3663, %v3703
        %3705 = vmatmul.f32.gmra.mxu0 %v3388
        %v3706 = vpop.f32.mrf.mxu0
        %v3707 = vadd.f32 %v3666, %v3706
        %3708 = vmatmul.f32.gmra.mxu0 %v3393
        %v3709 = vpop.f32.mrf.mxu0
        %v3710 = vadd.f32 %v3669, %v3709
        %3711 = vmatmul.f32.gmra.mxu0 %v3398
        %v3712 = vpop.f32.mrf.mxu0
        %v3713 = vadd.f32 %v3672, %v3712
        %3714 = vmatmul.f32.gmra.mxu0 %v3403
        %v3715 = vpop.f32.mrf.mxu0
        %v3716 = vadd.f32 %v3675, %v3715
        %3717 = vmatmul.f32.gmra.mxu0 %v3408
        %v3718 = vpop.f32.mrf.mxu0
        %v3719 = vadd.f32 %v3678, %v3718
        %3720 = vmatmul.f32.gmra.mxu0 %v3413
        %v3721 = vpop.f32.mrf.mxu0
        %v3722 = vadd.f32 %v3681, %v3721
        %3723 = vdwg.mxu0
        %3724 = vmatpush.msra.mxu0 %v3511
        %3725 = vmatpush.msra.mxu0 %v3509
        %3726 = vmatpush.msra.mxu0 %v3507
        %3727 = vmatpush.msra.mxu0 %v3505
        %3728 = vmatpush.msra.mxu0 %v3503
        %3729 = vmatpush.msra.mxu0 %v3501
        %3730 = vmatpush.msra.mxu0 %v3499
        %3731 = vmatpush.msra.mxu0 %v3497
        %3732 = vmatpush.msra.mxu0 %v3495
        %3733 = vmatpush.msra.mxu0 %v3493
        %3734 = vmatpush.msra.mxu0 %v3491
        %3735 = vmatpush.msra.mxu0 %v3489
        %3736 = vmatpush.msra.mxu0 %v3487
        %3737 = vmatpush.msra.mxu0 %v3485
        %3738 = vmatpush.msra.mxu0 %v3483
        %3739 = vmatpush.msra.mxu0 %v3481
        %3740 = vmatmul.f32.gmra.mxu0 %v3379
        %v3741 = vpop.f32.mrf.mxu0
        %v3742 = vadd.f32 %v3701, %v3741
        %3743 = vmatmul.f32.gmra.mxu0 %v3384
        %v3744 = vpop.f32.mrf.mxu0
        %v3745 = vadd.f32 %v3704, %v3744
        %3746 = vmatmul.f32.gmra.mxu0 %v3389
        %v3747 = vpop.f32.mrf.mxu0
        %v3748 = vadd.f32 %v3707, %v3747
        %3749 = vmatmul.f32.gmra.mxu0 %v3394
        %v3750 = vpop.f32.mrf.mxu0
        %v3751 = vadd.f32 %v3710, %v3750
        %3752 = vmatmul.f32.gmra.mxu0 %v3399
        %v3753 = vpop.f32.mrf.mxu0
        %v3754 = vadd.f32 %v3713, %v3753
        %3755 = vmatmul.f32.gmra.mxu0 %v3404
        %v3756 = vpop.f32.mrf.mxu0
        %v3757 = vadd.f32 %v3716, %v3756
        %3758 = vmatmul.f32.gmra.mxu0 %v3409
        %v3759 = vpop.f32.mrf.mxu0
        %v3760 = vadd.f32 %v3719, %v3759
        %3761 = vmatmul.f32.gmra.mxu0 %v3414
        %v3762 = vpop.f32.mrf.mxu0
        %v3763 = vadd.f32 %v3722, %v3762
        %3764 = vdwg.mxu0
        %3765 = vmatpush.msra.mxu0 %v3543
        %3766 = vmatpush.msra.mxu0 %v3541
        %3767 = vmatpush.msra.mxu0 %v3539
        %3768 = vmatpush.msra.mxu0 %v3537
        %3769 = vmatpush.msra.mxu0 %v3535
        %3770 = vmatpush.msra.mxu0 %v3533
        %3771 = vmatpush.msra.mxu0 %v3531
        %3772 = vmatpush.msra.mxu0 %v3529
        %3773 = vmatpush.msra.mxu0 %v3527
        %3774 = vmatpush.msra.mxu0 %v3525
        %3775 = vmatpush.msra.mxu0 %v3523
        %3776 = vmatpush.msra.mxu0 %v3521
        %3777 = vmatpush.msra.mxu0 %v3519
        %3778 = vmatpush.msra.mxu0 %v3517
        %3779 = vmatpush.msra.mxu0 %v3515
        %3780 = vmatpush.msra.mxu0 %v3513
        %3781 = vmatmul.f32.gmra.mxu0 %v3380
        %v3782 = vpop.f32.mrf.mxu0
        %v3783 = vadd.f32 %v3742, %v3782
        %3784 = vmatmul.f32.gmra.mxu0 %v3385
        %v3785 = vpop.f32.mrf.mxu0
        %v3786 = vadd.f32 %v3745, %v3785
        %3787 = vmatmul.f32.gmra.mxu0 %v3390
        %v3788 = vpop.f32.mrf.mxu0
        %v3789 = vadd.f32 %v3748, %v3788
        %3790 = vmatmul.f32.gmra.mxu0 %v3395
        %v3791 = vpop.f32.mrf.mxu0
        %v3792 = vadd.f32 %v3751, %v3791
        %3793 = vmatmul.f32.gmra.mxu0 %v3400
        %v3794 = vpop.f32.mrf.mxu0
        %v3795 = vadd.f32 %v3754, %v3794
        %3796 = vmatmul.f32.gmra.mxu0 %v3405
        %v3797 = vpop.f32.mrf.mxu0
        %v3798 = vadd.f32 %v3757, %v3797
        %3799 = vmatmul.f32.gmra.mxu0 %v3410
        %v3800 = vpop.f32.mrf.mxu0
        %v3801 = vadd.f32 %v3760, %v3800
        %3802 = vmatmul.f32.gmra.mxu0 %v3415
        %v3803 = vpop.f32.mrf.mxu0
        %v3804 = vadd.f32 %v3763, %v3803
        %3805 = vdwg.mxu0
        %3806 = vmatpush.msra.mxu0 0.0
        %3807 = vmatpush.msra.mxu0 0.0
        %3808 = vmatpush.msra.mxu0 0.0
        %3809 = vmatpush.msra.mxu0 0.0
        %3810 = vmatpush.msra.mxu0 %v3567
        %3811 = vmatpush.msra.mxu0 %v3565
        %3812 = vmatpush.msra.mxu0 %v3563
        %3813 = vmatpush.msra.mxu0 %v3561
        %3814 = vmatpush.msra.mxu0 %v3559
        %3815 = vmatpush.msra.mxu0 %v3557
        %3816 = vmatpush.msra.mxu0 %v3555
        %3817 = vmatpush.msra.mxu0 %v3553
        %3818 = vmatpush.msra.mxu0 %v3551
        %3819 = vmatpush.msra.mxu0 %v3549
        %3820 = vmatpush.msra.mxu0 %v3547
        %3821 = vmatpush.msra.mxu0 %v3545
        %3822 = vmatmul.f32.gmra.mxu0 %v3619
        %v3823 = vpop.f32.mrf.mxu0
        %v3824 = vadd.f32 %v3783, %v3823
        %3825 = vmatmul.f32.gmra.mxu0 %v3622
        %v3826 = vpop.f32.mrf.mxu0
        %v3827 = vadd.f32 %v3786, %v3826
        %3828 = vmatmul.f32.gmra.mxu0 %v3625
        %v3829 = vpop.f32.mrf.mxu0
        %v3830 = vadd.f32 %v3789, %v3829
        %3831 = vmatmul.f32.gmra.mxu0 %v3628
        %v3832 = vpop.f32.mrf.mxu0
        %v3833 = vadd.f32 %v3792, %v3832
        %3834 = vmatmul.f32.gmra.mxu0 %v3631
        %v3835 = vpop.f32.mrf.mxu0
        %v3836 = vadd.f32 %v3795, %v3835
        %3837 = vmatmul.f32.gmra.mxu0 %v3634
        %v3838 = vpop.f32.mrf.mxu0
        %v3839 = vadd.f32 %v3798, %v3838
        %3840 = vmatmul.f32.gmra.mxu0 %v3637
        %v3841 = vpop.f32.mrf.mxu0
        %v3842 = vadd.f32 %v3801, %v3841
        %3843 = vmatmul.f32.gmra.mxu0 %v3640
        %v3844 = vpop.f32.mrf.mxu0
        %v3845 = vadd.f32 %v3804, %v3844
        %3846 = vdwg.mxu0
        %3847 = vmatpush.msra.mxu0 %v3448
        %3848 = vmatpush.msra.mxu0 %v3446
        %3849 = vmatpush.msra.mxu0 %v3444
        %3850 = vmatpush.msra.mxu0 %v3442
        %3851 = vmatpush.msra.mxu0 %v3440
        %3852 = vmatpush.msra.mxu0 %v3438
        %3853 = vmatpush.msra.mxu0 %v3436
        %3854 = vmatpush.msra.mxu0 %v3434
        %3855 = vmatpush.msra.mxu0 %v3432
        %3856 = vmatpush.msra.mxu0 %v3430
        %3857 = vmatpush.msra.mxu0 %v3428
        %3858 = vmatpush.msra.mxu0 %v3426
        %3859 = vmatpush.msra.mxu0 %v3424
        %3860 = vmatpush.msra.mxu0 %v3422
        %3861 = vmatpush.msra.mxu0 %v3420
        %3862 = vmatpush.msra.mxu0 %v3418
        %3863 = vmatmul.f32.gmra.mxu0 %v3377
        %v3864 = vpop.f32.mrf.mxu0
        %v3865 = vadd.f32 %v3580, %v3864
        %3866 = vmatmul.f32.gmra.mxu0 %v3382
        %v3867 = vpop.f32.mrf.mxu0
        %v3868 = vadd.f32 %v3585, %v3867
        %3869 = vmatmul.f32.gmra.mxu0 %v3387
        %v3870 = vpop.f32.mrf.mxu0
        %v3871 = vadd.f32 %v3590, %v3870
        %3872 = vmatmul.f32.gmra.mxu0 %v3392
        %v3873 = vpop.f32.mrf.mxu0
        %v3874 = vadd.f32 %v3595, %v3873
        %3875 = vmatmul.f32.gmra.mxu0 %v3397
        %v3876 = vpop.f32.mrf.mxu0
        %v3877 = vadd.f32 %v3600, %v3876
        %3878 = vmatmul.f32.gmra.mxu0 %v3402
        %v3879 = vpop.f32.mrf.mxu0
        %v3880 = vadd.f32 %v3605, %v3879
        %3881 = vmatmul.f32.gmra.mxu0 %v3407
        %v3882 = vpop.f32.mrf.mxu0
        %v3883 = vadd.f32 %v3610, %v3882
        %3884 = vmatmul.f32.gmra.mxu0 %v3412
        %v3885 = vpop.f32.mrf.mxu0
        %v3886 = vadd.f32 %v3615, %v3885
        %3887 = vdwg.mxu0
        %3888 = vmatpush.msra.mxu0 %v3480
        %3889 = vmatpush.msra.mxu0 %v3478
        %3890 = vmatpush.msra.mxu0 %v3476
        %3891 = vmatpush.msra.mxu0 %v3474
        %3892 = vmatpush.msra.mxu0 %v3472
        %3893 = vmatpush.msra.mxu0 %v3470
        %3894 = vmatpush.msra.mxu0 %v3468
        %3895 = vmatpush.msra.mxu0 %v3466
        %3896 = vmatpush.msra.mxu0 %v3464
        %3897 = vmatpush.msra.mxu0 %v3462
        %3898 = vmatpush.msra.mxu0 %v3460
        %3899 = vmatpush.msra.mxu0 %v3458
        %3900 = vmatpush.msra.mxu0 %v3456
        %3901 = vmatpush.msra.mxu0 %v3454
        %3902 = vmatpush.msra.mxu0 %v3452
        %3903 = vmatpush.msra.mxu0 %v3450
        %3904 = vmatmul.f32.gmra.mxu0 %v3378
        %v3905 = vpop.f32.mrf.mxu0
        %v3906 = vadd.f32 %v3865, %v3905
        %3907 = vmatmul.f32.gmra.mxu0 %v3383
        %v3908 = vpop.f32.mrf.mxu0
        %v3909 = vadd.f32 %v3868, %v3908
        %3910 = vmatmul.f32.gmra.mxu0 %v3388
        %v3911 = vpop.f32.mrf.mxu0
        %v3912 = vadd.f32 %v3871, %v3911
        %3913 = vmatmul.f32.gmra.mxu0 %v3393
        %v3914 = vpop.f32.mrf.mxu0
        %v3915 = vadd.f32 %v3874, %v3914
        %3916 = vmatmul.f32.gmra.mxu0 %v3398
        %v3917 = vpop.f32.mrf.mxu0
        %v3918 = vadd.f32 %v3877, %v3917
        %3919 = vmatmul.f32.gmra.mxu0 %v3403
        %v3920 = vpop.f32.mrf.mxu0
        %v3921 = vadd.f32 %v3880, %v3920
        %3922 = vmatmul.f32.gmra.mxu0 %v3408
        %v3923 = vpop.f32.mrf.mxu0
        %v3924 = vadd.f32 %v3883, %v3923
        %3925 = vmatmul.f32.gmra.mxu0 %v3413
        %v3926 = vpop.f32.mrf.mxu0
        %v3927 = vadd.f32 %v3886, %v3926
        %3928 = vdwg.mxu0
        %3929 = vmatpush.msra.mxu0 %v3512
        %3930 = vmatpush.msra.mxu0 %v3510
        %3931 = vmatpush.msra.mxu0 %v3508
        %3932 = vmatpush.msra.mxu0 %v3506
        %3933 = vmatpush.msra.mxu0 %v3504
        %3934 = vmatpush.msra.mxu0 %v3502
        %3935 = vmatpush.msra.mxu0 %v3500
        %3936 = vmatpush.msra.mxu0 %v3498
        %3937 = vmatpush.msra.mxu0 %v3496
        %3938 = vmatpush.msra.mxu0 %v3494
        %3939 = vmatpush.msra.mxu0 %v3492
        %3940 = vmatpush.msra.mxu0 %v3490
        %3941 = vmatpush.msra.mxu0 %v3488
        %3942 = vmatpush.msra.mxu0 %v3486
        %3943 = vmatpush.msra.mxu0 %v3484
        %3944 = vmatpush.msra.mxu0 %v3482
        %3945 = vmatmul.f32.gmra.mxu0 %v3379
        %v3946 = vpop.f32.mrf.mxu0
        %v3947 = vadd.f32 %v3906, %v3946
        %3948 = vmatmul.f32.gmra.mxu0 %v3384
        %v3949 = vpop.f32.mrf.mxu0
        %v3950 = vadd.f32 %v3909, %v3949
        %3951 = vmatmul.f32.gmra.mxu0 %v3389
        %v3952 = vpop.f32.mrf.mxu0
        %v3953 = vadd.f32 %v3912, %v3952
        %3954 = vmatmul.f32.gmra.mxu0 %v3394
        %v3955 = vpop.f32.mrf.mxu0
        %v3956 = vadd.f32 %v3915, %v3955
        %3957 = vmatmul.f32.gmra.mxu0 %v3399
        %v3958 = vpop.f32.mrf.mxu0
        %v3959 = vadd.f32 %v3918, %v3958
        %3960 = vmatmul.f32.gmra.mxu0 %v3404
        %v3961 = vpop.f32.mrf.mxu0
        %v3962 = vadd.f32 %v3921, %v3961
        %3963 = vmatmul.f32.gmra.mxu0 %v3409
        %v3964 = vpop.f32.mrf.mxu0
        %v3965 = vadd.f32 %v3924, %v3964
        %3966 = vmatmul.f32.gmra.mxu0 %v3414
        %v3967 = vpop.f32.mrf.mxu0
        %v3968 = vadd.f32 %v3927, %v3967
        %3969 = vdwg.mxu0
        %3970 = vmatpush.msra.mxu0 %v3544
        %3971 = vmatpush.msra.mxu0 %v3542
        %3972 = vmatpush.msra.mxu0 %v3540
        %3973 = vmatpush.msra.mxu0 %v3538
        %3974 = vmatpush.msra.mxu0 %v3536
        %3975 = vmatpush.msra.mxu0 %v3534
        %3976 = vmatpush.msra.mxu0 %v3532
        %3977 = vmatpush.msra.mxu0 %v3530
        %3978 = vmatpush.msra.mxu0 %v3528
        %3979 = vmatpush.msra.mxu0 %v3526
        %3980 = vmatpush.msra.mxu0 %v3524
        %3981 = vmatpush.msra.mxu0 %v3522
        %3982 = vmatpush.msra.mxu0 %v3520
        %3983 = vmatpush.msra.mxu0 %v3518
        %3984 = vmatpush.msra.mxu0 %v3516
        %3985 = vmatpush.msra.mxu0 %v3514
        %3986 = vmatmul.f32.gmra.mxu0 %v3380
        %v3987 = vpop.f32.mrf.mxu0
        %v3988 = vadd.f32 %v3947, %v3987
        %3989 = vmatmul.f32.gmra.mxu0 %v3385
        %v3990 = vpop.f32.mrf.mxu0
        %v3991 = vadd.f32 %v3950, %v3990
        %3992 = vmatmul.f32.gmra.mxu0 %v3390
        %v3993 = vpop.f32.mrf.mxu0
        %v3994 = vadd.f32 %v3953, %v3993
        %3995 = vmatmul.f32.gmra.mxu0 %v3395
        %v3996 = vpop.f32.mrf.mxu0
        %v3997 = vadd.f32 %v3956, %v3996
        %3998 = vmatmul.f32.gmra.mxu0 %v3400
        %v3999 = vpop.f32.mrf.mxu0
        %v4000 = vadd.f32 %v3959, %v3999
        %4001 = vmatmul.f32.gmra.mxu0 %v3405
        %v4002 = vpop.f32.mrf.mxu0
        %v4003 = vadd.f32 %v3962, %v4002
        %4004 = vmatmul.f32.gmra.mxu0 %v3410
        %v4005 = vpop.f32.mrf.mxu0
        %v4006 = vadd.f32 %v3965, %v4005
        %4007 = vmatmul.f32.gmra.mxu0 %v3415
        %v4008 = vpop.f32.mrf.mxu0
        %v4009 = vadd.f32 %v3968, %v4008
        %4010 = vdwg.mxu0
        %4011 = vmatpush.msra.mxu0 0.0
        %4012 = vmatpush.msra.mxu0 0.0
        %4013 = vmatpush.msra.mxu0 0.0
        %4014 = vmatpush.msra.mxu0 0.0
        %4015 = vmatpush.msra.mxu0 %v3568
        %4016 = vmatpush.msra.mxu0 %v3566
        %4017 = vmatpush.msra.mxu0 %v3564
        %4018 = vmatpush.msra.mxu0 %v3562
        %4019 = vmatpush.msra.mxu0 %v3560
        %4020 = vmatpush.msra.mxu0 %v3558
        %4021 = vmatpush.msra.mxu0 %v3556
        %4022 = vmatpush.msra.mxu0 %v3554
        %4023 = vmatpush.msra.mxu0 %v3552
        %4024 = vmatpush.msra.mxu0 %v3550
        %4025 = vmatpush.msra.mxu0 %v3548
        %4026 = vmatpush.msra.mxu0 %v3546
        %4027 = vmatmul.f32.gmra.mxu0 %v3619
        %v4028 = vpop.f32.mrf.mxu0
        %v4029 = vadd.f32 %v3988, %v4028
        %4030 = vmatmul.f32.gmra.mxu0 %v3622
        %v4031 = vpop.f32.mrf.mxu0
        %v4032 = vadd.f32 %v3991, %v4031
        %4033 = vmatmul.f32.gmra.mxu0 %v3625
        %v4034 = vpop.f32.mrf.mxu0
        %v4035 = vadd.f32 %v3994, %v4034
        %4036 = vmatmul.f32.gmra.mxu0 %v3628
        %v4037 = vpop.f32.mrf.mxu0
        %v4038 = vadd.f32 %v3997, %v4037
        %4039 = vmatmul.f32.gmra.mxu0 %v3631
        %v4040 = vpop.f32.mrf.mxu0
        %v4041 = vadd.f32 %v4000, %v4040
        %4042 = vmatmul.f32.gmra.mxu0 %v3634
        %v4043 = vpop.f32.mrf.mxu0
        %v4044 = vadd.f32 %v4003, %v4043
        %4045 = vmatmul.f32.gmra.mxu0 %v3637
        %v4046 = vpop.f32.mrf.mxu0
        %v4047 = vadd.f32 %v4006, %v4046
        %4048 = vmatmul.f32.gmra.mxu0 %v3640
        %v4049 = vpop.f32.mrf.mxu0
        %v4050 = vadd.f32 %v4009, %v4049
        %4051 = vdwg.mxu0
        %4052 = vst [vmem:[%s495] sm:$0xff] %v3824
        %4053 = vst [vmem:[%s495 + $0x8] sm:$0xff] %v4029
        %4054 = vst [vmem:[%s495 + $0x10] sm:$0xff] %v3827
        %4055 = vst [vmem:[%s495 + $0x18] sm:$0xff] %v4032
        %4056 = vst [vmem:[%s495 + $0x20] sm:$0xff] %v3830
        %4057 = vst [vmem:[%s495 + $0x28] sm:$0xff] %v4035
        %4058 = vst [vmem:[%s495 + $0x30] sm:$0xff] %v3833
        %4059 = vst [vmem:[%s495 + $0x38] sm:$0xff] %v4038
        %4060 = vst [vmem:[%s495 + $0x40] sm:$0xff] %v3836
        %4061 = vst [vmem:[%s495 + $0x48] sm:$0xff] %v4041
        %4062 = vst [vmem:[%s495 + $0x50] sm:$0xff] %v3839
        %4063 = vst [vmem:[%s495 + $0x58] sm:$0xff] %v4044
        %4064 = vst [vmem:[%s495 + $0x60] sm:$0xff] %v3842
        %4065 = vst [vmem:[%s495 + $0x68] sm:$0xff] %v4047
        %4066 = vst [vmem:[%s495 + $0x70] sm:$0xff] %v3845
        %4067 = vst [vmem:[%s495 + $0x78] sm:$0xff] %v4050
        %s4068 = sand.u32 %s293, 1
        %s4069 = scalar_lea.sflag [#allocation7], %s4068
        %s4070 = sand.u32 %s293, 1
        %s4071 = smul.addr %s4070, 128
        %s4072 = scalar_lea.vmem [#allocation11], %s4071
        // Predicated region
        $region104: #{tpu_custom_call.1} parent=86 // pred_check
          %p4073 = pneg %p303
        $region105: #{tpu_custom_call.1} parent=86 // pred_check_branch
          %4075 = sbr.rel (%p4073) target = $region107
        $region106: #{tpu_custom_call.1} parent=86 // pred_region
          %s4076 = smul.u32 2, %s28
          %4078 = vsyncadd %s4069, 0
          %s4079 = smul.addr %s4076, 8
          %s4080 = scalar_lea.hbm %s12, %s4079
          %s4081 = sshll.u32 %s4072, 4
          %s4082 = int_to_ptr.vmem [resolvable:$true] %s4081
          %s4083 = sshll.u32 %s4080, 4
          %s4084 = int_to_ptr.hbm [resolvable:$true] %s4083
          %4089 = dma.vmem_to_hbm [thread:$0]  %s4082, 2048, %s4084, %s4069, 256, 512, 16
        $region107: #{tpu_custom_call.1} parent=86 // pred_fallthru
          _
      $region87: #{tpu_custom_call.1} parent=5 // pred_fallthru
        _
      %p4090 = scmp.le.s32.totalorder 2, %s23
      // Predicated region
      $region108: #{tpu_custom_call.1} parent=5 // pred_check
        %p4091 = pneg %p4090
      $region109: #{tpu_custom_call.1} parent=5 // pred_check_branch
        %4093 = sbr.rel (%p4091) target = $region111
      $region110: #{tpu_custom_call.1} parent=5 // pred_region
        %s4094 = ssub.s32 %s23, 2
        // Predicated region
        $region112: #{tpu_custom_call.1} parent=110 // pred_check
          %p4095 = pneg %p309
        $region113: #{tpu_custom_call.1} parent=110 // pred_check_branch
          %4097 = sbr.rel (%p4095) target = $region115
        $region114: #{tpu_custom_call.1} parent=110 // pred_region
          %s4098 = sand.u32 %s294, 1
          %s4099 = scalar_lea.sflag [#allocation7], %s4098
          %s4100 = sand.u32 %s294, 1
          %s4101 = smul.addr %s4100, 128
          %s4102 = scalar_lea.vmem [#allocation11], %s4101
          %4104 = dma.done %s4099, 2048
        $region115: #{tpu_custom_call.1} parent=110 // pred_fallthru
          _
      $region111: #{tpu_custom_call.1} parent=5 // pred_fallthru
        _
    $region6: #{tpu_custom_call.1} parent=1 // loop_footer
      %s27 = sadd.s32 1, %s23
    $region7: #{tpu_custom_call.1} parent=1 // loop_footer_branch
      %22 = sbr.rel target = $region3
    $region8: #{tpu_custom_call.1} parent=1 // loop_exit
      _
    %4105 = vsyncpa [#allocation6], 1
    %s4106 = scalar_lea.sflag [#allocation6], 1
    %4107 = vsyncpa %s4106, 1
    %4108 = vsyncpa [#allocation9], 1
    %4109 = vsyncpa [#allocation7], 1
    %s4110 = scalar_lea.sflag [#allocation7], 1
    %4111 = vsyncpa %s4110, 1

</llo_original>
